<compile_context>
chip_gen: v5e
topology: v5e:2x2
jax: 0.10.0
libtpu: 0.0.40
codegen_flags: <defaults>
</compile_context>

<pallas_src>
import functools

import jax
import jax.numpy as jnp
from jax.experimental import pallas as pl
from jax.experimental.pallas import tpu as pltpu


def _round_up(n, m):
    return ((n + m - 1) // m) * m


def _depthwise_fir(stage_ref, dw_w, start, t_out, kernel_size, group=8):
    """Per-channel FIR over time on a staged (C, W) scratch.

    Reads stage_ref[:, start+k : start+k+t_out] for each tap k.  Taps are
    accumulated in groups of `group` so the accumulator is touched once per
    group (bounds acc load/store traffic when it spills at production C*tT).
    For very large K this could become a lax.fori_loop over groups.
    """
    acc = None
    for g0 in range(0, kernel_size, group):
        part = None
        for k in range(g0, min(g0 + group, kernel_size)):
            term = dw_w[:, k:k + 1] * stage_ref[:, start + k:start + k + t_out]
            part = term if part is None else part + term
        acc = part if acc is None else acc + part
    return acc


def block_kernel(x_ref, halo_ref,
                 dw_w0_ref, pw_w0_ref, pw_b0_ref,
                 dw_w1_ref, pw_w1_ref, pw_b1_ref,
                 sc_w_ref, sc_b_ref,
                 o_ref, xstage, hstage,
                 *, kernel_size, t_tile, t_valid, lane_halo):
    K = kernel_size
    pad = K // 2
    E = 2 * pad                        # halo needed by the two chained FIRs
    LH = lane_halo                     # 128: lane-aligned start of the main tile
    tT = t_tile
    Th = tT + E                        # width of the subblock-0 output h

    t_idx = pl.program_id(1)
    t0 = t_idx * tT                    # global start time of this tile

    # ---- stage extended x tile: [left halo | main | right halo] -------------
    x_main = x_ref[0].astype(jnp.float32)                          # (C_in, tT)
    xstage[:, LH:LH + tT] = x_main                                 # aligned vst
    xstage[:, LH - E:LH] = halo_ref[0, 0, :, 0:E].astype(jnp.float32)
    xstage[:, LH + tT:LH + tT + E] = halo_ref[0, 0, :, E:2 * E].astype(jnp.float32)

    # ---- SubBlock 0: C_in -> C_out over global times [t0-pad, t0+tT+pad) ----
    acc0 = _depthwise_fir(xstage, dw_w0_ref[...], LH - E, Th, K)
    h = jnp.dot(pw_w0_ref[...], acc0.astype(jnp.bfloat16),
                preferred_element_type=jnp.float32) + pw_b0_ref[...]
    h = jnp.maximum(h, 0.0)                                        # (C_out, Th)

    # Stage h (lane-aligned, column 0).  Columns of h outside the valid global
    # time range [0, T) must be zero (the reference zero-pads the second
    # depthwise conv's input); only the first and last time tiles can contain
    # such columns, so the masked rewrite is skipped on all interior tiles.
    hstage[...] = h

    @pl.when(jnp.logical_or(t_idx == 0, t0 + tT + pad > t_valid))
    def _():
        g = (t0 - pad) + jax.lax.broadcasted_iota(jnp.int32, h.shape, 1)
        hstage[...] = jnp.where((g >= 0) & (g < t_valid), h, 0.0)

    # ---- shortcut (1x1 conv + folded BN) on the main x tile ------------------
    # Independent MXU matmul, issued here so it can overlap SubBlock 1's
    # VPU-bound FIR.
    idn = jnp.dot(sc_w_ref[...], x_main.astype(jnp.bfloat16),
                  preferred_element_type=jnp.float32) + sc_b_ref[...]

    # ---- SubBlock 1: C_out -> C_out over global times [t0, t0+tT) ------------
    acc1 = _depthwise_fir(hstage, dw_w1_ref[...], 0, tT, K)
    y = jnp.dot(pw_w1_ref[...], acc1.astype(jnp.bfloat16),
                preferred_element_type=jnp.float32) + pw_b1_ref[...]
    y = jnp.maximum(y, 0.0)

    o_ref[0] = jnp.maximum(y + idn, 0.0).astype(o_ref.dtype)


def _fold_pointwise(dw_b, pw_w, pw_b, bn_s, bn_b):
    """Fold depthwise bias + BN into the pointwise conv (exact algebra)."""
    w = bn_s * pw_w                                       # (C_out,1)*(C_out,C_in)
    b = bn_s * (pw_b + pw_w @ dw_b) + bn_b                # (C_out,1)
    return w.astype(jnp.bfloat16), b.astype(jnp.float32)


def fold_params(p):
    f = {"dw_w0": p["dw_w0"].astype(jnp.float32),
         "dw_w1": p["dw_w1"].astype(jnp.float32)}
    f["pw_w0"], f["pw_b0"] = _fold_pointwise(p["dw_b0"], p["pw_w0"], p["pw_b0"],
                                             p["bn_s0"], p["bn_b0"])
    f["pw_w1"], f["pw_b1"] = _fold_pointwise(p["dw_b1"], p["pw_w1"], p["pw_b1"],
                                             p["bn_s1"], p["bn_b1"])
    f["sc_w"] = (p["sc_s"] * p["sc_w"]).astype(jnp.bfloat16)
    f["sc_b"] = (p["sc_s"] * p["sc_b"] + p["sc_bb"]).astype(jnp.float32)
    return f


def block_forward(x, params, *, kernel_size, channel_multiple=128, time_tile=512,
                  out_dtype=None):
    B, C_in, T = x.shape
    C_out = params["pw_w0"].shape[0]
    pad = kernel_size // 2
    E = 2 * pad
    LH = 128

    assert kernel_size % 2 == 1 and 3 <= kernel_size <= 129, "odd K, 2*pad <= 128"
    assert time_tile % 128 == 0

    out_dtype = jnp.dtype(x.dtype if out_dtype is None else out_dtype)
    fp = fold_params(params)

    # Pad channels to fill the MXU (>=128; bf16 weights also want 16-sublane
    # alignment) and pick a lane-dense time tile (>=512 lanes when T allows).
    C_in_p = _round_up(C_in, channel_multiple)
    C_out_p = _round_up(C_out, channel_multiple)
    tT = min(time_tile, _round_up(T, 128))
    T_p = _round_up(T, tT)
    nT = T_p // tT

    def cpad(a, rows, cols):
        return jnp.pad(a, ((0, rows - a.shape[0]), (0, cols - a.shape[1])))

    xp = jnp.pad(x, ((0, 0), (0, C_in_p - C_in), (0, T_p - T)))
    # Per-tile halo tensor: for tile t, [E cols left of the tile | E cols right]
    # (zeros at the sequence boundaries).  This small auto-pipelined side input
    # lets every tile recompute the subblock-0 halo its second FIR needs, so
    # time tiles stay fully independent.
    xh = jnp.pad(xp, ((0, 0), (0, 0), (E, E)))
    x_halo = jnp.stack(
        [jnp.concatenate([xh[:, :, t * tT:t * tT + E],
                          xh[:, :, (t + 1) * tT + E:(t + 1) * tT + 2 * E]],
                         axis=-1)
         for t in range(nT)], axis=1)                      # (B, nT, C_in_p, 2E)

    ins = [
        xp, x_halo,
        cpad(fp["dw_w0"], C_in_p, kernel_size),
        cpad(fp["pw_w0"], C_out_p, C_in_p),
        cpad(fp["pw_b0"], C_out_p, 1),
        cpad(fp["dw_w1"], C_out_p, kernel_size),
        cpad(fp["pw_w1"], C_out_p, C_out_p),
        cpad(fp["pw_b1"], C_out_p, 1),
        cpad(fp["sc_w"], C_out_p, C_in_p),
        cpad(fp["sc_b"], C_out_p, 1),
    ]

    x_spec = pl.BlockSpec((1, C_in_p, tT), lambda b, t: (b, 0, t))
    halo_spec = pl.BlockSpec((1, 1, C_in_p, 2 * E), lambda b, t: (b, t, 0, 0))
    out_spec = pl.BlockSpec((1, C_out_p, tT), lambda b, t: (b, 0, t))

    WX = LH + tT + E                                       # FIR-0 staging width
    WH = tT + E                                            # FIR-1 staging width

    # Physical VMEM on this device (v7x: 64 MiB per TC, v5e/v6e: 128 MiB).
    try:
        vmem_cap = int(pltpu.get_tpu_info().vmem_capacity_bytes)
    except Exception:
        vmem_cap = 64 << 20                                # conservative (v7x)

    def call(single_buffer_weights):
        if single_buffer_weights:
            # Weights never change across the grid -> keep a single VMEM copy.
            def wspec(a):
                return pl.BlockSpec(a.shape, lambda b, t: (0, 0),
                                    pipeline_mode=pl.Buffered(buffer_count=1))
        else:
            def wspec(a):
                return pl.BlockSpec(a.shape, lambda b, t: (0, 0))
        in_specs = [x_spec, halo_spec] + [wspec(a) for a in ins[2:]]

        # VMEM budget: double-buffered x / halo / out blocks, weights once (or
        # twice in the fallback), both staging scratches, plus headroom.
        w_bufs = 1 if single_buffer_weights else 2
        blk = (C_in_p * tT * x.dtype.itemsize
               + C_in_p * _round_up(2 * E, 128) * x.dtype.itemsize
               + C_out_p * tT * out_dtype.itemsize)
        w_bytes = sum(a.shape[0] * _round_up(a.shape[1], 128) * a.dtype.itemsize
                      for a in ins[2:])
        scratch = (C_in_p * _round_up(WX, 128) + C_out_p * _round_up(WH, 128)) * 4
        vmem_need = 2 * blk + w_bufs * w_bytes + scratch + (4 << 20)
        vmem_limit = int(min(vmem_cap - (4 << 20), max(vmem_need, 32 << 20)))

        return pl.pallas_call(
            functools.partial(block_kernel, kernel_size=kernel_size, t_tile=tT,
                              t_valid=T, lane_halo=LH),
            out_shape=jax.ShapeDtypeStruct((B, C_out_p, T_p), out_dtype),
            grid_spec=pltpu.PrefetchScalarGridSpec(
                num_scalar_prefetch=0,
                grid=(B, nT),
                in_specs=in_specs,
                out_specs=out_spec,
                scratch_shapes=[pltpu.VMEM((C_in_p, WX), jnp.float32),
                                pltpu.VMEM((C_out_p, WH), jnp.float32)]),
            # Batch and time tiles are fully independent -> both "parallel"
            # (lets v7x shard the grid across its two TensorCores).
            compiler_params=pltpu.CompilerParams(
                dimension_semantics=("parallel", "parallel"),
                vmem_limit_bytes=vmem_limit),
        )(*ins)

    try:
        out = call(True)
    except Exception:
        # pl.Buffered(1) rejected by this jax build -> default double buffering.
        out = call(False)

    # TODO(synk): optional further VMEM saving (review item): DMA x straight
    # into xstage (memory_space=pl.ANY + hand-rolled prefetch) to drop the
    # double-buffered x block and the in-kernel staging copy.
    return out[:, :C_out, :T]


def _fold_bn(gamma, beta, mean, var, eps=1e-5):
    scale = gamma / jnp.sqrt(var + eps)
    bias = beta - mean * scale
    return scale[:, None], bias[:, None]                   # (C, 1)


def init_params(key, c_in, c_out, kernel_size):
    ks = jax.random.split(key, 24)
    n = lambda k, shape, s=0.2: s * jax.random.normal(k, shape, jnp.float32)
    pos = lambda k, shape: 0.5 + jax.random.uniform(k, shape, jnp.float32)

    p = {}
    # SubBlock 0: c_in -> c_out
    p["dw_w0"] = n(ks[0], (c_in, kernel_size))
    p["dw_b0"] = n(ks[1], (c_in,))[:, None]
    p["pw_w0"] = n(ks[2], (c_out, c_in))
    p["pw_b0"] = n(ks[3], (c_out,))[:, None]
    p["bn_s0"], p["bn_b0"] = _fold_bn(pos(ks[4], (c_out,)), n(ks[5], (c_out,)),
                                      n(ks[6], (c_out,)), pos(ks[7], (c_out,)))
    # SubBlock 1: c_out -> c_out
    p["dw_w1"] = n(ks[8], (c_out, kernel_size))
    p["dw_b1"] = n(ks[9], (c_out,))[:, None]
    p["pw_w1"] = n(ks[10], (c_out, c_out))
    p["pw_b1"] = n(ks[11], (c_out,))[:, None]
    p["bn_s1"], p["bn_b1"] = _fold_bn(pos(ks[12], (c_out,)), n(ks[13], (c_out,)),
                                      n(ks[14], (c_out,)), pos(ks[15], (c_out,)))
    # Shortcut: 1x1 conv + BN, c_in -> c_out
    p["sc_w"] = n(ks[16], (c_out, c_in))
    p["sc_b"] = n(ks[17], (c_out,))[:, None]
    p["sc_s"], p["sc_bb"] = _fold_bn(pos(ks[18], (c_out,)), n(ks[19], (c_out,)),
                                     n(ks[20], (c_out,)), pos(ks[21], (c_out,)))
    return p


def block_reference(x, p, kernel_size):
    """Pure-JAX f32 reference (unfolded, unpadded) for correctness checking."""
    pad = kernel_size // 2
    T = x.shape[-1]

    def subblock(x, dw_w, dw_b, pw_w, pw_b, s, b):
        xp = jnp.pad(x, ((0, 0), (0, 0), (pad, pad)))
        dw = sum(dw_w[None, :, k:k + 1] * xp[:, :, k:k + T]
                 for k in range(kernel_size)) + dw_b[None]
        pw = jnp.einsum("oc,bct->bot", pw_w, dw) + pw_b[None]
        return jnp.maximum(pw * s[None] + b[None], 0.0)

    h = subblock(x, p["dw_w0"], p["dw_b0"], p["pw_w0"], p["pw_b0"], p["bn_s0"], p["bn_b0"])
    h = subblock(h, p["dw_w1"], p["dw_b1"], p["pw_w1"], p["pw_b1"], p["bn_s1"], p["bn_b1"])
    idn = jnp.einsum("oc,bct->bot", p["sc_w"], x) + p["sc_b"][None]
    idn = idn * p["sc_s"][None] + p["sc_bb"][None]
    return jnp.maximum(h + idn, 0.0)


if __name__ == "__main__":
    B, C_IN, C_OUT, T, K = 2, 4, 8, 16, 3     # n_repeat = 2 subblocks

    key = jax.random.PRNGKey(0)
    kx, kp = jax.random.split(key)
    x = jax.random.normal(kx, (B, C_IN, T), jnp.float32)
    params = init_params(kp, C_IN, C_OUT, K)

    out = jax.block_until_ready(block_forward(x, params, kernel_size=K))
    ref = jax.block_until_ready(block_reference(x, params, K))

    assert out.shape == (B, C_OUT, T)
    # bf16 MXU operands -> slightly looser tolerance than pure f32.
    assert jnp.allclose(out, ref, rtol=2e-2, atol=2e-2), "mismatch vs reference"

    print("KERNEL_OK")
</pallas_src>

<mosaic_0001>
module attributes {stable_mosaic.version = 11 : i64} {
  func.func @block_kernel(%arg0: i32, %arg1: i32, %arg2: memref<1x128x128xf32, #tpu.memory_space<vmem>>, %arg3: memref<1x1x128x4xf32, #tpu.memory_space<vmem>>, %arg4: memref<128x3xf32, #tpu.memory_space<vmem>>, %arg5: memref<128x128xbf16, #tpu.memory_space<vmem>>, %arg6: memref<128x1xf32, #tpu.memory_space<vmem>>, %arg7: memref<128x3xf32, #tpu.memory_space<vmem>>, %arg8: memref<128x128xbf16, #tpu.memory_space<vmem>>, %arg9: memref<128x1xf32, #tpu.memory_space<vmem>>, %arg10: memref<128x128xbf16, #tpu.memory_space<vmem>>, %arg11: memref<128x1xf32, #tpu.memory_space<vmem>>, %arg12: memref<1x128x128xf32, #tpu.memory_space<vmem>>, %arg13: memref<128x258xf32, #tpu.memory_space<vmem>>, %arg14: memref<128x130xf32, #tpu.memory_space<vmem>>) attributes {dimension_semantics = [#tpu.dimension_semantics<parallel>, #tpu.dimension_semantics<parallel>], iteration_bounds = array<i64: 2, 1>, scalar_prefetch = 0 : i64, scratch_operands = 2 : i64, tpu.core_type = #tpu.core_type<tc>, window_params = [{transform_indices = @transform_0, window_bounds = array<i64: 1, 128, 128>}, {transform_indices = @transform_1, window_bounds = array<i64: 1, 1, 128, 4>}, {pipeline_mode = #tpu.pipeline_mode<synchronous>, transform_indices = @transform_2, window_bounds = array<i64: 128, 3>}, {pipeline_mode = #tpu.pipeline_mode<synchronous>, transform_indices = @transform_3, window_bounds = array<i64: 128, 128>}, {pipeline_mode = #tpu.pipeline_mode<synchronous>, transform_indices = @transform_4, window_bounds = array<i64: 128, 1>}, {pipeline_mode = #tpu.pipeline_mode<synchronous>, transform_indices = @transform_5, window_bounds = array<i64: 128, 3>}, {pipeline_mode = #tpu.pipeline_mode<synchronous>, transform_indices = @transform_6, window_bounds = array<i64: 128, 128>}, {pipeline_mode = #tpu.pipeline_mode<synchronous>, transform_indices = @transform_7, window_bounds = array<i64: 128, 1>}, {pipeline_mode = #tpu.pipeline_mode<synchronous>, transform_indices = @transform_8, window_bounds = array<i64: 128, 128>}, {pipeline_mode = #tpu.pipeline_mode<synchronous>, transform_indices = @transform_9, window_bounds = array<i64: 128, 1>}, {transform_indices = @transform_10, window_bounds = array<i64: 1, 128, 128>}]} {
    %c128_i32 = arith.constant 128 : i32
    %0 = arith.muli %arg1, %c128_i32 : i32
    %c0 = arith.constant 0 : index
    %c0_0 = arith.constant 0 : index
    %c0_1 = arith.constant 0 : index
    %1 = vector.load %arg2[%c0, %c0_0, %c0_1] : memref<1x128x128xf32, #tpu.memory_space<vmem>>, vector<1x128x128xf32>
    %2 = vector.shape_cast %1 : vector<1x128x128xf32> to vector<128x128xf32>
    %c0_2 = arith.constant 0 : index
    %c128 = arith.constant 128 : index
    %3 = vector.load %arg13[%c0_2, %c128] : memref<128x258xf32, #tpu.memory_space<vmem>>, vector<128x128xf32>
    tpu.vector_store %arg13[%c0_2, %c128], %2 {strides = array<i32>} : memref<128x258xf32, #tpu.memory_space<vmem>>, vector<128x128xf32>,
    %c0_3 = arith.constant 0 : index
    %c0_4 = arith.constant 0 : index
    %c0_5 = arith.constant 0 : index
    %c0_6 = arith.constant 0 : index
    %4 = vector.load %arg3[%c0_3, %c0_4, %c0_5, %c0_6] : memref<1x1x128x4xf32, #tpu.memory_space<vmem>>, vector<1x1x128x2xf32>
    %5 = vector.shape_cast %4 : vector<1x1x128x2xf32> to vector<128x2xf32>
    %c0_7 = arith.constant 0 : index
    %c126 = arith.constant 126 : index
    %6 = vector.load %arg13[%c0_7, %c126] : memref<128x258xf32, #tpu.memory_space<vmem>>, vector<128x2xf32>
    tpu.vector_store %arg13[%c0_7, %c126], %5 {strides = array<i32>} : memref<128x258xf32, #tpu.memory_space<vmem>>, vector<128x2xf32>,
    %c0_8 = arith.constant 0 : index
    %c0_9 = arith.constant 0 : index
    %c0_10 = arith.constant 0 : index
    %c2 = arith.constant 2 : index
    %7 = vector.load %arg3[%c0_8, %c0_9, %c0_10, %c2] : memref<1x1x128x4xf32, #tpu.memory_space<vmem>>, vector<1x1x128x2xf32>
    %8 = vector.shape_cast %7 : vector<1x1x128x2xf32> to vector<128x2xf32>
    %c0_11 = arith.constant 0 : index
    %c256 = arith.constant 256 : index
    %9 = vector.load %arg13[%c0_11, %c256] : memref<128x258xf32, #tpu.memory_space<vmem>>, vector<128x2xf32>
    tpu.vector_store %arg13[%c0_11, %c256], %8 {strides = array<i32>} : memref<128x258xf32, #tpu.memory_space<vmem>>, vector<128x2xf32>,
    %c0_12 = arith.constant 0 : index
    %c0_13 = arith.constant 0 : index
    %10 = vector.load %arg4[%c0_12, %c0_13] : memref<128x3xf32, #tpu.memory_space<vmem>>, vector<128x3xf32>
    %11 = vector.extract_strided_slice %10 {offsets = [0, 0], sizes = [128, 1], strides = [1, 1]} : vector<128x3xf32> to vector<128x1xf32>
    %c0_14 = arith.constant 0 : index
    %c126_15 = arith.constant 126 : index
    %12 = vector.load %arg13[%c0_14, %c126_15] : memref<128x258xf32, #tpu.memory_space<vmem>>, vector<128x130xf32>
    %13 = vector.broadcast %11 : vector<128x1xf32> to vector<128x130xf32>
    %14 = arith.mulf %13, %12 : vector<128x130xf32>
    %15 = vector.extract_strided_slice %10 {offsets = [0, 1], sizes = [128, 1], strides = [1, 1]} : vector<128x3xf32> to vector<128x1xf32>
    %c0_16 = arith.constant 0 : index
    %c127 = arith.constant 127 : index
    %16 = vector.load %arg13[%c0_16, %c127] : memref<128x258xf32, #tpu.memory_space<vmem>>, vector<128x130xf32>
    %17 = vector.broadcast %15 : vector<128x1xf32> to vector<128x130xf32>
    %18 = arith.mulf %17, %16 : vector<128x130xf32>
    %19 = arith.addf %14, %18 : vector<128x130xf32>
    %20 = vector.extract_strided_slice %10 {offsets = [0, 2], sizes = [128, 1], strides = [1, 1]} : vector<128x3xf32> to vector<128x1xf32>
    %c0_17 = arith.constant 0 : index
    %c128_18 = arith.constant 128 : index
    %21 = vector.load %arg13[%c0_17, %c128_18] : memref<128x258xf32, #tpu.memory_space<vmem>>, vector<128x130xf32>
    %22 = vector.broadcast %20 : vector<128x1xf32> to vector<128x130xf32>
    %23 = arith.mulf %22, %21 : vector<128x130xf32>
    %24 = arith.addf %19, %23 : vector<128x130xf32>
    %c0_19 = arith.constant 0 : index
    %c0_20 = arith.constant 0 : index
    %25 = vector.load %arg5[%c0_19, %c0_20] : memref<128x128xbf16, #tpu.memory_space<vmem>>, vector<128x128xbf16>
    %26 = arith.truncf %24 : vector<128x130xf32> to vector<128x130xbf16>
    %cst = arith.constant dense<0.000000e+00> : vector<128x130xf32>
    %27 = tpu.matmul %25, %26, %cst {dimension_numbers = #tpu.dot_dimension_numbers<[1], [0], [0], [1], [0, 0, 1, 1], [], []>} : vector<128x128xbf16>, vector<128x130xbf16>, vector<128x130xf32> -> vector<128x130xf32>
    %c0_21 = arith.constant 0 : index
    %c0_22 = arith.constant 0 : index
    %28 = vector.load %arg6[%c0_21, %c0_22] : memref<128x1xf32, #tpu.memory_space<vmem>>, vector<128x1xf32>
    %29 = vector.broadcast %28 : vector<128x1xf32> to vector<128x130xf32>
    %30 = arith.addf %27, %29 : vector<128x130xf32>
    %cst_23 = arith.constant 0.000000e+00 : f32
    %31 = vector.broadcast %cst_23 : f32 to vector<128x130xf32>
    %32 = arith.maximumf %30, %31 : vector<128x130xf32>
    %c0_24 = arith.constant 0 : index
    %c0_25 = arith.constant 0 : index
    %33 = vector.load %arg14[%c0_24, %c0_25] : memref<128x130xf32, #tpu.memory_space<vmem>>, vector<128x130xf32>
    tpu.vector_store %arg14[%c0_24, %c0_25], %32 {strides = array<i32>} : memref<128x130xf32, #tpu.memory_space<vmem>>, vector<128x130xf32>,
    %c0_i32 = arith.constant 0 : i32
    %34 = arith.cmpi eq, %arg1, %c0_i32 : i32
    %c128_i32_26 = arith.constant 128 : i32
    %35 = arith.addi %0, %c128_i32_26 : i32
    %c1_i32 = arith.constant 1 : i32
    %36 = arith.addi %35, %c1_i32 : i32
    %c16_i32 = arith.constant 16 : i32
    %37 = arith.cmpi sgt, %36, %c16_i32 : i32
    %38 = arith.ori %34, %37 : i1
    %39 = arith.extui %38 : i1 to i32
    %c0_i32_27 = arith.constant 0 : i32
    %40 = arith.cmpi ne, %39, %c0_i32_27 : i32
    scf.if %40 {
      %c1_i32_50 = arith.constant 1 : i32
      %76 = arith.subi %0, %c1_i32_50 : i32
      %77 = tpu.iota {dimensions = array<i32: 1>} : vector<128x130xi32>
      %78 = vector.broadcast %76 : i32 to vector<128x130xi32>
      %79 = arith.addi %78, %77 : vector<128x130xi32>
      %c0_i32_51 = arith.constant 0 : i32
      %80 = vector.broadcast %c0_i32_51 : i32 to vector<128x130xi32>
      %81 = arith.cmpi sge, %79, %80 : vector<128x130xi32>
      %c16_i32_52 = arith.constant 16 : i32
      %82 = vector.broadcast %c16_i32_52 : i32 to vector<128x130xi32>
      %83 = arith.cmpi slt, %79, %82 : vector<128x130xi32>
      %84 = arith.andi %81, %83 : vector<128x130xi1>
      %cst_53 = arith.constant 0.000000e+00 : f32
      %85 = vector.broadcast %cst_53 : f32 to vector<128x130xf32>
      %86 = arith.select %84, %32, %85 : vector<128x130xi1>, vector<128x130xf32>
      %c0_54 = arith.constant 0 : index
      %c0_55 = arith.constant 0 : index
      %87 = vector.load %arg14[%c0_54, %c0_55] : memref<128x130xf32, #tpu.memory_space<vmem>>, vector<128x130xf32>
      tpu.vector_store %arg14[%c0_54, %c0_55], %86 {strides = array<i32>} : memref<128x130xf32, #tpu.memory_space<vmem>>, vector<128x130xf32>,
    } else {
    }
    %c0_28 = arith.constant 0 : index
    %c0_29 = arith.constant 0 : index
    %41 = vector.load %arg10[%c0_28, %c0_29] : memref<128x128xbf16, #tpu.memory_space<vmem>>, vector<128x128xbf16>
    %42 = arith.truncf %2 : vector<128x128xf32> to vector<128x128xbf16>
    %cst_30 = arith.constant dense<0.000000e+00> : vector<128x128xf32>
    %43 = tpu.matmul %41, %42, %cst_30 {dimension_numbers = #tpu.dot_dimension_numbers<[1], [0], [0], [1], [0, 0, 1, 1], [], []>} : vector<128x128xbf16>, vector<128x128xbf16>, vector<128x128xf32> -> vector<128x128xf32>
    %c0_31 = arith.constant 0 : index
    %c0_32 = arith.constant 0 : index
    %44 = vector.load %arg11[%c0_31, %c0_32] : memref<128x1xf32, #tpu.memory_space<vmem>>, vector<128x1xf32>
    %45 = vector.broadcast %44 : vector<128x1xf32> to vector<128x128xf32>
    %46 = arith.addf %43, %45 : vector<128x128xf32>
    %c0_33 = arith.constant 0 : index
    %c0_34 = arith.constant 0 : index
    %47 = vector.load %arg7[%c0_33, %c0_34] : memref<128x3xf32, #tpu.memory_space<vmem>>, vector<128x3xf32>
    %48 = vector.extract_strided_slice %47 {offsets = [0, 0], sizes = [128, 1], strides = [1, 1]} : vector<128x3xf32> to vector<128x1xf32>
    %c0_35 = arith.constant 0 : index
    %c0_36 = arith.constant 0 : index
    %49 = vector.load %arg14[%c0_35, %c0_36] : memref<128x130xf32, #tpu.memory_space<vmem>>, vector<128x128xf32>
    %50 = vector.broadcast %48 : vector<128x1xf32> to vector<128x128xf32>
    %51 = arith.mulf %50, %49 : vector<128x128xf32>
    %52 = vector.extract_strided_slice %47 {offsets = [0, 1], sizes = [128, 1], strides = [1, 1]} : vector<128x3xf32> to vector<128x1xf32>
    %c0_37 = arith.constant 0 : index
    %c1 = arith.constant 1 : index
    %53 = vector.load %arg14[%c0_37, %c1] : memref<128x130xf32, #tpu.memory_space<vmem>>, vector<128x128xf32>
    %54 = vector.broadcast %52 : vector<128x1xf32> to vector<128x128xf32>
    %55 = arith.mulf %54, %53 : vector<128x128xf32>
    %56 = arith.addf %51, %55 : vector<128x128xf32>
    %57 = vector.extract_strided_slice %47 {offsets = [0, 2], sizes = [128, 1], strides = [1, 1]} : vector<128x3xf32> to vector<128x1xf32>
    %c0_38 = arith.constant 0 : index
    %c2_39 = arith.constant 2 : index
    %58 = vector.load %arg14[%c0_38, %c2_39] : memref<128x130xf32, #tpu.memory_space<vmem>>, vector<128x128xf32>
    %59 = vector.broadcast %57 : vector<128x1xf32> to vector<128x128xf32>
    %60 = arith.mulf %59, %58 : vector<128x128xf32>
    %61 = arith.addf %56, %60 : vector<128x128xf32>
    %c0_40 = arith.constant 0 : index
    %c0_41 = arith.constant 0 : index
    %62 = vector.load %arg8[%c0_40, %c0_41] : memref<128x128xbf16, #tpu.memory_space<vmem>>, vector<128x128xbf16>
    %63 = arith.truncf %61 : vector<128x128xf32> to vector<128x128xbf16>
    %cst_42 = arith.constant dense<0.000000e+00> : vector<128x128xf32>
    %64 = tpu.matmul %62, %63, %cst_42 {dimension_numbers = #tpu.dot_dimension_numbers<[1], [0], [0], [1], [0, 0, 1, 1], [], []>} : vector<128x128xbf16>, vector<128x128xbf16>, vector<128x128xf32> -> vector<128x128xf32>
    %c0_43 = arith.constant 0 : index
    %c0_44 = arith.constant 0 : index
    %65 = vector.load %arg9[%c0_43, %c0_44] : memref<128x1xf32, #tpu.memory_space<vmem>>, vector<128x1xf32>
    %66 = vector.broadcast %65 : vector<128x1xf32> to vector<128x128xf32>
    %67 = arith.addf %64, %66 : vector<128x128xf32>
    %cst_45 = arith.constant 0.000000e+00 : f32
    %68 = vector.broadcast %cst_45 : f32 to vector<128x128xf32>
    %69 = arith.maximumf %67, %68 : vector<128x128xf32>
    %70 = arith.addf %69, %46 : vector<128x128xf32>
    %cst_46 = arith.constant 0.000000e+00 : f32
    %71 = vector.broadcast %cst_46 : f32 to vector<128x128xf32>
    %72 = arith.maximumf %70, %71 : vector<128x128xf32>
    %c0_47 = arith.constant 0 : index
    %c0_48 = arith.constant 0 : index
    %c0_49 = arith.constant 0 : index
    %73 = vector.load %arg12[%c0_47, %c0_48, %c0_49] : memref<1x128x128xf32, #tpu.memory_space<vmem>>, vector<1x128x128xf32>
    %74 = vector.shape_cast %73 : vector<1x128x128xf32> to vector<128x128xf32>
    %75 = vector.shape_cast %72 : vector<128x128xf32> to vector<1x128x128xf32>
    tpu.vector_store %arg12[%c0_47, %c0_48, %c0_49], %75 {strides = array<i32>} : memref<1x128x128xf32, #tpu.memory_space<vmem>>, vector<1x128x128xf32>,
    return
  }
  func.func @transform_0(%arg0: i32, %arg1: i32) -> (i32, i32, i32) {
    %c0_i32 = arith.constant 0 : i32
    %c0_i32_0 = arith.constant 0 : i32
    return %arg0, %c0_i32, %arg1 : i32, i32, i32
  }
  func.func @transform_1(%arg0: i32, %arg1: i32) -> (i32, i32, i32, i32) {
    %c0_i32 = arith.constant 0 : i32
    %c0_i32_0 = arith.constant 0 : i32
    %c0_i32_1 = arith.constant 0 : i32
    return %arg0, %arg1, %c0_i32, %c0_i32_0 : i32, i32, i32, i32
  }
  func.func @transform_2(%arg0: i32, %arg1: i32) -> (i32, i32) {
    %c0_i32 = arith.constant 0 : i32
    %c0_i32_0 = arith.constant 0 : i32
    %c0_i32_1 = arith.constant 0 : i32
    return %c0_i32, %c0_i32_0 : i32, i32
  }
  func.func @transform_3(%arg0: i32, %arg1: i32) -> (i32, i32) {
    %c0_i32 = arith.constant 0 : i32
    %c0_i32_0 = arith.constant 0 : i32
    %c0_i32_1 = arith.constant 0 : i32
    return %c0_i32, %c0_i32_0 : i32, i32
  }
  func.func @transform_4(%arg0: i32, %arg1: i32) -> (i32, i32) {
    %c0_i32 = arith.constant 0 : i32
    %c0_i32_0 = arith.constant 0 : i32
    %c0_i32_1 = arith.constant 0 : i32
    return %c0_i32, %c0_i32_0 : i32, i32
  }
  func.func @transform_5(%arg0: i32, %arg1: i32) -> (i32, i32) {
    %c0_i32 = arith.constant 0 : i32
    %c0_i32_0 = arith.constant 0 : i32
    %c0_i32_1 = arith.constant 0 : i32
    return %c0_i32, %c0_i32_0 : i32, i32
  }
  func.func @transform_6(%arg0: i32, %arg1: i32) -> (i32, i32) {
    %c0_i32 = arith.constant 0 : i32
    %c0_i32_0 = arith.constant 0 : i32
    %c0_i32_1 = arith.constant 0 : i32
    return %c0_i32, %c0_i32_0 : i32, i32
  }
  func.func @transform_7(%arg0: i32, %arg1: i32) -> (i32, i32) {
    %c0_i32 = arith.constant 0 : i32
    %c0_i32_0 = arith.constant 0 : i32
    %c0_i32_1 = arith.constant 0 : i32
    return %c0_i32, %c0_i32_0 : i32, i32
  }
  func.func @transform_8(%arg0: i32, %arg1: i32) -> (i32, i32) {
    %c0_i32 = arith.constant 0 : i32
    %c0_i32_0 = arith.constant 0 : i32
    %c0_i32_1 = arith.constant 0 : i32
    return %c0_i32, %c0_i32_0 : i32, i32
  }
  func.func @transform_9(%arg0: i32, %arg1: i32) -> (i32, i32) {
    %c0_i32 = arith.constant 0 : i32
    %c0_i32_0 = arith.constant 0 : i32
    %c0_i32_1 = arith.constant 0 : i32
    return %c0_i32, %c0_i32_0 : i32, i32
  }
  func.func @transform_10(%arg0: i32, %arg1: i32) -> (i32, i32, i32) {
    %c0_i32 = arith.constant 0 : i32
    %c0_i32_0 = arith.constant 0 : i32
    return %arg0, %c0_i32, %arg1 : i32, i32, i32
  }
}

module attributes {stable_mosaic.version = 11 : i64} {
  func.func @block_kernel(%arg0: i32, %arg1: i32, %arg2: memref<1x128x128xf32, #tpu.memory_space<vmem>>, %arg3: memref<1x1x128x4xf32, #tpu.memory_space<vmem>>, %arg4: memref<128x3xf32, #tpu.memory_space<vmem>>, %arg5: memref<128x128xbf16, #tpu.memory_space<vmem>>, %arg6: memref<128x1xf32, #tpu.memory_space<vmem>>, %arg7: memref<128x3xf32, #tpu.memory_space<vmem>>, %arg8: memref<128x128xbf16, #tpu.memory_space<vmem>>, %arg9: memref<128x1xf32, #tpu.memory_space<vmem>>, %arg10: memref<128x128xbf16, #tpu.memory_space<vmem>>, %arg11: memref<128x1xf32, #tpu.memory_space<vmem>>, %arg12: memref<1x128x128xf32, #tpu.memory_space<vmem>>, %arg13: memref<128x258xf32, #tpu.memory_space<vmem>>, %arg14: memref<128x130xf32, #tpu.memory_space<vmem>>) attributes {dimension_semantics = [#tpu.dimension_semantics<parallel>, #tpu.dimension_semantics<parallel>], iteration_bounds = array<i64: 2, 1>, scalar_prefetch = 0 : i64, scratch_operands = 2 : i64, tpu.core_type = #tpu.core_type<tc>, window_params = [{transform_indices = @transform_0, window_bounds = array<i64: 1, 128, 128>}, {transform_indices = @transform_1, window_bounds = array<i64: 1, 1, 128, 4>}, {pipeline_mode = #tpu.pipeline_mode<synchronous>, transform_indices = @transform_2, window_bounds = array<i64: 128, 3>}, {pipeline_mode = #tpu.pipeline_mode<synchronous>, transform_indices = @transform_3, window_bounds = array<i64: 128, 128>}, {pipeline_mode = #tpu.pipeline_mode<synchronous>, transform_indices = @transform_4, window_bounds = array<i64: 128, 1>}, {pipeline_mode = #tpu.pipeline_mode<synchronous>, transform_indices = @transform_5, window_bounds = array<i64: 128, 3>}, {pipeline_mode = #tpu.pipeline_mode<synchronous>, transform_indices = @transform_6, window_bounds = array<i64: 128, 128>}, {pipeline_mode = #tpu.pipeline_mode<synchronous>, transform_indices = @transform_7, window_bounds = array<i64: 128, 1>}, {pipeline_mode = #tpu.pipeline_mode<synchronous>, transform_indices = @transform_8, window_bounds = array<i64: 128, 128>}, {pipeline_mode = #tpu.pipeline_mode<synchronous>, transform_indices = @transform_9, window_bounds = array<i64: 128, 1>}, {transform_indices = @transform_10, window_bounds = array<i64: 1, 128, 128>}]} {
    %c128_i32 = arith.constant 128 : i32
    %0 = arith.muli %arg1, %c128_i32 : i32
    %c0 = arith.constant 0 : index
    %c0_0 = arith.constant 0 : index
    %c0_1 = arith.constant 0 : index
    %1 = vector.load %arg2[%c0, %c0_0, %c0_1] : memref<1x128x128xf32, #tpu.memory_space<vmem>>, vector<1x128x128xf32>
    %2 = vector.shape_cast %1 : vector<1x128x128xf32> to vector<128x128xf32>
    %c0_2 = arith.constant 0 : index
    %c128 = arith.constant 128 : index
    %3 = vector.load %arg13[%c0_2, %c128] : memref<128x258xf32, #tpu.memory_space<vmem>>, vector<128x128xf32>
    tpu.vector_store %arg13[%c0_2, %c128], %2 {strides = array<i32>} : memref<128x258xf32, #tpu.memory_space<vmem>>, vector<128x128xf32>,
    %c0_3 = arith.constant 0 : index
    %c0_4 = arith.constant 0 : index
    %c0_5 = arith.constant 0 : index
    %c0_6 = arith.constant 0 : index
    %4 = vector.load %arg3[%c0_3, %c0_4, %c0_5, %c0_6] : memref<1x1x128x4xf32, #tpu.memory_space<vmem>>, vector<1x1x128x2xf32>
    %5 = vector.shape_cast %4 : vector<1x1x128x2xf32> to vector<128x2xf32>
    %c0_7 = arith.constant 0 : index
    %c126 = arith.constant 126 : index
    %6 = vector.load %arg13[%c0_7, %c126] : memref<128x258xf32, #tpu.memory_space<vmem>>, vector<128x2xf32>
    tpu.vector_store %arg13[%c0_7, %c126], %5 {strides = array<i32>} : memref<128x258xf32, #tpu.memory_space<vmem>>, vector<128x2xf32>,
    %c0_8 = arith.constant 0 : index
    %c0_9 = arith.constant 0 : index
    %c0_10 = arith.constant 0 : index
    %c2 = arith.constant 2 : index
    %7 = vector.load %arg3[%c0_8, %c0_9, %c0_10, %c2] : memref<1x1x128x4xf32, #tpu.memory_space<vmem>>, vector<1x1x128x2xf32>
    %8 = vector.shape_cast %7 : vector<1x1x128x2xf32> to vector<128x2xf32>
    %c0_11 = arith.constant 0 : index
    %c256 = arith.constant 256 : index
    %9 = vector.load %arg13[%c0_11, %c256] : memref<128x258xf32, #tpu.memory_space<vmem>>, vector<128x2xf32>
    tpu.vector_store %arg13[%c0_11, %c256], %8 {strides = array<i32>} : memref<128x258xf32, #tpu.memory_space<vmem>>, vector<128x2xf32>,
    %c0_12 = arith.constant 0 : index
    %c0_13 = arith.constant 0 : index
    %10 = vector.load %arg4[%c0_12, %c0_13] : memref<128x3xf32, #tpu.memory_space<vmem>>, vector<128x3xf32>
    %11 = vector.extract_strided_slice %10 {offsets = [0, 0], sizes = [128, 1], strides = [1, 1]} : vector<128x3xf32> to vector<128x1xf32>
    %c0_14 = arith.constant 0 : index
    %c126_15 = arith.constant 126 : index
    %12 = vector.load %arg13[%c0_14, %c126_15] : memref<128x258xf32, #tpu.memory_space<vmem>>, vector<128x130xf32>
    %13 = vector.broadcast %11 : vector<128x1xf32> to vector<128x130xf32>
    %14 = arith.mulf %13, %12 : vector<128x130xf32>
    %15 = vector.extract_strided_slice %10 {offsets = [0, 1], sizes = [128, 1], strides = [1, 1]} : vector<128x3xf32> to vector<128x1xf32>
    %c0_16 = arith.constant 0 : index
    %c127 = arith.constant 127 : index
    %16 = vector.load %arg13[%c0_16, %c127] : memref<128x258xf32, #tpu.memory_space<vmem>>, vector<128x130xf32>
    %17 = vector.broadcast %15 : vector<128x1xf32> to vector<128x130xf32>
    %18 = arith.mulf %17, %16 : vector<128x130xf32>
    %19 = arith.addf %14, %18 : vector<128x130xf32>
    %20 = vector.extract_strided_slice %10 {offsets = [0, 2], sizes = [128, 1], strides = [1, 1]} : vector<128x3xf32> to vector<128x1xf32>
    %c0_17 = arith.constant 0 : index
    %c128_18 = arith.constant 128 : index
    %21 = vector.load %arg13[%c0_17, %c128_18] : memref<128x258xf32, #tpu.memory_space<vmem>>, vector<128x130xf32>
    %22 = vector.broadcast %20 : vector<128x1xf32> to vector<128x130xf32>
    %23 = arith.mulf %22, %21 : vector<128x130xf32>
    %24 = arith.addf %19, %23 : vector<128x130xf32>
    %c0_19 = arith.constant 0 : index
    %c0_20 = arith.constant 0 : index
    %25 = vector.load %arg5[%c0_19, %c0_20] : memref<128x128xbf16, #tpu.memory_space<vmem>>, vector<128x128xbf16>
    %26 = arith.truncf %24 : vector<128x130xf32> to vector<128x130xbf16>
    %cst = arith.constant dense<0.000000e+00> : vector<128x130xf32>
    %27 = tpu.matmul %25, %26, %cst {dimension_numbers = #tpu.dot_dimension_numbers<[1], [0], [0], [1], [0, 0, 1, 1], [], []>} : vector<128x128xbf16>, vector<128x130xbf16>, vector<128x130xf32> -> vector<128x130xf32>
    %c0_21 = arith.constant 0 : index
    %c0_22 = arith.constant 0 : index
    %28 = vector.load %arg6[%c0_21, %c0_22] : memref<128x1xf32, #tpu.memory_space<vmem>>, vector<128x1xf32>
    %29 = vector.broadcast %28 : vector<128x1xf32> to vector<128x130xf32>
    %30 = arith.addf %27, %29 : vector<128x130xf32>
    %cst_23 = arith.constant 0.000000e+00 : f32
    %31 = vector.broadcast %cst_23 : f32 to vector<128x130xf32>
    %32 = arith.maximumf %30, %31 : vector<128x130xf32>
    %c0_24 = arith.constant 0 : index
    %c0_25 = arith.constant 0 : index
    %33 = vector.load %arg14[%c0_24, %c0_25] : memref<128x130xf32, #tpu.memory_space<vmem>>, vector<128x130xf32>
    tpu.vector_store %arg14[%c0_24, %c0_25], %32 {strides = array<i32>} : memref<128x130xf32, #tpu.memory_space<vmem>>, vector<128x130xf32>,
    %c0_i32 = arith.constant 0 : i32
    %34 = arith.cmpi eq, %arg1, %c0_i32 : i32
    %c128_i32_26 = arith.constant 128 : i32
    %35 = arith.addi %0, %c128_i32_26 : i32
    %c1_i32 = arith.constant 1 : i32
    %36 = arith.addi %35, %c1_i32 : i32
    %c16_i32 = arith.constant 16 : i32
    %37 = arith.cmpi sgt, %36, %c16_i32 : i32
    %38 = arith.ori %34, %37 : i1
    %39 = arith.extui %38 : i1 to i32
    %c0_i32_27 = arith.constant 0 : i32
    %40 = arith.cmpi ne, %39, %c0_i32_27 : i32
    scf.if %40 {
      %c1_i32_50 = arith.constant 1 : i32
      %76 = arith.subi %0, %c1_i32_50 : i32
      %77 = tpu.iota {dimensions = array<i32: 1>} : vector<128x130xi32>
      %78 = vector.broadcast %76 : i32 to vector<128x130xi32>
      %79 = arith.addi %78, %77 : vector<128x130xi32>
      %c0_i32_51 = arith.constant 0 : i32
      %80 = vector.broadcast %c0_i32_51 : i32 to vector<128x130xi32>
      %81 = arith.cmpi sge, %79, %80 : vector<128x130xi32>
      %c16_i32_52 = arith.constant 16 : i32
      %82 = vector.broadcast %c16_i32_52 : i32 to vector<128x130xi32>
      %83 = arith.cmpi slt, %79, %82 : vector<128x130xi32>
      %84 = arith.andi %81, %83 : vector<128x130xi1>
      %cst_53 = arith.constant 0.000000e+00 : f32
      %85 = vector.broadcast %cst_53 : f32 to vector<128x130xf32>
      %86 = arith.select %84, %32, %85 : vector<128x130xi1>, vector<128x130xf32>
      %c0_54 = arith.constant 0 : index
      %c0_55 = arith.constant 0 : index
      %87 = vector.load %arg14[%c0_54, %c0_55] : memref<128x130xf32, #tpu.memory_space<vmem>>, vector<128x130xf32>
      tpu.vector_store %arg14[%c0_54, %c0_55], %86 {strides = array<i32>} : memref<128x130xf32, #tpu.memory_space<vmem>>, vector<128x130xf32>,
    } else {
    }
    %c0_28 = arith.constant 0 : index
    %c0_29 = arith.constant 0 : index
    %41 = vector.load %arg10[%c0_28, %c0_29] : memref<128x128xbf16, #tpu.memory_space<vmem>>, vector<128x128xbf16>
    %42 = arith.truncf %2 : vector<128x128xf32> to vector<128x128xbf16>
    %cst_30 = arith.constant dense<0.000000e+00> : vector<128x128xf32>
    %43 = tpu.matmul %41, %42, %cst_30 {dimension_numbers = #tpu.dot_dimension_numbers<[1], [0], [0], [1], [0, 0, 1, 1], [], []>} : vector<128x128xbf16>, vector<128x128xbf16>, vector<128x128xf32> -> vector<128x128xf32>
    %c0_31 = arith.constant 0 : index
    %c0_32 = arith.constant 0 : index
    %44 = vector.load %arg11[%c0_31, %c0_32] : memref<128x1xf32, #tpu.memory_space<vmem>>, vector<128x1xf32>
    %45 = vector.broadcast %44 : vector<128x1xf32> to vector<128x128xf32>
    %46 = arith.addf %43, %45 : vector<128x128xf32>
    %c0_33 = arith.constant 0 : index
    %c0_34 = arith.constant 0 : index
    %47 = vector.load %arg7[%c0_33, %c0_34] : memref<128x3xf32, #tpu.memory_space<vmem>>, vector<128x3xf32>
    %48 = vector.extract_strided_slice %47 {offsets = [0, 0], sizes = [128, 1], strides = [1, 1]} : vector<128x3xf32> to vector<128x1xf32>
    %c0_35 = arith.constant 0 : index
    %c0_36 = arith.constant 0 : index
    %49 = vector.load %arg14[%c0_35, %c0_36] : memref<128x130xf32, #tpu.memory_space<vmem>>, vector<128x128xf32>
    %50 = vector.broadcast %48 : vector<128x1xf32> to vector<128x128xf32>
    %51 = arith.mulf %50, %49 : vector<128x128xf32>
    %52 = vector.extract_strided_slice %47 {offsets = [0, 1], sizes = [128, 1], strides = [1, 1]} : vector<128x3xf32> to vector<128x1xf32>
    %c0_37 = arith.constant 0 : index
    %c1 = arith.constant 1 : index
    %53 = vector.load %arg14[%c0_37, %c1] : memref<128x130xf32, #tpu.memory_space<vmem>>, vector<128x128xf32>
    %54 = vector.broadcast %52 : vector<128x1xf32> to vector<128x128xf32>
    %55 = arith.mulf %54, %53 : vector<128x128xf32>
    %56 = arith.addf %51, %55 : vector<128x128xf32>
    %57 = vector.extract_strided_slice %47 {offsets = [0, 2], sizes = [128, 1], strides = [1, 1]} : vector<128x3xf32> to vector<128x1xf32>
    %c0_38 = arith.constant 0 : index
    %c2_39 = arith.constant 2 : index
    %58 = vector.load %arg14[%c0_38, %c2_39] : memref<128x130xf32, #tpu.memory_space<vmem>>, vector<128x128xf32>
    %59 = vector.broadcast %57 : vector<128x1xf32> to vector<128x128xf32>
    %60 = arith.mulf %59, %58 : vector<128x128xf32>
    %61 = arith.addf %56, %60 : vector<128x128xf32>
    %c0_40 = arith.constant 0 : index
    %c0_41 = arith.constant 0 : index
    %62 = vector.load %arg8[%c0_40, %c0_41] : memref<128x128xbf16, #tpu.memory_space<vmem>>, vector<128x128xbf16>
    %63 = arith.truncf %61 : vector<128x128xf32> to vector<128x128xbf16>
    %cst_42 = arith.constant dense<0.000000e+00> : vector<128x128xf32>
    %64 = tpu.matmul %62, %63, %cst_42 {dimension_numbers = #tpu.dot_dimension_numbers<[1], [0], [0], [1], [0, 0, 1, 1], [], []>} : vector<128x128xbf16>, vector<128x128xbf16>, vector<128x128xf32> -> vector<128x128xf32>
    %c0_43 = arith.constant 0 : index
    %c0_44 = arith.constant 0 : index
    %65 = vector.load %arg9[%c0_43, %c0_44] : memref<128x1xf32, #tpu.memory_space<vmem>>, vector<128x1xf32>
    %66 = vector.broadcast %65 : vector<128x1xf32> to vector<128x128xf32>
    %67 = arith.addf %64, %66 : vector<128x128xf32>
    %cst_45 = arith.constant 0.000000e+00 : f32
    %68 = vector.broadcast %cst_45 : f32 to vector<128x128xf32>
    %69 = arith.maximumf %67, %68 : vector<128x128xf32>
    %70 = arith.addf %69, %46 : vector<128x128xf32>
    %cst_46 = arith.constant 0.000000e+00 : f32
    %71 = vector.broadcast %cst_46 : f32 to vector<128x128xf32>
    %72 = arith.maximumf %70, %71 : vector<128x128xf32>
    %c0_47 = arith.constant 0 : index
    %c0_48 = arith.constant 0 : index
    %c0_49 = arith.constant 0 : index
    %73 = vector.load %arg12[%c0_47, %c0_48, %c0_49] : memref<1x128x128xf32, #tpu.memory_space<vmem>>, vector<1x128x128xf32>
    %74 = vector.shape_cast %73 : vector<1x128x128xf32> to vector<128x128xf32>
    %75 = vector.shape_cast %72 : vector<128x128xf32> to vector<1x128x128xf32>
    tpu.vector_store %arg12[%c0_47, %c0_48, %c0_49], %75 {strides = array<i32>} : memref<1x128x128xf32, #tpu.memory_space<vmem>>, vector<1x128x128xf32>,
    return
  }
  func.func @transform_0(%arg0: i32, %arg1: i32) -> (i32, i32, i32) {
    %c0_i32 = arith.constant 0 : i32
    %c0_i32_0 = arith.constant 0 : i32
    return %arg0, %c0_i32, %arg1 : i32, i32, i32
  }
  func.func @transform_1(%arg0: i32, %arg1: i32) -> (i32, i32, i32, i32) {
    %c0_i32 = arith.constant 0 : i32
    %c0_i32_0 = arith.constant 0 : i32
    %c0_i32_1 = arith.constant 0 : i32
    return %arg0, %arg1, %c0_i32, %c0_i32_0 : i32, i32, i32, i32
  }
  func.func @transform_2(%arg0: i32, %arg1: i32) -> (i32, i32) {
    %c0_i32 = arith.constant 0 : i32
    %c0_i32_0 = arith.constant 0 : i32
    %c0_i32_1 = arith.constant 0 : i32
    return %c0_i32, %c0_i32_0 : i32, i32
  }
  func.func @transform_3(%arg0: i32, %arg1: i32) -> (i32, i32) {
    %c0_i32 = arith.constant 0 : i32
    %c0_i32_0 = arith.constant 0 : i32
    %c0_i32_1 = arith.constant 0 : i32
    return %c0_i32, %c0_i32_0 : i32, i32
  }
  func.func @transform_4(%arg0: i32, %arg1: i32) -> (i32, i32) {
    %c0_i32 = arith.constant 0 : i32
    %c0_i32_0 = arith.constant 0 : i32
    %c0_i32_1 = arith.constant 0 : i32
    return %c0_i32, %c0_i32_0 : i32, i32
  }
  func.func @transform_5(%arg0: i32, %arg1: i32) -> (i32, i32) {
    %c0_i32 = arith.constant 0 : i32
    %c0_i32_0 = arith.constant 0 : i32
    %c0_i32_1 = arith.constant 0 : i32
    return %c0_i32, %c0_i32_0 : i32, i32
  }
  func.func @transform_6(%arg0: i32, %arg1: i32) -> (i32, i32) {
    %c0_i32 = arith.constant 0 : i32
    %c0_i32_0 = arith.constant 0 : i32
    %c0_i32_1 = arith.constant 0 : i32
    return %c0_i32, %c0_i32_0 : i32, i32
  }
  func.func @transform_7(%arg0: i32, %arg1: i32) -> (i32, i32) {
    %c0_i32 = arith.constant 0 : i32
    %c0_i32_0 = arith.constant 0 : i32
    %c0_i32_1 = arith.constant 0 : i32
    return %c0_i32, %c0_i32_0 : i32, i32
  }
  func.func @transform_8(%arg0: i32, %arg1: i32) -> (i32, i32) {
    %c0_i32 = arith.constant 0 : i32
    %c0_i32_0 = arith.constant 0 : i32
    %c0_i32_1 = arith.constant 0 : i32
    return %c0_i32, %c0_i32_0 : i32, i32
  }
  func.func @transform_9(%arg0: i32, %arg1: i32) -> (i32, i32) {
    %c0_i32 = arith.constant 0 : i32
    %c0_i32_0 = arith.constant 0 : i32
    %c0_i32_1 = arith.constant 0 : i32
    return %c0_i32, %c0_i32_0 : i32, i32
  }
  func.func @transform_10(%arg0: i32, %arg1: i32) -> (i32, i32, i32) {
    %c0_i32 = arith.constant 0 : i32
    %c0_i32_0 = arith.constant 0 : i32
    return %arg0, %c0_i32, %arg1 : i32, i32, i32
  }
}

</mosaic_0001>

<llo_original>
// kernel: tpu_custom_call.1
$region0: #{tpu_custom_call.1}
  #allocation0 [shape = 'u32[]', space=smem, size = 0x4, offset = 0x4, fixed_abs, tag = 'smem constant byte address 0x4 - core index']
  #allocation1 [shape = 'u32[72,128]{1,0:T(1,128)}', space=vmem, size = 0x9000, scoped, tag = 'internal scratch']
  #allocation2 [shape = 'f32[128,258]{1,0:T(8,128)}', space=vmem, size = 0x30000, scoped, tag = 'scratch operand']
  #allocation3 [shape = 'f32[128,130]{1,0:T(8,128)}', space=vmem, size = 0x20000, scoped, tag = 'scratch operand']
  %s0 = inlined_call_operand.vmem [shape: f32[2,128,128], index: 0, kind: input, shape index: {}]
  %s1 = inlined_call_operand.vmem [shape: f32[2,1,128,4], index: 1, kind: input, shape index: {}]
  %s2 = inlined_call_operand.vmem [shape: f32[128,3], index: 2, kind: input, shape index: {}]
  %s3 = inlined_call_operand.vmem [shape: bf16[128,128], index: 3, kind: input, shape index: {}]
  %s4 = inlined_call_operand.vmem [shape: f32[128,1], index: 4, kind: input, shape index: {}]
  %s5 = inlined_call_operand.vmem [shape: f32[128,3], index: 5, kind: input, shape index: {}]
  %s6 = inlined_call_operand.vmem [shape: bf16[128,128], index: 6, kind: input, shape index: {}]
  %s7 = inlined_call_operand.vmem [shape: f32[128,1], index: 7, kind: input, shape index: {}]
  %s8 = inlined_call_operand.vmem [shape: bf16[128,128], index: 8, kind: input, shape index: {}]
  %s9 = inlined_call_operand.vmem [shape: f32[128,1], index: 9, kind: input, shape index: {}]
  %s10 = inlined_call_operand.hbm [shape: f32[2,128,128], index: 10, kind: output, shape index: {}]
  %s11 = sld [smem:[#allocation0]]
  $region77: #{tpu_custom_call.1} parent=0
    _
  %s13 = ssub.s32 1, %s11
  %s14 = scalar_select 0, %s13, %s11
  $region1: #{tpu_custom_call.1} parent=0
    #allocation4 [shape = 'u8[131072]{0}', space=vmem, size = 0x20000, scoped, tag = 'output window, operand 0']
    #allocation5 [shape = 's32[2]{0}', space=sflag, size = 0x8, scoped, tag = 'scoped memory for tpu_custom_call.1']
    %15 = vsyncpa [#allocation5], 0
    %s16 = scalar_lea.sflag [#allocation5], 1
    %17 = vsyncpa %s16, 0
    loop: start=0, step=1, limit=4
    $region2: #{tpu_custom_call.1} parent=1 // loop_pre_header
      _
    $region3: #{tpu_custom_call.1} parent=1 // loop_header
      %s19 = sphi 0, %s23
      %p20 = scmp.ge.s32.totalorder %s19, 4
      %s26 = sphi 0, %s38
      %s27 = sphi 0, %s34
      %s28 = sphi 0, %s26
      %s29 = sphi 0, %s27
      %s30 = sphi 0, %s28
      %s31 = sphi 0, %s29
      %s43 = sphi 0, %s45
      %s46 = sphi 0, %s43
      %s47 = sphi 0, %s46
      %s63 = sphi 0, %s47
      %s71 = sphi 0, %s73
      %s74 = sphi 0, %s71
      %s75 = sphi 0, %s74
      %s91 = sphi 0, %s75
      %s95 = sphi 0, %s95
      %s97 = sphi 0, %s95
      %s98 = sphi 0, %s97
      %s112 = sphi 0, %s98
      %s116 = sphi 0, %s116
      %s118 = sphi 0, %s116
      %s119 = sphi 0, %s118
      %s133 = sphi 0, %s119
      %s137 = sphi 0, %s137
      %s139 = sphi 0, %s137
      %s140 = sphi 0, %s139
      %s154 = sphi 0, %s140
      %s158 = sphi 0, %s158
      %s160 = sphi 0, %s158
      %s161 = sphi 0, %s160
      %s175 = sphi 0, %s161
      %s179 = sphi 0, %s179
      %s181 = sphi 0, %s179
      %s182 = sphi 0, %s181
      %s196 = sphi 0, %s182
      %s200 = sphi 0, %s200
      %s202 = sphi 0, %s200
      %s203 = sphi 0, %s202
      %s217 = sphi 0, %s203
      %s221 = sphi 0, %s221
      %s223 = sphi 0, %s221
      %s224 = sphi 0, %s223
      %s238 = sphi 0, %s224
      %s242 = sphi 0, %s242
      %s244 = sphi 0, %s242
      %s245 = sphi 0, %s244
      %s259 = sphi 0, %s245
      %s267 = sphi 0, %s269
      %s270 = sphi 0, %s267
      %s271 = sphi 0, %s270
      %s287 = sphi 0, %s271
    $region4: #{tpu_custom_call.1} parent=1 // loop_header_branch
      %22 = sbr.rel (%p20) target = $region8
    $region5: #{tpu_custom_call.1} parent=1 // loop_body
      %s24 = ssub.s32 %s19, 1
      %s25 = ssub.s32 %s19, 2
      %s32 = sadd.s32 1, %s27
      %p33 = scmp.ge.s32.totalorder %s32, 1
      %s34 = scalar_select %p33, 0, %s32
      %s35 = sadd.s32 1, %s26
      %s36 = scalar_select %p33, %s35, %s26
      %p37 = scmp.ge.s32.totalorder %s36, 2
      %s38 = scalar_select %p37, 0, %s36
      %s39 = ssub.s32 %s26, %s38
      %s40 = ssub.s32 %s27, %s34
      %s41 = sor.u32 %s39, %s40
      %p42 = scmp.eq.s32.totalorder %s41, 0
      %s44 = sadd.s32 %s43, 1
      %s45 = scalar_select %p42, %s43, %s44
      %p48 = pneg %p42
      %p49 = scmp.eq.s32.totalorder %s19, 1
      %p50 = por %p48, %p49
      %p51 = scmp.ne.s32.totalorder %s43, %s46
      %p52 = scmp.eq.s32.totalorder %s19, 0
      %p53 = por %p51, %p52
      %p54 = scmp.ne.s32.totalorder %s43, %s46
      %p55 = scmp.eq.s32.totalorder %s24, 1
      %p56 = por %p54, %p55
      %p57 = scmp.ne.s32.totalorder %s46, %s47
      %p58 = scmp.eq.s32.totalorder %s24, 0
      %p59 = por %p57, %p58
      %p60 = scmp.ne.s32.totalorder %s46, %s47
      %p61 = scmp.eq.s32.totalorder %s25, 1
      %p62 = por %p60, %p61
      %p64 = scmp.ne.s32.totalorder %s47, %s63
      %p65 = scmp.eq.s32.totalorder %s25, 0
      %p66 = por %p64, %p65
      %s67 = ssub.s32 %s26, %s38
      %s68 = ssub.s32 %s27, %s34
      %s69 = sor.u32 %s67, %s68
      %p70 = scmp.eq.s32.totalorder %s69, 0
      %s72 = sadd.s32 %s71, 1
      %s73 = scalar_select %p70, %s71, %s72
      %p76 = pneg %p70
      %p77 = scmp.eq.s32.totalorder %s19, 1
      %p78 = por %p76, %p77
      %p79 = scmp.ne.s32.totalorder %s71, %s74
      %p80 = scmp.eq.s32.totalorder %s19, 0
      %p81 = por %p79, %p80
      %p82 = scmp.ne.s32.totalorder %s71, %s74
      %p83 = scmp.eq.s32.totalorder %s24, 1
      %p84 = por %p82, %p83
      %p85 = scmp.ne.s32.totalorder %s74, %s75
      %p86 = scmp.eq.s32.totalorder %s24, 0
      %p87 = por %p85, %p86
      %p88 = scmp.ne.s32.totalorder %s74, %s75
      %p89 = scmp.eq.s32.totalorder %s25, 1
      %p90 = por %p88, %p89
      %p92 = scmp.ne.s32.totalorder %s75, %s91
      %p93 = scmp.eq.s32.totalorder %s25, 0
      %p94 = por %p92, %p93
      %s96 = sadd.s32 %s95, 1
      %p99 = scmp.eq.s32.totalorder %s19, 1
      %p100 = scmp.ne.s32.totalorder %s95, %s97
      %p101 = scmp.eq.s32.totalorder %s19, 0
      %p102 = por %p100, %p101
      %p103 = scmp.ne.s32.totalorder %s95, %s97
      %p104 = scmp.eq.s32.totalorder %s24, 1
      %p105 = por %p103, %p104
      %p106 = scmp.ne.s32.totalorder %s97, %s98
      %p107 = scmp.eq.s32.totalorder %s24, 0
      %p108 = por %p106, %p107
      %p109 = scmp.ne.s32.totalorder %s97, %s98
      %p110 = scmp.eq.s32.totalorder %s25, 1
      %p111 = por %p109, %p110
      %p113 = scmp.ne.s32.totalorder %s98, %s112
      %p114 = scmp.eq.s32.totalorder %s25, 0
      %p115 = por %p113, %p114
      %s117 = sadd.s32 %s116, 1
      %p120 = scmp.eq.s32.totalorder %s19, 1
      %p121 = scmp.ne.s32.totalorder %s116, %s118
      %p122 = scmp.eq.s32.totalorder %s19, 0
      %p123 = por %p121, %p122
      %p124 = scmp.ne.s32.totalorder %s116, %s118
      %p125 = scmp.eq.s32.totalorder %s24, 1
      %p126 = por %p124, %p125
      %p127 = scmp.ne.s32.totalorder %s118, %s119
      %p128 = scmp.eq.s32.totalorder %s24, 0
      %p129 = por %p127, %p128
      %p130 = scmp.ne.s32.totalorder %s118, %s119
      %p131 = scmp.eq.s32.totalorder %s25, 1
      %p132 = por %p130, %p131
      %p134 = scmp.ne.s32.totalorder %s119, %s133
      %p135 = scmp.eq.s32.totalorder %s25, 0
      %p136 = por %p134, %p135
      %s138 = sadd.s32 %s137, 1
      %p141 = scmp.eq.s32.totalorder %s19, 1
      %p142 = scmp.ne.s32.totalorder %s137, %s139
      %p143 = scmp.eq.s32.totalorder %s19, 0
      %p144 = por %p142, %p143
      %p145 = scmp.ne.s32.totalorder %s137, %s139
      %p146 = scmp.eq.s32.totalorder %s24, 1
      %p147 = por %p145, %p146
      %p148 = scmp.ne.s32.totalorder %s139, %s140
      %p149 = scmp.eq.s32.totalorder %s24, 0
      %p150 = por %p148, %p149
      %p151 = scmp.ne.s32.totalorder %s139, %s140
      %p152 = scmp.eq.s32.totalorder %s25, 1
      %p153 = por %p151, %p152
      %p155 = scmp.ne.s32.totalorder %s140, %s154
      %p156 = scmp.eq.s32.totalorder %s25, 0
      %p157 = por %p155, %p156
      %s159 = sadd.s32 %s158, 1
      %p162 = scmp.eq.s32.totalorder %s19, 1
      %p163 = scmp.ne.s32.totalorder %s158, %s160
      %p164 = scmp.eq.s32.totalorder %s19, 0
      %p165 = por %p163, %p164
      %p166 = scmp.ne.s32.totalorder %s158, %s160
      %p167 = scmp.eq.s32.totalorder %s24, 1
      %p168 = por %p166, %p167
      %p169 = scmp.ne.s32.totalorder %s160, %s161
      %p170 = scmp.eq.s32.totalorder %s24, 0
      %p171 = por %p169, %p170
      %p172 = scmp.ne.s32.totalorder %s160, %s161
      %p173 = scmp.eq.s32.totalorder %s25, 1
      %p174 = por %p172, %p173
      %p176 = scmp.ne.s32.totalorder %s161, %s175
      %p177 = scmp.eq.s32.totalorder %s25, 0
      %p178 = por %p176, %p177
      %s180 = sadd.s32 %s179, 1
      %p183 = scmp.eq.s32.totalorder %s19, 1
      %p184 = scmp.ne.s32.totalorder %s179, %s181
      %p185 = scmp.eq.s32.totalorder %s19, 0
      %p186 = por %p184, %p185
      %p187 = scmp.ne.s32.totalorder %s179, %s181
      %p188 = scmp.eq.s32.totalorder %s24, 1
      %p189 = por %p187, %p188
      %p190 = scmp.ne.s32.totalorder %s181, %s182
      %p191 = scmp.eq.s32.totalorder %s24, 0
      %p192 = por %p190, %p191
      %p193 = scmp.ne.s32.totalorder %s181, %s182
      %p194 = scmp.eq.s32.totalorder %s25, 1
      %p195 = por %p193, %p194
      %p197 = scmp.ne.s32.totalorder %s182, %s196
      %p198 = scmp.eq.s32.totalorder %s25, 0
      %p199 = por %p197, %p198
      %s201 = sadd.s32 %s200, 1
      %p204 = scmp.eq.s32.totalorder %s19, 1
      %p205 = scmp.ne.s32.totalorder %s200, %s202
      %p206 = scmp.eq.s32.totalorder %s19, 0
      %p207 = por %p205, %p206
      %p208 = scmp.ne.s32.totalorder %s200, %s202
      %p209 = scmp.eq.s32.totalorder %s24, 1
      %p210 = por %p208, %p209
      %p211 = scmp.ne.s32.totalorder %s202, %s203
      %p212 = scmp.eq.s32.totalorder %s24, 0
      %p213 = por %p211, %p212
      %p214 = scmp.ne.s32.totalorder %s202, %s203
      %p215 = scmp.eq.s32.totalorder %s25, 1
      %p216 = por %p214, %p215
      %p218 = scmp.ne.s32.totalorder %s203, %s217
      %p219 = scmp.eq.s32.totalorder %s25, 0
      %p220 = por %p218, %p219
      %s222 = sadd.s32 %s221, 1
      %p225 = scmp.eq.s32.totalorder %s19, 1
      %p226 = scmp.ne.s32.totalorder %s221, %s223
      %p227 = scmp.eq.s32.totalorder %s19, 0
      %p228 = por %p226, %p227
      %p229 = scmp.ne.s32.totalorder %s221, %s223
      %p230 = scmp.eq.s32.totalorder %s24, 1
      %p231 = por %p229, %p230
      %p232 = scmp.ne.s32.totalorder %s223, %s224
      %p233 = scmp.eq.s32.totalorder %s24, 0
      %p234 = por %p232, %p233
      %p235 = scmp.ne.s32.totalorder %s223, %s224
      %p236 = scmp.eq.s32.totalorder %s25, 1
      %p237 = por %p235, %p236
      %p239 = scmp.ne.s32.totalorder %s224, %s238
      %p240 = scmp.eq.s32.totalorder %s25, 0
      %p241 = por %p239, %p240
      %s243 = sadd.s32 %s242, 1
      %p246 = scmp.eq.s32.totalorder %s19, 1
      %p247 = scmp.ne.s32.totalorder %s242, %s244
      %p248 = scmp.eq.s32.totalorder %s19, 0
      %p249 = por %p247, %p248
      %p250 = scmp.ne.s32.totalorder %s242, %s244
      %p251 = scmp.eq.s32.totalorder %s24, 1
      %p252 = por %p250, %p251
      %p253 = scmp.ne.s32.totalorder %s244, %s245
      %p254 = scmp.eq.s32.totalorder %s24, 0
      %p255 = por %p253, %p254
      %p256 = scmp.ne.s32.totalorder %s244, %s245
      %p257 = scmp.eq.s32.totalorder %s25, 1
      %p258 = por %p256, %p257
      %p260 = scmp.ne.s32.totalorder %s245, %s259
      %p261 = scmp.eq.s32.totalorder %s25, 0
      %p262 = por %p260, %p261
      %s263 = ssub.s32 %s26, %s38
      %s264 = ssub.s32 %s27, %s34
      %s265 = sor.u32 %s263, %s264
      %p266 = scmp.eq.s32.totalorder %s265, 0
      %s268 = sadd.s32 %s267, 1
      %s269 = scalar_select %p266, %s267, %s268
      %p272 = pneg %p266
      %p273 = scmp.eq.s32.totalorder %s19, 1
      %p274 = por %p272, %p273
      %p275 = scmp.ne.s32.totalorder %s267, %s270
      %p276 = scmp.eq.s32.totalorder %s19, 0
      %p277 = por %p275, %p276
      %p278 = scmp.ne.s32.totalorder %s267, %s270
      %p279 = scmp.eq.s32.totalorder %s24, 1
      %p280 = por %p278, %p279
      %p281 = scmp.ne.s32.totalorder %s270, %s271
      %p282 = scmp.eq.s32.totalorder %s24, 0
      %p283 = por %p281, %p282
      %p284 = scmp.ne.s32.totalorder %s270, %s271
      %p285 = scmp.eq.s32.totalorder %s25, 1
      %p286 = por %p284, %p285
      %p288 = scmp.ne.s32.totalorder %s271, %s287
      %p289 = scmp.eq.s32.totalorder %s25, 0
      %p290 = por %p288, %p289
      %p291 = scmp.le.s32.totalorder 1, %s19
      %p292 = scmp.lt.s32.totalorder %s19, 3
      %p293 = pnand %p291, %p292
      %p294 = pneg %p293
      // Predicated region
      $region9: #{tpu_custom_call.1} parent=5 // pred_check
        _
      $region10: #{tpu_custom_call.1} parent=5 // pred_check_branch
        %296 = sbr.rel (%p293) target = $region12
      $region11: #{tpu_custom_call.1} parent=5 // pred_region
        %s297 = ssub.s32 %s19, 1
        // Predicated region
        $region13: #{tpu_custom_call.1} parent=11 // pred_check
          %p298 = pneg %p108
        $region14: #{tpu_custom_call.1} parent=11 // pred_check_branch
          %300 = sbr.rel (%p298) target = $region16
        $region15: #{tpu_custom_call.1} parent=11 // pred_region
          _
        $region16: #{tpu_custom_call.1} parent=11 // pred_fallthru
          _
        // Predicated region
        $region17: #{tpu_custom_call.1} parent=11 // pred_check
          %p301 = pneg %p129
        $region18: #{tpu_custom_call.1} parent=11 // pred_check_branch
          %303 = sbr.rel (%p301) target = $region20
        $region19: #{tpu_custom_call.1} parent=11 // pred_region
          _
        $region20: #{tpu_custom_call.1} parent=11 // pred_fallthru
          _
        // Predicated region
        $region21: #{tpu_custom_call.1} parent=11 // pred_check
          %p304 = pneg %p150
        $region22: #{tpu_custom_call.1} parent=11 // pred_check_branch
          %306 = sbr.rel (%p304) target = $region24
        $region23: #{tpu_custom_call.1} parent=11 // pred_region
          _
        $region24: #{tpu_custom_call.1} parent=11 // pred_fallthru
          _
        // Predicated region
        $region25: #{tpu_custom_call.1} parent=11 // pred_check
          %p307 = pneg %p171
        $region26: #{tpu_custom_call.1} parent=11 // pred_check_branch
          %309 = sbr.rel (%p307) target = $region28
        $region27: #{tpu_custom_call.1} parent=11 // pred_region
          _
        $region28: #{tpu_custom_call.1} parent=11 // pred_fallthru
          _
        // Predicated region
        $region29: #{tpu_custom_call.1} parent=11 // pred_check
          %p310 = pneg %p192
        $region30: #{tpu_custom_call.1} parent=11 // pred_check_branch
          %312 = sbr.rel (%p310) target = $region32
        $region31: #{tpu_custom_call.1} parent=11 // pred_region
          _
        $region32: #{tpu_custom_call.1} parent=11 // pred_fallthru
          _
        // Predicated region
        $region33: #{tpu_custom_call.1} parent=11 // pred_check
          %p313 = pneg %p213
        $region34: #{tpu_custom_call.1} parent=11 // pred_check_branch
          %315 = sbr.rel (%p313) target = $region36
        $region35: #{tpu_custom_call.1} parent=11 // pred_region
          _
        $region36: #{tpu_custom_call.1} parent=11 // pred_fallthru
          _
        // Predicated region
        $region37: #{tpu_custom_call.1} parent=11 // pred_check
          %p316 = pneg %p234
        $region38: #{tpu_custom_call.1} parent=11 // pred_check_branch
          %318 = sbr.rel (%p316) target = $region40
        $region39: #{tpu_custom_call.1} parent=11 // pred_region
          _
        $region40: #{tpu_custom_call.1} parent=11 // pred_fallthru
          _
        // Predicated region
        $region41: #{tpu_custom_call.1} parent=11 // pred_check
          %p319 = pneg %p255
        $region42: #{tpu_custom_call.1} parent=11 // pred_check_branch
          %321 = sbr.rel (%p319) target = $region44
        $region43: #{tpu_custom_call.1} parent=11 // pred_region
          _
        $region44: #{tpu_custom_call.1} parent=11 // pred_fallthru
          _
      $region12: #{tpu_custom_call.1} parent=5 // pred_fallthru
        _
      %p322 = scmp.lt.s32.totalorder %s19, 2
      // Predicated region
      $region45: #{tpu_custom_call.1} parent=5 // pred_check
        %p323 = pneg %p322
      $region46: #{tpu_custom_call.1} parent=5 // pred_check_branch
        %325 = sbr.rel (%p323) target = $region48
      $region47: #{tpu_custom_call.1} parent=5 // pred_region
        // Predicated region
        $region49: #{tpu_custom_call.1} parent=47 // pred_check
          %p326 = pneg %p53
        $region50: #{tpu_custom_call.1} parent=47 // pred_check_branch
          %328 = sbr.rel (%p326) target = $region52
        $region51: #{tpu_custom_call.1} parent=47 // pred_region
          %p329 = scmp.lt.s32.totalorder %s26, 1
          %s330 = scalar_select %p329, %s26, 1
          %p331 = scmp.lt.s32.totalorder %s27, 0
          %s332 = scalar_select %p331, %s27, 0
          %s333 = smul.addr %s330, 16
          %s334 = sadd.s32 %s332, %s333
          %s335 = smul.addr %s334, 8
          %s336 = scalar_lea.vmem %s0, %s335
        $region52: #{tpu_custom_call.1} parent=47 // pred_fallthru
          _
        // Predicated region
        $region53: #{tpu_custom_call.1} parent=47 // pred_check
          %p337 = pneg %p81
        $region54: #{tpu_custom_call.1} parent=47 // pred_check_branch
          %339 = sbr.rel (%p337) target = $region56
        $region55: #{tpu_custom_call.1} parent=47 // pred_region
          %p340 = scmp.lt.s32.totalorder %s26, 1
          %s341 = scalar_select %p340, %s26, 1
          %p342 = scmp.lt.s32.totalorder %s27, 0
          %s343 = scalar_select %p342, %s27, 0
          %s344 = smul.addr %s343, 16
          %s345 = smul.addr %s341, 16
          %s346 = sadd.s32 %s344, %s345
          %s347 = smul.addr %s346, 8
          %s348 = scalar_lea.vmem %s1, %s347
        $region56: #{tpu_custom_call.1} parent=47 // pred_fallthru
          _
      $region48: #{tpu_custom_call.1} parent=5 // pred_fallthru
        _
      %p349 = scmp.le.s32.totalorder 1, %s19
      %p350 = scmp.lt.s32.totalorder %s19, 3
      %p351 = pnand %p349, %p350
      %p352 = pneg %p351
      // Predicated region
      $region57: #{tpu_custom_call.1} parent=5 // pred_check
        _
      $region58: #{tpu_custom_call.1} parent=5 // pred_check_branch
        %354 = sbr.rel (%p351) target = $region60
      $region59: #{tpu_custom_call.1} parent=5 // pred_region
        %s355 = ssub.s32 %s19, 1
        %p356 = scmp.lt.s32.totalorder %s28, 1
        %s357 = scalar_select %p356, %s28, 1
        %p358 = scmp.lt.s32.totalorder %s29, 0
        %s359 = scalar_select %p358, %s29, 0
        %s360 = smul.addr %s357, 16
        %s361 = sadd.s32 %s359, %s360
        %s362 = smul.addr %s361, 8
        %s363 = scalar_lea.vmem %s0, %s362
        %p364 = pneg %p59
        %p365 = pneg %p56
        %p366 = scmp.lt.s32.totalorder %s28, 1
        %s367 = scalar_select %p366, %s28, 1
        %p368 = scmp.lt.s32.totalorder %s29, 0
        %s369 = scalar_select %p368, %s29, 0
        %s370 = smul.addr %s369, 16
        %s371 = smul.addr %s367, 16
        %s372 = sadd.s32 %s370, %s371
        %s373 = smul.addr %s372, 8
        %s374 = scalar_lea.vmem %s1, %s373
        %p375 = pneg %p87
        %p376 = pneg %p84
        %p377 = pneg %p108
        %p378 = pneg %p105
        %p379 = pneg %p129
        %p380 = pneg %p126
        %p381 = pneg %p150
        %p382 = pneg %p147
        %p383 = pneg %p171
        %p384 = pneg %p168
        %p385 = pneg %p192
        %p386 = pneg %p189
        %p387 = pneg %p213
        %p388 = pneg %p210
        %p389 = pneg %p234
        %p390 = pneg %p231
        %p391 = pneg %p255
        %p392 = pneg %p252
        %p393 = pneg %p283
        %p394 = pneg %p280
        %s395 = sand.u32 %s270, 1
        %s396 = scalar_lea.sflag [#allocation5], %s395
        %s397 = sand.u32 %s270, 1
        %s398 = smul.addr %s397, 128
        %s399 = scalar_lea.vmem [#allocation4], %s398
        %p400 = scmp.lt.s32.totalorder %s28, 1
        %s401 = scalar_select %p400, %s28, 1
        %p402 = scmp.lt.s32.totalorder %s29, 0
        %s403 = scalar_select %p402, %s29, 0
        %s404 = smul.addr %s401, 16
        %s405 = sadd.s32 %s403, %s404
        %s406 = smul.addr %s405, 8
        %s407 = scalar_lea.vmem %s0, %s406
        %p408 = scmp.lt.s32.totalorder %s28, 1
        %s409 = scalar_select %p408, %s28, 1
        %p410 = scmp.lt.s32.totalorder %s29, 0
        %s411 = scalar_select %p410, %s29, 0
        %s412 = smul.addr %s411, 16
        %s413 = smul.addr %s409, 16
        %s414 = sadd.s32 %s412, %s413
        %s415 = smul.addr %s414, 8
        %s416 = scalar_lea.vmem %s1, %s415
        %s417 = smul.u32 %s29, 128
        %v418 = vld [vmem:[%s407] sm:$0xff]
        %v419 = vld [vmem:[%s407 + $0x8] sm:$0xff]
        %v420 = vld [vmem:[%s407 + $0x10] sm:$0xff]
        %v421 = vld [vmem:[%s407 + $0x18] sm:$0xff]
        %v422 = vld [vmem:[%s407 + $0x20] sm:$0xff]
        %v423 = vld [vmem:[%s407 + $0x28] sm:$0xff]
        %v424 = vld [vmem:[%s407 + $0x30] sm:$0xff]
        %v425 = vld [vmem:[%s407 + $0x38] sm:$0xff]
        %v426 = vld [vmem:[%s407 + $0x40] sm:$0xff]
        %v427 = vld [vmem:[%s407 + $0x48] sm:$0xff]
        %v428 = vld [vmem:[%s407 + $0x50] sm:$0xff]
        %v429 = vld [vmem:[%s407 + $0x58] sm:$0xff]
        %v430 = vld [vmem:[%s407 + $0x60] sm:$0xff]
        %v431 = vld [vmem:[%s407 + $0x68] sm:$0xff]
        %v432 = vld [vmem:[%s407 + $0x70] sm:$0xff]
        %v433 = vld [vmem:[%s407 + $0x78] sm:$0xff]
        %434 = vst [vmem:[#allocation2 + $0x8] sm:$0xff] %v418
        %435 = vst [vmem:[#allocation2 + $0x20] sm:$0xff] %v419
        %436 = vst [vmem:[#allocation2 + $0x38] sm:$0xff] %v420
        %437 = vst [vmem:[#allocation2 + $0x50] sm:$0xff] %v421
        %438 = vst [vmem:[#allocation2 + $0x68] sm:$0xff] %v422
        %439 = vst [vmem:[#allocation2 + $0x80] sm:$0xff] %v423
        %440 = vst [vmem:[#allocation2 + $0x98] sm:$0xff] %v424
        %441 = vst [vmem:[#allocation2 + $0xb0] sm:$0xff] %v425
        %442 = vst [vmem:[#allocation2 + $0xc8] sm:$0xff] %v426
        %443 = vst [vmem:[#allocation2 + $0xe0] sm:$0xff] %v427
        %444 = vst [vmem:[#allocation2 + $0xf8] sm:$0xff] %v428
        %445 = vst [vmem:[#allocation2 + $0x110] sm:$0xff] %v429
        %446 = vst [vmem:[#allocation2 + $0x128] sm:$0xff] %v430
        %447 = vst [vmem:[#allocation2 + $0x140] sm:$0xff] %v431
        %448 = vst [vmem:[#allocation2 + $0x158] sm:$0xff] %v432
        %449 = vst [vmem:[#allocation2 + $0x170] sm:$0xff] %v433
        %v450 = vld [vmem:[%s416] sm:$0xff]
        %v451 = vld [vmem:[%s416 + $0x8] sm:$0xff]
        %v452 = vld [vmem:[%s416 + $0x10] sm:$0xff]
        %v453 = vld [vmem:[%s416 + $0x18] sm:$0xff]
        %v454 = vld [vmem:[%s416 + $0x20] sm:$0xff]
        %v455 = vld [vmem:[%s416 + $0x28] sm:$0xff]
        %v456 = vld [vmem:[%s416 + $0x30] sm:$0xff]
        %v457 = vld [vmem:[%s416 + $0x38] sm:$0xff]
        %v458 = vld [vmem:[%s416 + $0x40] sm:$0xff]
        %v459 = vld [vmem:[%s416 + $0x48] sm:$0xff]
        %v460 = vld [vmem:[%s416 + $0x50] sm:$0xff]
        %v461 = vld [vmem:[%s416 + $0x58] sm:$0xff]
        %v462 = vld [vmem:[%s416 + $0x60] sm:$0xff]
        %v463 = vld [vmem:[%s416 + $0x68] sm:$0xff]
        %v464 = vld [vmem:[%s416 + $0x70] sm:$0xff]
        %v465 = vld [vmem:[%s416 + $0x78] sm:$0xff]
        %482 = vrot.lane.b32.xlu0 %v450, 126
        %v483 = vpop.permute.xlu0 %482
        %484 = vrot.lane.b32.xlu0 %v451, 126
        %v485 = vpop.permute.xlu0 %484
        %486 = vrot.lane.b32.xlu0 %v452, 126
        %v487 = vpop.permute.xlu0 %486
        %488 = vrot.lane.b32.xlu0 %v453, 126
        %v489 = vpop.permute.xlu0 %488
        %490 = vrot.lane.b32.xlu0 %v454, 126
        %v491 = vpop.permute.xlu0 %490
        %492 = vrot.lane.b32.xlu0 %v455, 126
        %v493 = vpop.permute.xlu0 %492
        %494 = vrot.lane.b32.xlu0 %v456, 126
        %v495 = vpop.permute.xlu0 %494
        %496 = vrot.lane.b32.xlu0 %v457, 126
        %v497 = vpop.permute.xlu0 %496
        %498 = vrot.lane.b32.xlu0 %v458, 126
        %v499 = vpop.permute.xlu0 %498
        %500 = vrot.lane.b32.xlu0 %v459, 126
        %v501 = vpop.permute.xlu0 %500
        %502 = vrot.lane.b32.xlu0 %v460, 126
        %v503 = vpop.permute.xlu0 %502
        %504 = vrot.lane.b32.xlu0 %v461, 126
        %v505 = vpop.permute.xlu0 %504
        %506 = vrot.lane.b32.xlu0 %v462, 126
        %v507 = vpop.permute.xlu0 %506
        %508 = vrot.lane.b32.xlu0 %v463, 126
        %v509 = vpop.permute.xlu0 %508
        %510 = vrot.lane.b32.xlu0 %v464, 126
        %v511 = vpop.permute.xlu0 %510
        %512 = vrot.lane.b32.xlu0 %v465, 126
        %v513 = vpop.permute.xlu0 %512
        %vm530 = vcmask 1048560
        %531 = vst.msk [vmem:[#allocation2] sm:$0xff] %vm530, %v483
        %532 = vst.msk [vmem:[#allocation2 + $0x18] sm:$0xff] %vm530, %v485
        %533 = vst.msk [vmem:[#allocation2 + $0x30] sm:$0xff] %vm530, %v487
        %534 = vst.msk [vmem:[#allocation2 + $0x48] sm:$0xff] %vm530, %v489
        %535 = vst.msk [vmem:[#allocation2 + $0x60] sm:$0xff] %vm530, %v491
        %536 = vst.msk [vmem:[#allocation2 + $0x78] sm:$0xff] %vm530, %v493
        %537 = vst.msk [vmem:[#allocation2 + $0x90] sm:$0xff] %vm530, %v495
        %538 = vst.msk [vmem:[#allocation2 + $0xa8] sm:$0xff] %vm530, %v497
        %539 = vst.msk [vmem:[#allocation2 + $0xc0] sm:$0xff] %vm530, %v499
        %540 = vst.msk [vmem:[#allocation2 + $0xd8] sm:$0xff] %vm530, %v501
        %541 = vst.msk [vmem:[#allocation2 + $0xf0] sm:$0xff] %vm530, %v503
        %542 = vst.msk [vmem:[#allocation2 + $0x108] sm:$0xff] %vm530, %v505
        %543 = vst.msk [vmem:[#allocation2 + $0x120] sm:$0xff] %vm530, %v507
        %544 = vst.msk [vmem:[#allocation2 + $0x138] sm:$0xff] %vm530, %v509
        %545 = vst.msk [vmem:[#allocation2 + $0x150] sm:$0xff] %vm530, %v511
        %546 = vst.msk [vmem:[#allocation2 + $0x168] sm:$0xff] %vm530, %v513
        %v547 = vld [vmem:[%s416] sm:$0xff]
        %v548 = vld [vmem:[%s416 + $0x8] sm:$0xff]
        %v549 = vld [vmem:[%s416 + $0x10] sm:$0xff]
        %v550 = vld [vmem:[%s416 + $0x18] sm:$0xff]
        %v551 = vld [vmem:[%s416 + $0x20] sm:$0xff]
        %v552 = vld [vmem:[%s416 + $0x28] sm:$0xff]
        %v553 = vld [vmem:[%s416 + $0x30] sm:$0xff]
        %v554 = vld [vmem:[%s416 + $0x38] sm:$0xff]
        %v555 = vld [vmem:[%s416 + $0x40] sm:$0xff]
        %v556 = vld [vmem:[%s416 + $0x48] sm:$0xff]
        %v557 = vld [vmem:[%s416 + $0x50] sm:$0xff]
        %v558 = vld [vmem:[%s416 + $0x58] sm:$0xff]
        %v559 = vld [vmem:[%s416 + $0x60] sm:$0xff]
        %v560 = vld [vmem:[%s416 + $0x68] sm:$0xff]
        %v561 = vld [vmem:[%s416 + $0x70] sm:$0xff]
        %v562 = vld [vmem:[%s416 + $0x78] sm:$0xff]
        %579 = vrot.lane.b32.xlu0 %v547, 126
        %v580 = vpop.permute.xlu0 %579
        %581 = vrot.lane.b32.xlu0 %v548, 126
        %v582 = vpop.permute.xlu0 %581
        %583 = vrot.lane.b32.xlu0 %v549, 126
        %v584 = vpop.permute.xlu0 %583
        %585 = vrot.lane.b32.xlu0 %v550, 126
        %v586 = vpop.permute.xlu0 %585
        %587 = vrot.lane.b32.xlu0 %v551, 126
        %v588 = vpop.permute.xlu0 %587
        %589 = vrot.lane.b32.xlu0 %v552, 126
        %v590 = vpop.permute.xlu0 %589
        %591 = vrot.lane.b32.xlu0 %v553, 126
        %v592 = vpop.permute.xlu0 %591
        %593 = vrot.lane.b32.xlu0 %v554, 126
        %v594 = vpop.permute.xlu0 %593
        %595 = vrot.lane.b32.xlu0 %v555, 126
        %v596 = vpop.permute.xlu0 %595
        %597 = vrot.lane.b32.xlu0 %v556, 126
        %v598 = vpop.permute.xlu0 %597
        %599 = vrot.lane.b32.xlu0 %v557, 126
        %v600 = vpop.permute.xlu0 %599
        %601 = vrot.lane.b32.xlu0 %v558, 126
        %v602 = vpop.permute.xlu0 %601
        %603 = vrot.lane.b32.xlu0 %v559, 126
        %v604 = vpop.permute.xlu0 %603
        %605 = vrot.lane.b32.xlu0 %v560, 126
        %v606 = vpop.permute.xlu0 %605
        %607 = vrot.lane.b32.xlu0 %v561, 126
        %v608 = vpop.permute.xlu0 %607
        %609 = vrot.lane.b32.xlu0 %v562, 126
        %v610 = vpop.permute.xlu0 %609
        %vm627 = vcmask 15360
        %628 = vst.msk [vmem:[#allocation2 + $0x10] sm:$0xff] %vm627, %v580
        %629 = vst.msk [vmem:[#allocation2 + $0x28] sm:$0xff] %vm627, %v582
        %630 = vst.msk [vmem:[#allocation2 + $0x40] sm:$0xff] %vm627, %v584
        %631 = vst.msk [vmem:[#allocation2 + $0x58] sm:$0xff] %vm627, %v586
        %632 = vst.msk [vmem:[#allocation2 + $0x70] sm:$0xff] %vm627, %v588
        %633 = vst.msk [vmem:[#allocation2 + $0x88] sm:$0xff] %vm627, %v590
        %634 = vst.msk [vmem:[#allocation2 + $0xa0] sm:$0xff] %vm627, %v592
        %635 = vst.msk [vmem:[#allocation2 + $0xb8] sm:$0xff] %vm627, %v594
        %636 = vst.msk [vmem:[#allocation2 + $0xd0] sm:$0xff] %vm627, %v596
        %637 = vst.msk [vmem:[#allocation2 + $0xe8] sm:$0xff] %vm627, %v598
        %638 = vst.msk [vmem:[#allocation2 + $0x100] sm:$0xff] %vm627, %v600
        %639 = vst.msk [vmem:[#allocation2 + $0x118] sm:$0xff] %vm627, %v602
        %640 = vst.msk [vmem:[#allocation2 + $0x130] sm:$0xff] %vm627, %v604
        %641 = vst.msk [vmem:[#allocation2 + $0x148] sm:$0xff] %vm627, %v606
        %642 = vst.msk [vmem:[#allocation2 + $0x160] sm:$0xff] %vm627, %v608
        %643 = vst.msk [vmem:[#allocation2 + $0x178] sm:$0xff] %vm627, %v610
        %v644 = vld [vmem:[%s2] sm:$0xff]
        %v645 = vld [vmem:[%s2 + $0x8] sm:$0xff]
        %v646 = vld [vmem:[%s2 + $0x10] sm:$0xff]
        %v647 = vld [vmem:[%s2 + $0x18] sm:$0xff]
        %v648 = vld [vmem:[%s2 + $0x20] sm:$0xff]
        %v649 = vld [vmem:[%s2 + $0x28] sm:$0xff]
        %v650 = vld [vmem:[%s2 + $0x30] sm:$0xff]
        %v651 = vld [vmem:[%s2 + $0x38] sm:$0xff]
        %v652 = vld [vmem:[%s2 + $0x40] sm:$0xff]
        %v653 = vld [vmem:[%s2 + $0x48] sm:$0xff]
        %v654 = vld [vmem:[%s2 + $0x50] sm:$0xff]
        %v655 = vld [vmem:[%s2 + $0x58] sm:$0xff]
        %v656 = vld [vmem:[%s2 + $0x60] sm:$0xff]
        %v657 = vld [vmem:[%s2 + $0x68] sm:$0xff]
        %v658 = vld [vmem:[%s2 + $0x70] sm:$0xff]
        %v659 = vld [vmem:[%s2 + $0x78] sm:$0xff]
        %v660 = vld [vmem:[#allocation2] sm:$0xff]
        %v661 = vld [vmem:[#allocation2 + $0x8] sm:$0xff]
        %v662 = vld [vmem:[#allocation2 + $0x18] sm:$0xff]
        %v663 = vld [vmem:[#allocation2 + $0x20] sm:$0xff]
        %v664 = vld [vmem:[#allocation2 + $0x30] sm:$0xff]
        %v665 = vld [vmem:[#allocation2 + $0x38] sm:$0xff]
        %v666 = vld [vmem:[#allocation2 + $0x48] sm:$0xff]
        %v667 = vld [vmem:[#allocation2 + $0x50] sm:$0xff]
        %v668 = vld [vmem:[#allocation2 + $0x60] sm:$0xff]
        %v669 = vld [vmem:[#allocation2 + $0x68] sm:$0xff]
        %v670 = vld [vmem:[#allocation2 + $0x78] sm:$0xff]
        %v671 = vld [vmem:[#allocation2 + $0x80] sm:$0xff]
        %v672 = vld [vmem:[#allocation2 + $0x90] sm:$0xff]
        %v673 = vld [vmem:[#allocation2 + $0x98] sm:$0xff]
        %v674 = vld [vmem:[#allocation2 + $0xa8] sm:$0xff]
        %v675 = vld [vmem:[#allocation2 + $0xb0] sm:$0xff]
        %v676 = vld [vmem:[#allocation2 + $0xc0] sm:$0xff]
        %v677 = vld [vmem:[#allocation2 + $0xc8] sm:$0xff]
        %v678 = vld [vmem:[#allocation2 + $0xd8] sm:$0xff]
        %v679 = vld [vmem:[#allocation2 + $0xe0] sm:$0xff]
        %v680 = vld [vmem:[#allocation2 + $0xf0] sm:$0xff]
        %v681 = vld [vmem:[#allocation2 + $0xf8] sm:$0xff]
        %v682 = vld [vmem:[#allocation2 + $0x108] sm:$0xff]
        %v683 = vld [vmem:[#allocation2 + $0x110] sm:$0xff]
        %v684 = vld [vmem:[#allocation2 + $0x120] sm:$0xff]
        %v685 = vld [vmem:[#allocation2 + $0x128] sm:$0xff]
        %v686 = vld [vmem:[#allocation2 + $0x138] sm:$0xff]
        %v687 = vld [vmem:[#allocation2 + $0x140] sm:$0xff]
        %v688 = vld [vmem:[#allocation2 + $0x150] sm:$0xff]
        %v689 = vld [vmem:[#allocation2 + $0x158] sm:$0xff]
        %v690 = vld [vmem:[#allocation2 + $0x168] sm:$0xff]
        %v691 = vld [vmem:[#allocation2 + $0x170] sm:$0xff]
        %693 = vset.pattern.permute.xlu0 0
        %694 = vperm.xlu0 %693, %v644
        %v695 = vpop.permute.xlu0 %694
        %698 = vset.pattern.permute.xlu0 0
        %699 = vperm.xlu0 %698, %v645
        %v700 = vpop.permute.xlu0 %699
        %703 = vset.pattern.permute.xlu0 0
        %704 = vperm.xlu0 %703, %v646
        %v705 = vpop.permute.xlu0 %704
        %708 = vset.pattern.permute.xlu0 0
        %709 = vperm.xlu0 %708, %v647
        %v710 = vpop.permute.xlu0 %709
        %713 = vset.pattern.permute.xlu0 0
        %714 = vperm.xlu0 %713, %v648
        %v715 = vpop.permute.xlu0 %714
        %718 = vset.pattern.permute.xlu0 0
        %719 = vperm.xlu0 %718, %v649
        %v720 = vpop.permute.xlu0 %719
        %723 = vset.pattern.permute.xlu0 0
        %724 = vperm.xlu0 %723, %v650
        %v725 = vpop.permute.xlu0 %724
        %728 = vset.pattern.permute.xlu0 0
        %729 = vperm.xlu0 %728, %v651
        %v730 = vpop.permute.xlu0 %729
        %733 = vset.pattern.permute.xlu0 0
        %734 = vperm.xlu0 %733, %v652
        %v735 = vpop.permute.xlu0 %734
        %738 = vset.pattern.permute.xlu0 0
        %739 = vperm.xlu0 %738, %v653
        %v740 = vpop.permute.xlu0 %739
        %743 = vset.pattern.permute.xlu0 0
        %744 = vperm.xlu0 %743, %v654
        %v745 = vpop.permute.xlu0 %744
        %748 = vset.pattern.permute.xlu0 0
        %749 = vperm.xlu0 %748, %v655
        %v750 = vpop.permute.xlu0 %749
        %753 = vset.pattern.permute.xlu0 0
        %754 = vperm.xlu0 %753, %v656
        %v755 = vpop.permute.xlu0 %754
        %758 = vset.pattern.permute.xlu0 0
        %759 = vperm.xlu0 %758, %v657
        %v760 = vpop.permute.xlu0 %759
        %763 = vset.pattern.permute.xlu0 0
        %764 = vperm.xlu0 %763, %v658
        %v765 = vpop.permute.xlu0 %764
        %768 = vset.pattern.permute.xlu0 0
        %769 = vperm.xlu0 %768, %v659
        %v770 = vpop.permute.xlu0 %769
        %v772 = vmul.f32 %v695, %v660
        %v773 = vmul.f32 %v695, %v661
        %v774 = vmul.f32 %v700, %v662
        %v775 = vmul.f32 %v700, %v663
        %v776 = vmul.f32 %v705, %v664
        %v777 = vmul.f32 %v705, %v665
        %v778 = vmul.f32 %v710, %v666
        %v779 = vmul.f32 %v710, %v667
        %v780 = vmul.f32 %v715, %v668
        %v781 = vmul.f32 %v715, %v669
        %v782 = vmul.f32 %v720, %v670
        %v783 = vmul.f32 %v720, %v671
        %v784 = vmul.f32 %v725, %v672
        %v785 = vmul.f32 %v725, %v673
        %v786 = vmul.f32 %v730, %v674
        %v787 = vmul.f32 %v730, %v675
        %v788 = vmul.f32 %v735, %v676
        %v789 = vmul.f32 %v735, %v677
        %v790 = vmul.f32 %v740, %v678
        %v791 = vmul.f32 %v740, %v679
        %v792 = vmul.f32 %v745, %v680
        %v793 = vmul.f32 %v745, %v681
        %v794 = vmul.f32 %v750, %v682
        %v795 = vmul.f32 %v750, %v683
        %v796 = vmul.f32 %v755, %v684
        %v797 = vmul.f32 %v755, %v685
        %v798 = vmul.f32 %v760, %v686
        %v799 = vmul.f32 %v760, %v687
        %v800 = vmul.f32 %v765, %v688
        %v801 = vmul.f32 %v765, %v689
        %v802 = vmul.f32 %v770, %v690
        %v803 = vmul.f32 %v770, %v691
        %v804 = vld [vmem:[#allocation2] sm:$0xff]
        %v805 = vld [vmem:[#allocation2 + $0x8] sm:$0xff]
        %v806 = vld [vmem:[#allocation2 + $0x10] sm:$0xff]
        %v807 = vld [vmem:[#allocation2 + $0x18] sm:$0xff]
        %v808 = vld [vmem:[#allocation2 + $0x20] sm:$0xff]
        %v809 = vld [vmem:[#allocation2 + $0x28] sm:$0xff]
        %v810 = vld [vmem:[#allocation2 + $0x30] sm:$0xff]
        %v811 = vld [vmem:[#allocation2 + $0x38] sm:$0xff]
        %v812 = vld [vmem:[#allocation2 + $0x40] sm:$0xff]
        %v813 = vld [vmem:[#allocation2 + $0x48] sm:$0xff]
        %v814 = vld [vmem:[#allocation2 + $0x50] sm:$0xff]
        %v815 = vld [vmem:[#allocation2 + $0x58] sm:$0xff]
        %v816 = vld [vmem:[#allocation2 + $0x60] sm:$0xff]
        %v817 = vld [vmem:[#allocation2 + $0x68] sm:$0xff]
        %v818 = vld [vmem:[#allocation2 + $0x70] sm:$0xff]
        %v819 = vld [vmem:[#allocation2 + $0x78] sm:$0xff]
        %v820 = vld [vmem:[#allocation2 + $0x80] sm:$0xff]
        %v821 = vld [vmem:[#allocation2 + $0x88] sm:$0xff]
        %v822 = vld [vmem:[#allocation2 + $0x90] sm:$0xff]
        %v823 = vld [vmem:[#allocation2 + $0x98] sm:$0xff]
        %v824 = vld [vmem:[#allocation2 + $0xa0] sm:$0xff]
        %v825 = vld [vmem:[#allocation2 + $0xa8] sm:$0xff]
        %v826 = vld [vmem:[#allocation2 + $0xb0] sm:$0xff]
        %v827 = vld [vmem:[#allocation2 + $0xb8] sm:$0xff]
        %v828 = vld [vmem:[#allocation2 + $0xc0] sm:$0xff]
        %v829 = vld [vmem:[#allocation2 + $0xc8] sm:$0xff]
        %v830 = vld [vmem:[#allocation2 + $0xd0] sm:$0xff]
        %v831 = vld [vmem:[#allocation2 + $0xd8] sm:$0xff]
        %v832 = vld [vmem:[#allocation2 + $0xe0] sm:$0xff]
        %v833 = vld [vmem:[#allocation2 + $0xe8] sm:$0xff]
        %v834 = vld [vmem:[#allocation2 + $0xf0] sm:$0xff]
        %v835 = vld [vmem:[#allocation2 + $0xf8] sm:$0xff]
        %v836 = vld [vmem:[#allocation2 + $0x100] sm:$0xff]
        %v837 = vld [vmem:[#allocation2 + $0x108] sm:$0xff]
        %v838 = vld [vmem:[#allocation2 + $0x110] sm:$0xff]
        %v839 = vld [vmem:[#allocation2 + $0x118] sm:$0xff]
        %v840 = vld [vmem:[#allocation2 + $0x120] sm:$0xff]
        %v841 = vld [vmem:[#allocation2 + $0x128] sm:$0xff]
        %v842 = vld [vmem:[#allocation2 + $0x130] sm:$0xff]
        %v843 = vld [vmem:[#allocation2 + $0x138] sm:$0xff]
        %v844 = vld [vmem:[#allocation2 + $0x140] sm:$0xff]
        %v845 = vld [vmem:[#allocation2 + $0x148] sm:$0xff]
        %v846 = vld [vmem:[#allocation2 + $0x150] sm:$0xff]
        %v847 = vld [vmem:[#allocation2 + $0x158] sm:$0xff]
        %v848 = vld [vmem:[#allocation2 + $0x160] sm:$0xff]
        %v849 = vld [vmem:[#allocation2 + $0x168] sm:$0xff]
        %v850 = vld [vmem:[#allocation2 + $0x170] sm:$0xff]
        %v851 = vld [vmem:[#allocation2 + $0x178] sm:$0xff]
        %852 = vset.pattern.permute.xlu0 1
        %853 = vperm.xlu0 %852, %v644
        %v854 = vpop.permute.xlu0 %853
        %856 = vset.pattern.permute.xlu0 1
        %857 = vperm.xlu0 %856, %v645
        %v858 = vpop.permute.xlu0 %857
        %860 = vset.pattern.permute.xlu0 1
        %861 = vperm.xlu0 %860, %v646
        %v862 = vpop.permute.xlu0 %861
        %864 = vset.pattern.permute.xlu0 1
        %865 = vperm.xlu0 %864, %v647
        %v866 = vpop.permute.xlu0 %865
        %868 = vset.pattern.permute.xlu0 1
        %869 = vperm.xlu0 %868, %v648
        %v870 = vpop.permute.xlu0 %869
        %872 = vset.pattern.permute.xlu0 1
        %873 = vperm.xlu0 %872, %v649
        %v874 = vpop.permute.xlu0 %873
        %876 = vset.pattern.permute.xlu0 1
        %877 = vperm.xlu0 %876, %v650
        %v878 = vpop.permute.xlu0 %877
        %880 = vset.pattern.permute.xlu0 1
        %881 = vperm.xlu0 %880, %v651
        %v882 = vpop.permute.xlu0 %881
        %884 = vset.pattern.permute.xlu0 1
        %885 = vperm.xlu0 %884, %v652
        %v886 = vpop.permute.xlu0 %885
        %888 = vset.pattern.permute.xlu0 1
        %889 = vperm.xlu0 %888, %v653
        %v890 = vpop.permute.xlu0 %889
        %892 = vset.pattern.permute.xlu0 1
        %893 = vperm.xlu0 %892, %v654
        %v894 = vpop.permute.xlu0 %893
        %896 = vset.pattern.permute.xlu0 1
        %897 = vperm.xlu0 %896, %v655
        %v898 = vpop.permute.xlu0 %897
        %900 = vset.pattern.permute.xlu0 1
        %901 = vperm.xlu0 %900, %v656
        %v902 = vpop.permute.xlu0 %901
        %904 = vset.pattern.permute.xlu0 1
        %905 = vperm.xlu0 %904, %v657
        %v906 = vpop.permute.xlu0 %905
        %908 = vset.pattern.permute.xlu0 1
        %909 = vperm.xlu0 %908, %v658
        %v910 = vpop.permute.xlu0 %909
        %912 = vset.pattern.permute.xlu0 1
        %913 = vperm.xlu0 %912, %v659
        %v914 = vpop.permute.xlu0 %913
        %v916 = vmul.f32 %v854, %v804
        %v917 = vmul.f32 %v854, %v805
        %v918 = vmul.f32 %v854, %v806
        %v919 = vmul.f32 %v858, %v807
        %v920 = vmul.f32 %v858, %v808
        %v921 = vmul.f32 %v858, %v809
        %v922 = vmul.f32 %v862, %v810
        %v923 = vmul.f32 %v862, %v811
        %v924 = vmul.f32 %v862, %v812
        %v925 = vmul.f32 %v866, %v813
        %v926 = vmul.f32 %v866, %v814
        %v927 = vmul.f32 %v866, %v815
        %v928 = vmul.f32 %v870, %v816
        %v929 = vmul.f32 %v870, %v817
        %v930 = vmul.f32 %v870, %v818
        %v931 = vmul.f32 %v874, %v819
        %v932 = vmul.f32 %v874, %v820
        %v933 = vmul.f32 %v874, %v821
        %v934 = vmul.f32 %v878, %v822
        %v935 = vmul.f32 %v878, %v823
        %v936 = vmul.f32 %v878, %v824
        %v937 = vmul.f32 %v882, %v825
        %v938 = vmul.f32 %v882, %v826
        %v939 = vmul.f32 %v882, %v827
        %v940 = vmul.f32 %v886, %v828
        %v941 = vmul.f32 %v886, %v829
        %v942 = vmul.f32 %v886, %v830
        %v943 = vmul.f32 %v890, %v831
        %v944 = vmul.f32 %v890, %v832
        %v945 = vmul.f32 %v890, %v833
        %v946 = vmul.f32 %v894, %v834
        %v947 = vmul.f32 %v894, %v835
        %v948 = vmul.f32 %v894, %v836
        %v949 = vmul.f32 %v898, %v837
        %v950 = vmul.f32 %v898, %v838
        %v951 = vmul.f32 %v898, %v839
        %v952 = vmul.f32 %v902, %v840
        %v953 = vmul.f32 %v902, %v841
        %v954 = vmul.f32 %v902, %v842
        %v955 = vmul.f32 %v906, %v843
        %v956 = vmul.f32 %v906, %v844
        %v957 = vmul.f32 %v906, %v845
        %v958 = vmul.f32 %v910, %v846
        %v959 = vmul.f32 %v910, %v847
        %v960 = vmul.f32 %v910, %v848
        %v961 = vmul.f32 %v914, %v849
        %v962 = vmul.f32 %v914, %v850
        %v963 = vmul.f32 %v914, %v851
        %1012 = vrot.lane.b32.xlu0 %v916, 127
        %v1013 = vpop.permute.xlu0 %1012
        %1014 = vrot.lane.b32.xlu0 %v917, 127
        %v1015 = vpop.permute.xlu0 %1014
        %1016 = vrot.lane.b32.xlu0 %v918, 127
        %v1017 = vpop.permute.xlu0 %1016
        %1018 = vrot.lane.b32.xlu0 %v919, 127
        %v1019 = vpop.permute.xlu0 %1018
        %1020 = vrot.lane.b32.xlu0 %v920, 127
        %v1021 = vpop.permute.xlu0 %1020
        %1022 = vrot.lane.b32.xlu0 %v921, 127
        %v1023 = vpop.permute.xlu0 %1022
        %1024 = vrot.lane.b32.xlu0 %v922, 127
        %v1025 = vpop.permute.xlu0 %1024
        %1026 = vrot.lane.b32.xlu0 %v923, 127
        %v1027 = vpop.permute.xlu0 %1026
        %1028 = vrot.lane.b32.xlu0 %v924, 127
        %v1029 = vpop.permute.xlu0 %1028
        %1030 = vrot.lane.b32.xlu0 %v925, 127
        %v1031 = vpop.permute.xlu0 %1030
        %1032 = vrot.lane.b32.xlu0 %v926, 127
        %v1033 = vpop.permute.xlu0 %1032
        %1034 = vrot.lane.b32.xlu0 %v927, 127
        %v1035 = vpop.permute.xlu0 %1034
        %1036 = vrot.lane.b32.xlu0 %v928, 127
        %v1037 = vpop.permute.xlu0 %1036
        %1038 = vrot.lane.b32.xlu0 %v929, 127
        %v1039 = vpop.permute.xlu0 %1038
        %1040 = vrot.lane.b32.xlu0 %v930, 127
        %v1041 = vpop.permute.xlu0 %1040
        %1042 = vrot.lane.b32.xlu0 %v931, 127
        %v1043 = vpop.permute.xlu0 %1042
        %1044 = vrot.lane.b32.xlu0 %v932, 127
        %v1045 = vpop.permute.xlu0 %1044
        %1046 = vrot.lane.b32.xlu0 %v933, 127
        %v1047 = vpop.permute.xlu0 %1046
        %1048 = vrot.lane.b32.xlu0 %v934, 127
        %v1049 = vpop.permute.xlu0 %1048
        %1050 = vrot.lane.b32.xlu0 %v935, 127
        %v1051 = vpop.permute.xlu0 %1050
        %1052 = vrot.lane.b32.xlu0 %v936, 127
        %v1053 = vpop.permute.xlu0 %1052
        %1054 = vrot.lane.b32.xlu0 %v937, 127
        %v1055 = vpop.permute.xlu0 %1054
        %1056 = vrot.lane.b32.xlu0 %v938, 127
        %v1057 = vpop.permute.xlu0 %1056
        %1058 = vrot.lane.b32.xlu0 %v939, 127
        %v1059 = vpop.permute.xlu0 %1058
        %1060 = vrot.lane.b32.xlu0 %v940, 127
        %v1061 = vpop.permute.xlu0 %1060
        %1062 = vrot.lane.b32.xlu0 %v941, 127
        %v1063 = vpop.permute.xlu0 %1062
        %1064 = vrot.lane.b32.xlu0 %v942, 127
        %v1065 = vpop.permute.xlu0 %1064
        %1066 = vrot.lane.b32.xlu0 %v943, 127
        %v1067 = vpop.permute.xlu0 %1066
        %1068 = vrot.lane.b32.xlu0 %v944, 127
        %v1069 = vpop.permute.xlu0 %1068
        %1070 = vrot.lane.b32.xlu0 %v945, 127
        %v1071 = vpop.permute.xlu0 %1070
        %1072 = vrot.lane.b32.xlu0 %v946, 127
        %v1073 = vpop.permute.xlu0 %1072
        %1074 = vrot.lane.b32.xlu0 %v947, 127
        %v1075 = vpop.permute.xlu0 %1074
        %1076 = vrot.lane.b32.xlu0 %v948, 127
        %v1077 = vpop.permute.xlu0 %1076
        %1078 = vrot.lane.b32.xlu0 %v949, 127
        %v1079 = vpop.permute.xlu0 %1078
        %1080 = vrot.lane.b32.xlu0 %v950, 127
        %v1081 = vpop.permute.xlu0 %1080
        %1082 = vrot.lane.b32.xlu0 %v951, 127
        %v1083 = vpop.permute.xlu0 %1082
        %1084 = vrot.lane.b32.xlu0 %v952, 127
        %v1085 = vpop.permute.xlu0 %1084
        %1086 = vrot.lane.b32.xlu0 %v953, 127
        %v1087 = vpop.permute.xlu0 %1086
        %1088 = vrot.lane.b32.xlu0 %v954, 127
        %v1089 = vpop.permute.xlu0 %1088
        %1090 = vrot.lane.b32.xlu0 %v955, 127
        %v1091 = vpop.permute.xlu0 %1090
        %1092 = vrot.lane.b32.xlu0 %v956, 127
        %v1093 = vpop.permute.xlu0 %1092
        %1094 = vrot.lane.b32.xlu0 %v957, 127
        %v1095 = vpop.permute.xlu0 %1094
        %1096 = vrot.lane.b32.xlu0 %v958, 127
        %v1097 = vpop.permute.xlu0 %1096
        %1098 = vrot.lane.b32.xlu0 %v959, 127
        %v1099 = vpop.permute.xlu0 %1098
        %1100 = vrot.lane.b32.xlu0 %v960, 127
        %v1101 = vpop.permute.xlu0 %1100
        %1102 = vrot.lane.b32.xlu0 %v961, 127
        %v1103 = vpop.permute.xlu0 %1102
        %1104 = vrot.lane.b32.xlu0 %v962, 127
        %v1105 = vpop.permute.xlu0 %1104
        %1106 = vrot.lane.b32.xlu0 %v963, 127
        %v1107 = vpop.permute.xlu0 %1106
        %vm1108 = vcmask 1039360
        %v1109 = vsel %vm1108, %v1013, %v1015
        %v1110 = vsel %vm1108, %v1015, %v1017
        %v1111 = vsel %vm1108, %v1019, %v1021
        %v1112 = vsel %vm1108, %v1021, %v1023
        %v1113 = vsel %vm1108, %v1025, %v1027
        %v1114 = vsel %vm1108, %v1027, %v1029
        %v1115 = vsel %vm1108, %v1031, %v1033
        %v1116 = vsel %vm1108, %v1033, %v1035
        %v1117 = vsel %vm1108, %v1037, %v1039
        %v1118 = vsel %vm1108, %v1039, %v1041
        %v1119 = vsel %vm1108, %v1043, %v1045
        %v1120 = vsel %vm1108, %v1045, %v1047
        %v1121 = vsel %vm1108, %v1049, %v1051
        %v1122 = vsel %vm1108, %v1051, %v1053
        %v1123 = vsel %vm1108, %v1055, %v1057
        %v1124 = vsel %vm1108, %v1057, %v1059
        %v1125 = vsel %vm1108, %v1061, %v1063
        %v1126 = vsel %vm1108, %v1063, %v1065
        %v1127 = vsel %vm1108, %v1067, %v1069
        %v1128 = vsel %vm1108, %v1069, %v1071
        %v1129 = vsel %vm1108, %v1073, %v1075
        %v1130 = vsel %vm1108, %v1075, %v1077
        %v1131 = vsel %vm1108, %v1079, %v1081
        %v1132 = vsel %vm1108, %v1081, %v1083
        %v1133 = vsel %vm1108, %v1085, %v1087
        %v1134 = vsel %vm1108, %v1087, %v1089
        %v1135 = vsel %vm1108, %v1091, %v1093
        %v1136 = vsel %vm1108, %v1093, %v1095
        %v1137 = vsel %vm1108, %v1097, %v1099
        %v1138 = vsel %vm1108, %v1099, %v1101
        %v1139 = vsel %vm1108, %v1103, %v1105
        %v1140 = vsel %vm1108, %v1105, %v1107
        %v1173 = vadd.f32 %v772, %v1109
        %v1174 = vadd.f32 %v773, %v1110
        %v1175 = vadd.f32 %v774, %v1111
        %v1176 = vadd.f32 %v775, %v1112
        %v1177 = vadd.f32 %v776, %v1113
        %v1178 = vadd.f32 %v777, %v1114
        %v1179 = vadd.f32 %v778, %v1115
        %v1180 = vadd.f32 %v779, %v1116
        %v1181 = vadd.f32 %v780, %v1117
        %v1182 = vadd.f32 %v781, %v1118
        %v1183 = vadd.f32 %v782, %v1119
        %v1184 = vadd.f32 %v783, %v1120
        %v1185 = vadd.f32 %v784, %v1121
        %v1186 = vadd.f32 %v785, %v1122
        %v1187 = vadd.f32 %v786, %v1123
        %v1188 = vadd.f32 %v787, %v1124
        %v1189 = vadd.f32 %v788, %v1125
        %v1190 = vadd.f32 %v789, %v1126
        %v1191 = vadd.f32 %v790, %v1127
        %v1192 = vadd.f32 %v791, %v1128
        %v1193 = vadd.f32 %v792, %v1129
        %v1194 = vadd.f32 %v793, %v1130
        %v1195 = vadd.f32 %v794, %v1131
        %v1196 = vadd.f32 %v795, %v1132
        %v1197 = vadd.f32 %v796, %v1133
        %v1198 = vadd.f32 %v797, %v1134
        %v1199 = vadd.f32 %v798, %v1135
        %v1200 = vadd.f32 %v799, %v1136
        %v1201 = vadd.f32 %v800, %v1137
        %v1202 = vadd.f32 %v801, %v1138
        %v1203 = vadd.f32 %v802, %v1139
        %v1204 = vadd.f32 %v803, %v1140
        %1205 = vset.pattern.permute.xlu0 2
        %1206 = vperm.xlu0 %1205, %v644
        %v1207 = vpop.permute.xlu0 %1206
        %1209 = vset.pattern.permute.xlu0 2
        %1210 = vperm.xlu0 %1209, %v645
        %v1211 = vpop.permute.xlu0 %1210
        %1213 = vset.pattern.permute.xlu0 2
        %1214 = vperm.xlu0 %1213, %v646
        %v1215 = vpop.permute.xlu0 %1214
        %1217 = vset.pattern.permute.xlu0 2
        %1218 = vperm.xlu0 %1217, %v647
        %v1219 = vpop.permute.xlu0 %1218
        %1221 = vset.pattern.permute.xlu0 2
        %1222 = vperm.xlu0 %1221, %v648
        %v1223 = vpop.permute.xlu0 %1222
        %1225 = vset.pattern.permute.xlu0 2
        %1226 = vperm.xlu0 %1225, %v649
        %v1227 = vpop.permute.xlu0 %1226
        %1229 = vset.pattern.permute.xlu0 2
        %1230 = vperm.xlu0 %1229, %v650
        %v1231 = vpop.permute.xlu0 %1230
        %1233 = vset.pattern.permute.xlu0 2
        %1234 = vperm.xlu0 %1233, %v651
        %v1235 = vpop.permute.xlu0 %1234
        %1237 = vset.pattern.permute.xlu0 2
        %1238 = vperm.xlu0 %1237, %v652
        %v1239 = vpop.permute.xlu0 %1238
        %1241 = vset.pattern.permute.xlu0 2
        %1242 = vperm.xlu0 %1241, %v653
        %v1243 = vpop.permute.xlu0 %1242
        %1245 = vset.pattern.permute.xlu0 2
        %1246 = vperm.xlu0 %1245, %v654
        %v1247 = vpop.permute.xlu0 %1246
        %1249 = vset.pattern.permute.xlu0 2
        %1250 = vperm.xlu0 %1249, %v655
        %v1251 = vpop.permute.xlu0 %1250
        %1253 = vset.pattern.permute.xlu0 2
        %1254 = vperm.xlu0 %1253, %v656
        %v1255 = vpop.permute.xlu0 %1254
        %1257 = vset.pattern.permute.xlu0 2
        %1258 = vperm.xlu0 %1257, %v657
        %v1259 = vpop.permute.xlu0 %1258
        %1261 = vset.pattern.permute.xlu0 2
        %1262 = vperm.xlu0 %1261, %v658
        %v1263 = vpop.permute.xlu0 %1262
        %1265 = vset.pattern.permute.xlu0 2
        %1266 = vperm.xlu0 %1265, %v659
        %v1267 = vpop.permute.xlu0 %1266
        %v1269 = vmul.f32 %v1207, %v805
        %v1270 = vmul.f32 %v1207, %v806
        %v1271 = vmul.f32 %v1211, %v808
        %v1272 = vmul.f32 %v1211, %v809
        %v1273 = vmul.f32 %v1215, %v811
        %v1274 = vmul.f32 %v1215, %v812
        %v1275 = vmul.f32 %v1219, %v814
        %v1276 = vmul.f32 %v1219, %v815
        %v1277 = vmul.f32 %v1223, %v817
        %v1278 = vmul.f32 %v1223, %v818
        %v1279 = vmul.f32 %v1227, %v820
        %v1280 = vmul.f32 %v1227, %v821
        %v1281 = vmul.f32 %v1231, %v823
        %v1282 = vmul.f32 %v1231, %v824
        %v1283 = vmul.f32 %v1235, %v826
        %v1284 = vmul.f32 %v1235, %v827
        %v1285 = vmul.f32 %v1239, %v829
        %v1286 = vmul.f32 %v1239, %v830
        %v1287 = vmul.f32 %v1243, %v832
        %v1288 = vmul.f32 %v1243, %v833
        %v1289 = vmul.f32 %v1247, %v835
        %v1290 = vmul.f32 %v1247, %v836
        %v1291 = vmul.f32 %v1251, %v838
        %v1292 = vmul.f32 %v1251, %v839
        %v1293 = vmul.f32 %v1255, %v841
        %v1294 = vmul.f32 %v1255, %v842
        %v1295 = vmul.f32 %v1259, %v844
        %v1296 = vmul.f32 %v1259, %v845
        %v1297 = vmul.f32 %v1263, %v847
        %v1298 = vmul.f32 %v1263, %v848
        %v1299 = vmul.f32 %v1267, %v850
        %v1300 = vmul.f32 %v1267, %v851
        %1333 = vrot.lane.b32.xlu0 %v1269, 126
        %v1334 = vpop.permute.xlu0 %1333
        %1335 = vrot.lane.b32.xlu0 %v1270, 126
        %v1336 = vpop.permute.xlu0 %1335
        %1337 = vrot.lane.b32.xlu0 %v1271, 126
        %v1338 = vpop.permute.xlu0 %1337
        %1339 = vrot.lane.b32.xlu0 %v1272, 126
        %v1340 = vpop.permute.xlu0 %1339
        %1341 = vrot.lane.b32.xlu0 %v1273, 126
        %v1342 = vpop.permute.xlu0 %1341
        %1343 = vrot.lane.b32.xlu0 %v1274, 126
        %v1344 = vpop.permute.xlu0 %1343
        %1345 = vrot.lane.b32.xlu0 %v1275, 126
        %v1346 = vpop.permute.xlu0 %1345
        %1347 = vrot.lane.b32.xlu0 %v1276, 126
        %v1348 = vpop.permute.xlu0 %1347
        %1349 = vrot.lane.b32.xlu0 %v1277, 126
        %v1350 = vpop.permute.xlu0 %1349
        %1351 = vrot.lane.b32.xlu0 %v1278, 126
        %v1352 = vpop.permute.xlu0 %1351
        %1353 = vrot.lane.b32.xlu0 %v1279, 126
        %v1354 = vpop.permute.xlu0 %1353
        %1355 = vrot.lane.b32.xlu0 %v1280, 126
        %v1356 = vpop.permute.xlu0 %1355
        %1357 = vrot.lane.b32.xlu0 %v1281, 126
        %v1358 = vpop.permute.xlu0 %1357
        %1359 = vrot.lane.b32.xlu0 %v1282, 126
        %v1360 = vpop.permute.xlu0 %1359
        %1361 = vrot.lane.b32.xlu0 %v1283, 126
        %v1362 = vpop.permute.xlu0 %1361
        %1363 = vrot.lane.b32.xlu0 %v1284, 126
        %v1364 = vpop.permute.xlu0 %1363
        %1365 = vrot.lane.b32.xlu0 %v1285, 126
        %v1366 = vpop.permute.xlu0 %1365
        %1367 = vrot.lane.b32.xlu0 %v1286, 126
        %v1368 = vpop.permute.xlu0 %1367
        %1369 = vrot.lane.b32.xlu0 %v1287, 126
        %v1370 = vpop.permute.xlu0 %1369
        %1371 = vrot.lane.b32.xlu0 %v1288, 126
        %v1372 = vpop.permute.xlu0 %1371
        %1373 = vrot.lane.b32.xlu0 %v1289, 126
        %v1374 = vpop.permute.xlu0 %1373
        %1375 = vrot.lane.b32.xlu0 %v1290, 126
        %v1376 = vpop.permute.xlu0 %1375
        %1377 = vrot.lane.b32.xlu0 %v1291, 126
        %v1378 = vpop.permute.xlu0 %1377
        %1379 = vrot.lane.b32.xlu0 %v1292, 126
        %v1380 = vpop.permute.xlu0 %1379
        %1381 = vrot.lane.b32.xlu0 %v1293, 126
        %v1382 = vpop.permute.xlu0 %1381
        %1383 = vrot.lane.b32.xlu0 %v1294, 126
        %v1384 = vpop.permute.xlu0 %1383
        %1385 = vrot.lane.b32.xlu0 %v1295, 126
        %v1386 = vpop.permute.xlu0 %1385
        %1387 = vrot.lane.b32.xlu0 %v1296, 126
        %v1388 = vpop.permute.xlu0 %1387
        %1389 = vrot.lane.b32.xlu0 %v1297, 126
        %v1390 = vpop.permute.xlu0 %1389
        %1391 = vrot.lane.b32.xlu0 %v1298, 126
        %v1392 = vpop.permute.xlu0 %1391
        %1393 = vrot.lane.b32.xlu0 %v1299, 126
        %v1394 = vpop.permute.xlu0 %1393
        %1395 = vrot.lane.b32.xlu0 %v1300, 126
        %v1396 = vpop.permute.xlu0 %1395
        %vm1397 = vcmask 1031168
        %v1398 = vsel %vm1397, %v1334, %v1336
        %v1399 = vsel %vm1397, %v1338, %v1340
        %v1400 = vsel %vm1397, %v1342, %v1344
        %v1401 = vsel %vm1397, %v1346, %v1348
        %v1402 = vsel %vm1397, %v1350, %v1352
        %v1403 = vsel %vm1397, %v1354, %v1356
        %v1404 = vsel %vm1397, %v1358, %v1360
        %v1405 = vsel %vm1397, %v1362, %v1364
        %v1406 = vsel %vm1397, %v1366, %v1368
        %v1407 = vsel %vm1397, %v1370, %v1372
        %v1408 = vsel %vm1397, %v1374, %v1376
        %v1409 = vsel %vm1397, %v1378, %v1380
        %v1410 = vsel %vm1397, %v1382, %v1384
        %v1411 = vsel %vm1397, %v1386, %v1388
        %v1412 = vsel %vm1397, %v1390, %v1392
        %v1413 = vsel %vm1397, %v1394, %v1396
        %v1446 = vadd.f32 %v1173, %v1334
        %v1447 = vadd.f32 %v1174, %v1398
        %v1448 = vadd.f32 %v1175, %v1338
        %v1449 = vadd.f32 %v1176, %v1399
        %v1450 = vadd.f32 %v1177, %v1342
        %v1451 = vadd.f32 %v1178, %v1400
        %v1452 = vadd.f32 %v1179, %v1346
        %v1453 = vadd.f32 %v1180, %v1401
        %v1454 = vadd.f32 %v1181, %v1350
        %v1455 = vadd.f32 %v1182, %v1402
        %v1456 = vadd.f32 %v1183, %v1354
        %v1457 = vadd.f32 %v1184, %v1403
        %v1458 = vadd.f32 %v1185, %v1358
        %v1459 = vadd.f32 %v1186, %v1404
        %v1460 = vadd.f32 %v1187, %v1362
        %v1461 = vadd.f32 %v1188, %v1405
        %v1462 = vadd.f32 %v1189, %v1366
        %v1463 = vadd.f32 %v1190, %v1406
        %v1464 = vadd.f32 %v1191, %v1370
        %v1465 = vadd.f32 %v1192, %v1407
        %v1466 = vadd.f32 %v1193, %v1374
        %v1467 = vadd.f32 %v1194, %v1408
        %v1468 = vadd.f32 %v1195, %v1378
        %v1469 = vadd.f32 %v1196, %v1409
        %v1470 = vadd.f32 %v1197, %v1382
        %v1471 = vadd.f32 %v1198, %v1410
        %v1472 = vadd.f32 %v1199, %v1386
        %v1473 = vadd.f32 %v1200, %v1411
        %v1474 = vadd.f32 %v1201, %v1390
        %v1475 = vadd.f32 %v1202, %v1412
        %v1476 = vadd.f32 %v1203, %v1394
        %v1477 = vadd.f32 %v1204, %v1413
        %v1478 = vld [vmem:[%s3] sm:$0xf]
        %v1479 = vld [vmem:[%s3 + $0x4] sm:$0xf]
        %v1480 = vld [vmem:[%s3 + $0x8] sm:$0xf]
        %v1481 = vld [vmem:[%s3 + $0xc] sm:$0xf]
        %v1482 = vld [vmem:[%s3 + $0x10] sm:$0xf]
        %v1483 = vld [vmem:[%s3 + $0x14] sm:$0xf]
        %v1484 = vld [vmem:[%s3 + $0x18] sm:$0xf]
        %v1485 = vld [vmem:[%s3 + $0x1c] sm:$0xf]
        %v1486 = vld [vmem:[%s3 + $0x20] sm:$0xf]
        %v1487 = vld [vmem:[%s3 + $0x24] sm:$0xf]
        %v1488 = vld [vmem:[%s3 + $0x28] sm:$0xf]
        %v1489 = vld [vmem:[%s3 + $0x2c] sm:$0xf]
        %v1490 = vld [vmem:[%s3 + $0x30] sm:$0xf]
        %v1491 = vld [vmem:[%s3 + $0x34] sm:$0xf]
        %v1492 = vld [vmem:[%s3 + $0x38] sm:$0xf]
        %v1493 = vld [vmem:[%s3 + $0x3c] sm:$0xf]
        %v1494 = vpack.c.bf16 %v1448, %v1446
        %v1495 = vpack.c.bf16 %v1449, %v1447
        %v1496 = vpack.c.bf16 %v1452, %v1450
        %v1497 = vpack.c.bf16 %v1453, %v1451
        %v1498 = vpack.c.bf16 %v1456, %v1454
        %v1499 = vpack.c.bf16 %v1457, %v1455
        %v1500 = vpack.c.bf16 %v1460, %v1458
        %v1501 = vpack.c.bf16 %v1461, %v1459
        %v1502 = vpack.c.bf16 %v1464, %v1462
        %v1503 = vpack.c.bf16 %v1465, %v1463
        %v1504 = vpack.c.bf16 %v1468, %v1466
        %v1505 = vpack.c.bf16 %v1469, %v1467
        %v1506 = vpack.c.bf16 %v1472, %v1470
        %v1507 = vpack.c.bf16 %v1473, %v1471
        %v1508 = vpack.c.bf16 %v1476, %v1474
        %v1509 = vpack.c.bf16 %v1477, %v1475
        %v1510 = vld [vmem:[%s4] sm:$0xff]
        %v1511 = vld [vmem:[%s4 + $0x8] sm:$0xff]
        %v1512 = vld [vmem:[%s4 + $0x10] sm:$0xff]
        %v1513 = vld [vmem:[%s4 + $0x18] sm:$0xff]
        %v1514 = vld [vmem:[%s4 + $0x20] sm:$0xff]
        %v1515 = vld [vmem:[%s4 + $0x28] sm:$0xff]
        %v1516 = vld [vmem:[%s4 + $0x30] sm:$0xff]
        %v1517 = vld [vmem:[%s4 + $0x38] sm:$0xff]
        %v1518 = vld [vmem:[%s4 + $0x40] sm:$0xff]
        %v1519 = vld [vmem:[%s4 + $0x48] sm:$0xff]
        %v1520 = vld [vmem:[%s4 + $0x50] sm:$0xff]
        %v1521 = vld [vmem:[%s4 + $0x58] sm:$0xff]
        %v1522 = vld [vmem:[%s4 + $0x60] sm:$0xff]
        %v1523 = vld [vmem:[%s4 + $0x68] sm:$0xff]
        %v1524 = vld [vmem:[%s4 + $0x70] sm:$0xff]
        %v1525 = vld [vmem:[%s4 + $0x78] sm:$0xff]
        %1527 = vset.pattern.permute.xlu0 0
        %1528 = vperm.xlu0 %1527, %v1510
        %v1529 = vpop.permute.xlu0 %1528
        %1532 = vset.pattern.permute.xlu0 0
        %1533 = vperm.xlu0 %1532, %v1511
        %v1534 = vpop.permute.xlu0 %1533
        %1537 = vset.pattern.permute.xlu0 0
        %1538 = vperm.xlu0 %1537, %v1512
        %v1539 = vpop.permute.xlu0 %1538
        %1542 = vset.pattern.permute.xlu0 0
        %1543 = vperm.xlu0 %1542, %v1513
        %v1544 = vpop.permute.xlu0 %1543
        %1547 = vset.pattern.permute.xlu0 0
        %1548 = vperm.xlu0 %1547, %v1514
        %v1549 = vpop.permute.xlu0 %1548
        %1552 = vset.pattern.permute.xlu0 0
        %1553 = vperm.xlu0 %1552, %v1515
        %v1554 = vpop.permute.xlu0 %1553
        %1557 = vset.pattern.permute.xlu0 0
        %1558 = vperm.xlu0 %1557, %v1516
        %v1559 = vpop.permute.xlu0 %1558
        %1562 = vset.pattern.permute.xlu0 0
        %1563 = vperm.xlu0 %1562, %v1517
        %v1564 = vpop.permute.xlu0 %1563
        %1567 = vset.pattern.permute.xlu0 0
        %1568 = vperm.xlu0 %1567, %v1518
        %v1569 = vpop.permute.xlu0 %1568
        %1572 = vset.pattern.permute.xlu0 0
        %1573 = vperm.xlu0 %1572, %v1519
        %v1574 = vpop.permute.xlu0 %1573
        %1577 = vset.pattern.permute.xlu0 0
        %1578 = vperm.xlu0 %1577, %v1520
        %v1579 = vpop.permute.xlu0 %1578
        %1582 = vset.pattern.permute.xlu0 0
        %1583 = vperm.xlu0 %1582, %v1521
        %v1584 = vpop.permute.xlu0 %1583
        %1587 = vset.pattern.permute.xlu0 0
        %1588 = vperm.xlu0 %1587, %v1522
        %v1589 = vpop.permute.xlu0 %1588
        %1592 = vset.pattern.permute.xlu0 0
        %1593 = vperm.xlu0 %1592, %v1523
        %v1594 = vpop.permute.xlu0 %1593
        %1597 = vset.pattern.permute.xlu0 0
        %1598 = vperm.xlu0 %1597, %v1524
        %v1599 = vpop.permute.xlu0 %1598
        %1602 = vset.pattern.permute.xlu0 0
        %1603 = vperm.xlu0 %1602, %v1525
        %v1604 = vpop.permute.xlu0 %1603
        %v1622 = vunpack.c.l.b16 %v1478
        %v1623 = vunpack.c.l.b16 %v1479
        %v1624 = vunpack.c.l.b16 %v1480
        %v1625 = vunpack.c.l.b16 %v1481
        %v1626 = vunpack.c.l.b16 %v1482
        %v1627 = vunpack.c.l.b16 %v1483
        %v1628 = vunpack.c.l.b16 %v1484
        %v1629 = vunpack.c.l.b16 %v1485
        %v1630 = vunpack.c.l.b16 %v1486
        %v1631 = vunpack.c.l.b16 %v1487
        %v1632 = vunpack.c.l.b16 %v1488
        %v1633 = vunpack.c.l.b16 %v1489
        %v1634 = vunpack.c.l.b16 %v1490
        %v1635 = vunpack.c.l.b16 %v1491
        %v1636 = vunpack.c.l.b16 %v1492
        %v1637 = vunpack.c.l.b16 %v1493
        %v1638 = vpack.c.b16 %v1623, %v1622
        %v1639 = vpack.c.b16 %v1625, %v1624
        %v1640 = vpack.c.b16 %v1627, %v1626
        %v1641 = vpack.c.b16 %v1629, %v1628
        %v1642 = vpack.c.b16 %v1631, %v1630
        %v1643 = vpack.c.b16 %v1633, %v1632
        %v1644 = vpack.c.b16 %v1635, %v1634
        %v1645 = vpack.c.b16 %v1637, %v1636
        %1670 = vrot.lane.b32.xlu0 %v1494, 2
        %v1671 = vpop.permute.xlu0 %1670
        %1672 = vrot.lane.b32.xlu0 %v1495, 2
        %v1673 = vpop.permute.xlu0 %1672
        %1674 = vrot.lane.b32.xlu0 %v1496, 2
        %v1675 = vpop.permute.xlu0 %1674
        %1676 = vrot.lane.b32.xlu0 %v1497, 2
        %v1677 = vpop.permute.xlu0 %1676
        %1678 = vrot.lane.b32.xlu0 %v1498, 2
        %v1679 = vpop.permute.xlu0 %1678
        %1680 = vrot.lane.b32.xlu0 %v1499, 2
        %v1681 = vpop.permute.xlu0 %1680
        %1682 = vrot.lane.b32.xlu0 %v1500, 2
        %v1683 = vpop.permute.xlu0 %1682
        %1684 = vrot.lane.b32.xlu0 %v1501, 2
        %v1685 = vpop.permute.xlu0 %1684
        %1686 = vrot.lane.b32.xlu0 %v1502, 2
        %v1687 = vpop.permute.xlu0 %1686
        %1688 = vrot.lane.b32.xlu0 %v1503, 2
        %v1689 = vpop.permute.xlu0 %1688
        %1690 = vrot.lane.b32.xlu0 %v1504, 2
        %v1691 = vpop.permute.xlu0 %1690
        %1692 = vrot.lane.b32.xlu0 %v1505, 2
        %v1693 = vpop.permute.xlu0 %1692
        %1694 = vrot.lane.b32.xlu0 %v1506, 2
        %v1695 = vpop.permute.xlu0 %1694
        %1696 = vrot.lane.b32.xlu0 %v1507, 2
        %v1697 = vpop.permute.xlu0 %1696
        %1698 = vrot.lane.b32.xlu0 %v1508, 2
        %v1699 = vpop.permute.xlu0 %1698
        %1700 = vrot.lane.b32.xlu0 %v1509, 2
        %v1701 = vpop.permute.xlu0 %1700
        %vm1702 = vcmask 15360
        %v1703 = vsel %vm1702, %v1671, %v1673
        %v1704 = vsel %vm1702, %v1675, %v1677
        %v1705 = vsel %vm1702, %v1679, %v1681
        %v1706 = vsel %vm1702, %v1683, %v1685
        %v1707 = vsel %vm1702, %v1687, %v1689
        %v1708 = vsel %vm1702, %v1691, %v1693
        %v1709 = vsel %vm1702, %v1695, %v1697
        %v1710 = vsel %vm1702, %v1699, %v1701
        %1727 = vmatpush.bf16.msra.mxu0 %v1710
        %1728 = vmatpush.bf16.msra.mxu0 %v1709
        %1729 = vmatpush.bf16.msra.mxu0 %v1708
        %1730 = vmatpush.bf16.msra.mxu0 %v1707
        %1731 = vmatpush.bf16.msra.mxu0 %v1706
        %1732 = vmatpush.bf16.msra.mxu0 %v1705
        %1733 = vmatpush.bf16.msra.mxu0 %v1704
        %1734 = vmatpush.bf16.msra.mxu0 %v1703
        %1735 = vmatmul.bf16.gmra.mxu0 %v1638
        %v1736 = vpop.f32.mrf.mxu0
        %v1737 = vadd.f32 %v1529, %v1736
        %v1738 = vpop.f32.mrf.mxu0
        %v1739 = vadd.f32 %v1534, %v1738
        %1740 = vmatmul.bf16.gmra.mxu0 %v1639
        %v1741 = vpop.f32.mrf.mxu0
        %v1742 = vadd.f32 %v1539, %v1741
        %v1743 = vpop.f32.mrf.mxu0
        %v1744 = vadd.f32 %v1544, %v1743
        %1745 = vmatmul.bf16.gmra.mxu0 %v1640
        %v1746 = vpop.f32.mrf.mxu0
        %v1747 = vadd.f32 %v1549, %v1746
        %v1748 = vpop.f32.mrf.mxu0
        %v1749 = vadd.f32 %v1554, %v1748
        %1750 = vmatmul.bf16.gmra.mxu0 %v1641
        %v1751 = vpop.f32.mrf.mxu0
        %v1752 = vadd.f32 %v1559, %v1751
        %v1753 = vpop.f32.mrf.mxu0
        %v1754 = vadd.f32 %v1564, %v1753
        %1755 = vmatmul.bf16.gmra.mxu0 %v1642
        %v1756 = vpop.f32.mrf.mxu0
        %v1757 = vadd.f32 %v1569, %v1756
        %v1758 = vpop.f32.mrf.mxu0
        %v1759 = vadd.f32 %v1574, %v1758
        %1760 = vmatmul.bf16.gmra.mxu0 %v1643
        %v1761 = vpop.f32.mrf.mxu0
        %v1762 = vadd.f32 %v1579, %v1761
        %v1763 = vpop.f32.mrf.mxu0
        %v1764 = vadd.f32 %v1584, %v1763
        %1765 = vmatmul.bf16.gmra.mxu0 %v1644
        %v1766 = vpop.f32.mrf.mxu0
        %v1767 = vadd.f32 %v1589, %v1766
        %v1768 = vpop.f32.mrf.mxu0
        %v1769 = vadd.f32 %v1594, %v1768
        %1770 = vmatmul.bf16.gmra.mxu0 %v1645
        %v1771 = vpop.f32.mrf.mxu0
        %v1772 = vadd.f32 %v1599, %v1771
        %v1773 = vpop.f32.mrf.mxu0
        %v1774 = vadd.f32 %v1604, %v1773
        %1775 = vdwg.mxu0
        %1776 = vmatpush.bf16.msra.mxu0 %v1701
        %1777 = vmatpush.bf16.msra.mxu0 %v1697
        %1778 = vmatpush.bf16.msra.mxu0 %v1693
        %1779 = vmatpush.bf16.msra.mxu0 %v1689
        %1780 = vmatpush.bf16.msra.mxu0 %v1685
        %1781 = vmatpush.bf16.msra.mxu0 %v1681
        %1782 = vmatpush.bf16.msra.mxu0 %v1677
        %1783 = vmatpush.bf16.msra.mxu0 %v1673
        %1784 = vmatmul.bf16.gmra.mxu0 %v1638
        %v1785 = vpop.f32.mrf.mxu0
        %v1786 = vadd.f32 %v1529, %v1785
        %v1787 = vpop.f32.mrf.mxu0
        %v1788 = vadd.f32 %v1534, %v1787
        %1789 = vmatmul.bf16.gmra.mxu0 %v1639
        %v1790 = vpop.f32.mrf.mxu0
        %v1791 = vadd.f32 %v1539, %v1790
        %v1792 = vpop.f32.mrf.mxu0
        %v1793 = vadd.f32 %v1544, %v1792
        %1794 = vmatmul.bf16.gmra.mxu0 %v1640
        %v1795 = vpop.f32.mrf.mxu0
        %v1796 = vadd.f32 %v1549, %v1795
        %v1797 = vpop.f32.mrf.mxu0
        %v1798 = vadd.f32 %v1554, %v1797
        %1799 = vmatmul.bf16.gmra.mxu0 %v1641
        %v1800 = vpop.f32.mrf.mxu0
        %v1801 = vadd.f32 %v1559, %v1800
        %v1802 = vpop.f32.mrf.mxu0
        %v1803 = vadd.f32 %v1564, %v1802
        %1804 = vmatmul.bf16.gmra.mxu0 %v1642
        %v1805 = vpop.f32.mrf.mxu0
        %v1806 = vadd.f32 %v1569, %v1805
        %v1807 = vpop.f32.mrf.mxu0
        %v1808 = vadd.f32 %v1574, %v1807
        %1809 = vmatmul.bf16.gmra.mxu0 %v1643
        %v1810 = vpop.f32.mrf.mxu0
        %v1811 = vadd.f32 %v1579, %v1810
        %v1812 = vpop.f32.mrf.mxu0
        %v1813 = vadd.f32 %v1584, %v1812
        %1814 = vmatmul.bf16.gmra.mxu0 %v1644
        %v1815 = vpop.f32.mrf.mxu0
        %v1816 = vadd.f32 %v1589, %v1815
        %v1817 = vpop.f32.mrf.mxu0
        %v1818 = vadd.f32 %v1594, %v1817
        %1819 = vmatmul.bf16.gmra.mxu0 %v1645
        %v1820 = vpop.f32.mrf.mxu0
        %v1821 = vadd.f32 %v1599, %v1820
        %v1822 = vpop.f32.mrf.mxu0
        %v1823 = vadd.f32 %v1604, %v1822
        %1824 = vdwg.mxu0
        %v1825 = vmax.f32 %v1737, 0.0
        %v1826 = vmax.f32 %v1786, 0.0
        %v1827 = vmax.f32 %v1739, 0.0
        %v1828 = vmax.f32 %v1788, 0.0
        %v1829 = vmax.f32 %v1742, 0.0
        %v1830 = vmax.f32 %v1791, 0.0
        %v1831 = vmax.f32 %v1744, 0.0
        %v1832 = vmax.f32 %v1793, 0.0
        %v1833 = vmax.f32 %v1747, 0.0
        %v1834 = vmax.f32 %v1796, 0.0
        %v1835 = vmax.f32 %v1749, 0.0
        %v1836 = vmax.f32 %v1798, 0.0
        %v1837 = vmax.f32 %v1752, 0.0
        %v1838 = vmax.f32 %v1801, 0.0
        %v1839 = vmax.f32 %v1754, 0.0
        %v1840 = vmax.f32 %v1803, 0.0
        %v1841 = vmax.f32 %v1757, 0.0
        %v1842 = vmax.f32 %v1806, 0.0
        %v1843 = vmax.f32 %v1759, 0.0
        %v1844 = vmax.f32 %v1808, 0.0
        %v1845 = vmax.f32 %v1762, 0.0
        %v1846 = vmax.f32 %v1811, 0.0
        %v1847 = vmax.f32 %v1764, 0.0
        %v1848 = vmax.f32 %v1813, 0.0
        %v1849 = vmax.f32 %v1767, 0.0
        %v1850 = vmax.f32 %v1816, 0.0
        %v1851 = vmax.f32 %v1769, 0.0
        %v1852 = vmax.f32 %v1818, 0.0
        %v1853 = vmax.f32 %v1772, 0.0
        %v1854 = vmax.f32 %v1821, 0.0
        %v1855 = vmax.f32 %v1774, 0.0
        %v1856 = vmax.f32 %v1823, 0.0
        %1857 = vst [vmem:[#allocation3] sm:$0xff] %v1825
        %1858 = vst.msk [vmem:[#allocation3 + $0x8] sm:$0xff] %vm627, %v1826
        %1859 = vst [vmem:[#allocation3 + $0x10] sm:$0xff] %v1827
        %1860 = vst.msk [vmem:[#allocation3 + $0x18] sm:$0xff] %vm627, %v1828
        %1861 = vst [vmem:[#allocation3 + $0x20] sm:$0xff] %v1829
        %1862 = vst.msk [vmem:[#allocation3 + $0x28] sm:$0xff] %vm627, %v1830
        %1863 = vst [vmem:[#allocation3 + $0x30] sm:$0xff] %v1831
        %1864 = vst.msk [vmem:[#allocation3 + $0x38] sm:$0xff] %vm627, %v1832
        %1865 = vst [vmem:[#allocation3 + $0x40] sm:$0xff] %v1833
        %1866 = vst.msk [vmem:[#allocation3 + $0x48] sm:$0xff] %vm627, %v1834
        %1867 = vst [vmem:[#allocation3 + $0x50] sm:$0xff] %v1835
        %1868 = vst.msk [vmem:[#allocation3 + $0x58] sm:$0xff] %vm627, %v1836
        %1869 = vst [vmem:[#allocation3 + $0x60] sm:$0xff] %v1837
        %1870 = vst.msk [vmem:[#allocation3 + $0x68] sm:$0xff] %vm627, %v1838
        %1871 = vst [vmem:[#allocation3 + $0x70] sm:$0xff] %v1839
        %1872 = vst.msk [vmem:[#allocation3 + $0x78] sm:$0xff] %vm627, %v1840
        %1873 = vst [vmem:[#allocation3 + $0x80] sm:$0xff] %v1841
        %1874 = vst.msk [vmem:[#allocation3 + $0x88] sm:$0xff] %vm627, %v1842
        %1875 = vst [vmem:[#allocation3 + $0x90] sm:$0xff] %v1843
        %1876 = vst.msk [vmem:[#allocation3 + $0x98] sm:$0xff] %vm627, %v1844
        %1877 = vst [vmem:[#allocation3 + $0xa0] sm:$0xff] %v1845
        %1878 = vst.msk [vmem:[#allocation3 + $0xa8] sm:$0xff] %vm627, %v1846
        %1879 = vst [vmem:[#allocation3 + $0xb0] sm:$0xff] %v1847
        %1880 = vst.msk [vmem:[#allocation3 + $0xb8] sm:$0xff] %vm627, %v1848
        %1881 = vst [vmem:[#allocation3 + $0xc0] sm:$0xff] %v1849
        %1882 = vst.msk [vmem:[#allocation3 + $0xc8] sm:$0xff] %vm627, %v1850
        %1883 = vst [vmem:[#allocation3 + $0xd0] sm:$0xff] %v1851
        %1884 = vst.msk [vmem:[#allocation3 + $0xd8] sm:$0xff] %vm627, %v1852
        %1885 = vst [vmem:[#allocation3 + $0xe0] sm:$0xff] %v1853
        %1886 = vst.msk [vmem:[#allocation3 + $0xe8] sm:$0xff] %vm627, %v1854
        %1887 = vst [vmem:[#allocation3 + $0xf0] sm:$0xff] %v1855
        %1888 = vst.msk [vmem:[#allocation3 + $0xf8] sm:$0xff] %vm627, %v1856
        %p1889 = scmp.eq.s32.totalorder %s29, 0
        %s1890 = sadd.s32 %s417, 129
        %p1891 = scmp.gt.s32.totalorder %s1890, 16
        %p1892 = por %p1889, %p1891
        // Predicated region
        $region61: #{tpu_custom_call.1} parent=59 // pred_check
          %p1893 = pneg %p1892
        $region62: #{tpu_custom_call.1} parent=59 // pred_check_branch
          %1895 = sbr.rel (%p1893) target = $region64
        $region63: #{tpu_custom_call.1} parent=59 // pred_region
          %s1896 = ssub.s32 %s417, 1
          %v1897 = vlaneseq
          %v1898 = vand.u32 %v1897, 127
          %v1899 = vadd.s32 %v1898, 128
          %v1900 = vstv %s1896
          %v1901 = vadd.s32 %v1900, %v1898
          %v1902 = vadd.s32 %v1900, %v1899
          %vm1903 = vcmp.ge.s32.totalorder %v1901, 0
          %vm1904 = vcmp.ge.s32.totalorder %v1902, 0
          %vm1905 = vcmp.lt.s32.totalorder %v1901, 16
          %vm1906 = vcmp.lt.s32.totalorder %v1902, 16
          %vm1907 = vmand %vm1903, %vm1905
          %vm1908 = vmand %vm1904, %vm1906
          %v1909 = vsel %vm1907, %v1825, 0.0
          %v1910 = vsel %vm1908, %v1826, 0.0
          %v1911 = vsel %vm1907, %v1827, 0.0
          %v1912 = vsel %vm1908, %v1828, 0.0
          %v1913 = vsel %vm1907, %v1829, 0.0
          %v1914 = vsel %vm1908, %v1830, 0.0
          %v1915 = vsel %vm1907, %v1831, 0.0
          %v1916 = vsel %vm1908, %v1832, 0.0
          %v1917 = vsel %vm1907, %v1833, 0.0
          %v1918 = vsel %vm1908, %v1834, 0.0
          %v1919 = vsel %vm1907, %v1835, 0.0
          %v1920 = vsel %vm1908, %v1836, 0.0
          %v1921 = vsel %vm1907, %v1837, 0.0
          %v1922 = vsel %vm1908, %v1838, 0.0
          %v1923 = vsel %vm1907, %v1839, 0.0
          %v1924 = vsel %vm1908, %v1840, 0.0
          %v1925 = vsel %vm1907, %v1841, 0.0
          %v1926 = vsel %vm1908, %v1842, 0.0
          %v1927 = vsel %vm1907, %v1843, 0.0
          %v1928 = vsel %vm1908, %v1844, 0.0
          %v1929 = vsel %vm1907, %v1845, 0.0
          %v1930 = vsel %vm1908, %v1846, 0.0
          %v1931 = vsel %vm1907, %v1847, 0.0
          %v1932 = vsel %vm1908, %v1848, 0.0
          %v1933 = vsel %vm1907, %v1849, 0.0
          %v1934 = vsel %vm1908, %v1850, 0.0
          %v1935 = vsel %vm1907, %v1851, 0.0
          %v1936 = vsel %vm1908, %v1852, 0.0
          %v1937 = vsel %vm1907, %v1853, 0.0
          %v1938 = vsel %vm1908, %v1854, 0.0
          %v1939 = vsel %vm1907, %v1855, 0.0
          %v1940 = vsel %vm1908, %v1856, 0.0
          %1941 = vst [vmem:[#allocation3] sm:$0xff] %v1909
          %1942 = vst.msk [vmem:[#allocation3 + $0x8] sm:$0xff] %vm627, %v1910
          %1943 = vst [vmem:[#allocation3 + $0x10] sm:$0xff] %v1911
          %1944 = vst.msk [vmem:[#allocation3 + $0x18] sm:$0xff] %vm627, %v1912
          %1945 = vst [vmem:[#allocation3 + $0x20] sm:$0xff] %v1913
          %1946 = vst.msk [vmem:[#allocation3 + $0x28] sm:$0xff] %vm627, %v1914
          %1947 = vst [vmem:[#allocation3 + $0x30] sm:$0xff] %v1915
          %1948 = vst.msk [vmem:[#allocation3 + $0x38] sm:$0xff] %vm627, %v1916
          %1949 = vst [vmem:[#allocation3 + $0x40] sm:$0xff] %v1917
          %1950 = vst.msk [vmem:[#allocation3 + $0x48] sm:$0xff] %vm627, %v1918
          %1951 = vst [vmem:[#allocation3 + $0x50] sm:$0xff] %v1919
          %1952 = vst.msk [vmem:[#allocation3 + $0x58] sm:$0xff] %vm627, %v1920
          %1953 = vst [vmem:[#allocation3 + $0x60] sm:$0xff] %v1921
          %1954 = vst.msk [vmem:[#allocation3 + $0x68] sm:$0xff] %vm627, %v1922
          %1955 = vst [vmem:[#allocation3 + $0x70] sm:$0xff] %v1923
          %1956 = vst.msk [vmem:[#allocation3 + $0x78] sm:$0xff] %vm627, %v1924
          %1957 = vst [vmem:[#allocation3 + $0x80] sm:$0xff] %v1925
          %1958 = vst.msk [vmem:[#allocation3 + $0x88] sm:$0xff] %vm627, %v1926
          %1959 = vst [vmem:[#allocation3 + $0x90] sm:$0xff] %v1927
          %1960 = vst.msk [vmem:[#allocation3 + $0x98] sm:$0xff] %vm627, %v1928
          %1961 = vst [vmem:[#allocation3 + $0xa0] sm:$0xff] %v1929
          %1962 = vst.msk [vmem:[#allocation3 + $0xa8] sm:$0xff] %vm627, %v1930
          %1963 = vst [vmem:[#allocation3 + $0xb0] sm:$0xff] %v1931
          %1964 = vst.msk [vmem:[#allocation3 + $0xb8] sm:$0xff] %vm627, %v1932
          %1965 = vst [vmem:[#allocation3 + $0xc0] sm:$0xff] %v1933
          %1966 = vst.msk [vmem:[#allocation3 + $0xc8] sm:$0xff] %vm627, %v1934
          %1967 = vst [vmem:[#allocation3 + $0xd0] sm:$0xff] %v1935
          %1968 = vst.msk [vmem:[#allocation3 + $0xd8] sm:$0xff] %vm627, %v1936
          %1969 = vst [vmem:[#allocation3 + $0xe0] sm:$0xff] %v1937
          %1970 = vst.msk [vmem:[#allocation3 + $0xe8] sm:$0xff] %vm627, %v1938
          %1971 = vst [vmem:[#allocation3 + $0xf0] sm:$0xff] %v1939
          %1972 = vst.msk [vmem:[#allocation3 + $0xf8] sm:$0xff] %vm627, %v1940
        $region64: #{tpu_custom_call.1} parent=59 // pred_fallthru
          _
        %v1973 = vld [vmem:[%s8] sm:$0xf]
        %v1974 = vld [vmem:[%s8 + $0x4] sm:$0xf]
        %v1975 = vld [vmem:[%s8 + $0x8] sm:$0xf]
        %v1976 = vld [vmem:[%s8 + $0xc] sm:$0xf]
        %v1977 = vld [vmem:[%s8 + $0x10] sm:$0xf]
        %v1978 = vld [vmem:[%s8 + $0x14] sm:$0xf]
        %v1979 = vld [vmem:[%s8 + $0x18] sm:$0xf]
        %v1980 = vld [vmem:[%s8 + $0x1c] sm:$0xf]
        %v1981 = vld [vmem:[%s8 + $0x20] sm:$0xf]
        %v1982 = vld [vmem:[%s8 + $0x24] sm:$0xf]
        %v1983 = vld [vmem:[%s8 + $0x28] sm:$0xf]
        %v1984 = vld [vmem:[%s8 + $0x2c] sm:$0xf]
        %v1985 = vld [vmem:[%s8 + $0x30] sm:$0xf]
        %v1986 = vld [vmem:[%s8 + $0x34] sm:$0xf]
        %v1987 = vld [vmem:[%s8 + $0x38] sm:$0xf]
        %v1988 = vld [vmem:[%s8 + $0x3c] sm:$0xf]
        %v1989 = vpack.c.bf16 %v419, %v418
        %v1990 = vpack.c.bf16 %v421, %v420
        %v1991 = vpack.c.bf16 %v423, %v422
        %v1992 = vpack.c.bf16 %v425, %v424
        %v1993 = vpack.c.bf16 %v427, %v426
        %v1994 = vpack.c.bf16 %v429, %v428
        %v1995 = vpack.c.bf16 %v431, %v430
        %v1996 = vpack.c.bf16 %v433, %v432
        %v1997 = vld [vmem:[%s9] sm:$0xff]
        %v1998 = vld [vmem:[%s9 + $0x8] sm:$0xff]
        %v1999 = vld [vmem:[%s9 + $0x10] sm:$0xff]
        %v2000 = vld [vmem:[%s9 + $0x18] sm:$0xff]
        %v2001 = vld [vmem:[%s9 + $0x20] sm:$0xff]
        %v2002 = vld [vmem:[%s9 + $0x28] sm:$0xff]
        %v2003 = vld [vmem:[%s9 + $0x30] sm:$0xff]
        %v2004 = vld [vmem:[%s9 + $0x38] sm:$0xff]
        %v2005 = vld [vmem:[%s9 + $0x40] sm:$0xff]
        %v2006 = vld [vmem:[%s9 + $0x48] sm:$0xff]
        %v2007 = vld [vmem:[%s9 + $0x50] sm:$0xff]
        %v2008 = vld [vmem:[%s9 + $0x58] sm:$0xff]
        %v2009 = vld [vmem:[%s9 + $0x60] sm:$0xff]
        %v2010 = vld [vmem:[%s9 + $0x68] sm:$0xff]
        %v2011 = vld [vmem:[%s9 + $0x70] sm:$0xff]
        %v2012 = vld [vmem:[%s9 + $0x78] sm:$0xff]
        %2014 = vset.pattern.permute.xlu0 0
        %2015 = vperm.xlu0 %2014, %v1997
        %v2016 = vpop.permute.xlu0 %2015
        %2019 = vset.pattern.permute.xlu0 0
        %2020 = vperm.xlu0 %2019, %v1998
        %v2021 = vpop.permute.xlu0 %2020
        %2024 = vset.pattern.permute.xlu0 0
        %2025 = vperm.xlu0 %2024, %v1999
        %v2026 = vpop.permute.xlu0 %2025
        %2029 = vset.pattern.permute.xlu0 0
        %2030 = vperm.xlu0 %2029, %v2000
        %v2031 = vpop.permute.xlu0 %2030
        %2034 = vset.pattern.permute.xlu0 0
        %2035 = vperm.xlu0 %2034, %v2001
        %v2036 = vpop.permute.xlu0 %2035
        %2039 = vset.pattern.permute.xlu0 0
        %2040 = vperm.xlu0 %2039, %v2002
        %v2041 = vpop.permute.xlu0 %2040
        %2044 = vset.pattern.permute.xlu0 0
        %2045 = vperm.xlu0 %2044, %v2003
        %v2046 = vpop.permute.xlu0 %2045
        %2049 = vset.pattern.permute.xlu0 0
        %2050 = vperm.xlu0 %2049, %v2004
        %v2051 = vpop.permute.xlu0 %2050
        %2054 = vset.pattern.permute.xlu0 0
        %2055 = vperm.xlu0 %2054, %v2005
        %v2056 = vpop.permute.xlu0 %2055
        %2059 = vset.pattern.permute.xlu0 0
        %2060 = vperm.xlu0 %2059, %v2006
        %v2061 = vpop.permute.xlu0 %2060
        %2064 = vset.pattern.permute.xlu0 0
        %2065 = vperm.xlu0 %2064, %v2007
        %v2066 = vpop.permute.xlu0 %2065
        %2069 = vset.pattern.permute.xlu0 0
        %2070 = vperm.xlu0 %2069, %v2008
        %v2071 = vpop.permute.xlu0 %2070
        %2074 = vset.pattern.permute.xlu0 0
        %2075 = vperm.xlu0 %2074, %v2009
        %v2076 = vpop.permute.xlu0 %2075
        %2079 = vset.pattern.permute.xlu0 0
        %2080 = vperm.xlu0 %2079, %v2010
        %v2081 = vpop.permute.xlu0 %2080
        %2084 = vset.pattern.permute.xlu0 0
        %2085 = vperm.xlu0 %2084, %v2011
        %v2086 = vpop.permute.xlu0 %2085
        %2089 = vset.pattern.permute.xlu0 0
        %2090 = vperm.xlu0 %2089, %v2012
        %v2091 = vpop.permute.xlu0 %2090
        %v2109 = vunpack.c.l.b16 %v1973
        %v2110 = vunpack.c.l.b16 %v1974
        %v2111 = vunpack.c.l.b16 %v1975
        %v2112 = vunpack.c.l.b16 %v1976
        %v2113 = vunpack.c.l.b16 %v1977
        %v2114 = vunpack.c.l.b16 %v1978
        %v2115 = vunpack.c.l.b16 %v1979
        %v2116 = vunpack.c.l.b16 %v1980
        %v2117 = vunpack.c.l.b16 %v1981
        %v2118 = vunpack.c.l.b16 %v1982
        %v2119 = vunpack.c.l.b16 %v1983
        %v2120 = vunpack.c.l.b16 %v1984
        %v2121 = vunpack.c.l.b16 %v1985
        %v2122 = vunpack.c.l.b16 %v1986
        %v2123 = vunpack.c.l.b16 %v1987
        %v2124 = vunpack.c.l.b16 %v1988
        %v2125 = vpack.c.b16 %v2110, %v2109
        %v2126 = vpack.c.b16 %v2112, %v2111
        %v2127 = vpack.c.b16 %v2114, %v2113
        %v2128 = vpack.c.b16 %v2116, %v2115
        %v2129 = vpack.c.b16 %v2118, %v2117
        %v2130 = vpack.c.b16 %v2120, %v2119
        %v2131 = vpack.c.b16 %v2122, %v2121
        %v2132 = vpack.c.b16 %v2124, %v2123
        %2141 = vmatpush.bf16.msra.mxu0 %v1996
        %2142 = vmatpush.bf16.msra.mxu0 %v1995
        %2143 = vmatpush.bf16.msra.mxu0 %v1994
        %2144 = vmatpush.bf16.msra.mxu0 %v1993
        %2145 = vmatpush.bf16.msra.mxu0 %v1992
        %2146 = vmatpush.bf16.msra.mxu0 %v1991
        %2147 = vmatpush.bf16.msra.mxu0 %v1990
        %2148 = vmatpush.bf16.msra.mxu0 %v1989
        %2149 = vmatmul.bf16.gmra.mxu0 %v2125
        %v2150 = vpop.f32.mrf.mxu0
        %v2151 = vadd.f32 %v2016, %v2150
        %v2152 = vpop.f32.mrf.mxu0
        %v2153 = vadd.f32 %v2021, %v2152
        %2154 = vmatmul.bf16.gmra.mxu0 %v2126
        %v2155 = vpop.f32.mrf.mxu0
        %v2156 = vadd.f32 %v2026, %v2155
        %v2157 = vpop.f32.mrf.mxu0
        %v2158 = vadd.f32 %v2031, %v2157
        %2159 = vmatmul.bf16.gmra.mxu0 %v2127
        %v2160 = vpop.f32.mrf.mxu0
        %v2161 = vadd.f32 %v2036, %v2160
        %v2162 = vpop.f32.mrf.mxu0
        %v2163 = vadd.f32 %v2041, %v2162
        %2164 = vmatmul.bf16.gmra.mxu0 %v2128
        %v2165 = vpop.f32.mrf.mxu0
        %v2166 = vadd.f32 %v2046, %v2165
        %v2167 = vpop.f32.mrf.mxu0
        %v2168 = vadd.f32 %v2051, %v2167
        %2169 = vmatmul.bf16.gmra.mxu0 %v2129
        %v2170 = vpop.f32.mrf.mxu0
        %v2171 = vadd.f32 %v2056, %v2170
        %v2172 = vpop.f32.mrf.mxu0
        %v2173 = vadd.f32 %v2061, %v2172
        %2174 = vmatmul.bf16.gmra.mxu0 %v2130
        %v2175 = vpop.f32.mrf.mxu0
        %v2176 = vadd.f32 %v2066, %v2175
        %v2177 = vpop.f32.mrf.mxu0
        %v2178 = vadd.f32 %v2071, %v2177
        %2179 = vmatmul.bf16.gmra.mxu0 %v2131
        %v2180 = vpop.f32.mrf.mxu0
        %v2181 = vadd.f32 %v2076, %v2180
        %v2182 = vpop.f32.mrf.mxu0
        %v2183 = vadd.f32 %v2081, %v2182
        %2184 = vmatmul.bf16.gmra.mxu0 %v2132
        %v2185 = vpop.f32.mrf.mxu0
        %v2186 = vadd.f32 %v2086, %v2185
        %v2187 = vpop.f32.mrf.mxu0
        %v2188 = vadd.f32 %v2091, %v2187
        %2189 = vdwg.mxu0
        %v2190 = vld [vmem:[%s5] sm:$0xff]
        %v2191 = vld [vmem:[%s5 + $0x8] sm:$0xff]
        %v2192 = vld [vmem:[%s5 + $0x10] sm:$0xff]
        %v2193 = vld [vmem:[%s5 + $0x18] sm:$0xff]
        %v2194 = vld [vmem:[%s5 + $0x20] sm:$0xff]
        %v2195 = vld [vmem:[%s5 + $0x28] sm:$0xff]
        %v2196 = vld [vmem:[%s5 + $0x30] sm:$0xff]
        %v2197 = vld [vmem:[%s5 + $0x38] sm:$0xff]
        %v2198 = vld [vmem:[%s5 + $0x40] sm:$0xff]
        %v2199 = vld [vmem:[%s5 + $0x48] sm:$0xff]
        %v2200 = vld [vmem:[%s5 + $0x50] sm:$0xff]
        %v2201 = vld [vmem:[%s5 + $0x58] sm:$0xff]
        %v2202 = vld [vmem:[%s5 + $0x60] sm:$0xff]
        %v2203 = vld [vmem:[%s5 + $0x68] sm:$0xff]
        %v2204 = vld [vmem:[%s5 + $0x70] sm:$0xff]
        %v2205 = vld [vmem:[%s5 + $0x78] sm:$0xff]
        %v2206 = vld [vmem:[#allocation3] sm:$0xff]
        %v2207 = vld [vmem:[#allocation3 + $0x10] sm:$0xff]
        %v2208 = vld [vmem:[#allocation3 + $0x20] sm:$0xff]
        %v2209 = vld [vmem:[#allocation3 + $0x30] sm:$0xff]
        %v2210 = vld [vmem:[#allocation3 + $0x40] sm:$0xff]
        %v2211 = vld [vmem:[#allocation3 + $0x50] sm:$0xff]
        %v2212 = vld [vmem:[#allocation3 + $0x60] sm:$0xff]
        %v2213 = vld [vmem:[#allocation3 + $0x70] sm:$0xff]
        %v2214 = vld [vmem:[#allocation3 + $0x80] sm:$0xff]
        %v2215 = vld [vmem:[#allocation3 + $0x90] sm:$0xff]
        %v2216 = vld [vmem:[#allocation3 + $0xa0] sm:$0xff]
        %v2217 = vld [vmem:[#allocation3 + $0xb0] sm:$0xff]
        %v2218 = vld [vmem:[#allocation3 + $0xc0] sm:$0xff]
        %v2219 = vld [vmem:[#allocation3 + $0xd0] sm:$0xff]
        %v2220 = vld [vmem:[#allocation3 + $0xe0] sm:$0xff]
        %v2221 = vld [vmem:[#allocation3 + $0xf0] sm:$0xff]
        %2223 = vset.pattern.permute.xlu0 0
        %2224 = vperm.xlu0 %2223, %v2190
        %v2225 = vpop.permute.xlu0 %2224
        %2228 = vset.pattern.permute.xlu0 0
        %2229 = vperm.xlu0 %2228, %v2191
        %v2230 = vpop.permute.xlu0 %2229
        %2233 = vset.pattern.permute.xlu0 0
        %2234 = vperm.xlu0 %2233, %v2192
        %v2235 = vpop.permute.xlu0 %2234
        %2238 = vset.pattern.permute.xlu0 0
        %2239 = vperm.xlu0 %2238, %v2193
        %v2240 = vpop.permute.xlu0 %2239
        %2243 = vset.pattern.permute.xlu0 0
        %2244 = vperm.xlu0 %2243, %v2194
        %v2245 = vpop.permute.xlu0 %2244
        %2248 = vset.pattern.permute.xlu0 0
        %2249 = vperm.xlu0 %2248, %v2195
        %v2250 = vpop.permute.xlu0 %2249
        %2253 = vset.pattern.permute.xlu0 0
        %2254 = vperm.xlu0 %2253, %v2196
        %v2255 = vpop.permute.xlu0 %2254
        %2258 = vset.pattern.permute.xlu0 0
        %2259 = vperm.xlu0 %2258, %v2197
        %v2260 = vpop.permute.xlu0 %2259
        %2263 = vset.pattern.permute.xlu0 0
        %2264 = vperm.xlu0 %2263, %v2198
        %v2265 = vpop.permute.xlu0 %2264
        %2268 = vset.pattern.permute.xlu0 0
        %2269 = vperm.xlu0 %2268, %v2199
        %v2270 = vpop.permute.xlu0 %2269
        %2273 = vset.pattern.permute.xlu0 0
        %2274 = vperm.xlu0 %2273, %v2200
        %v2275 = vpop.permute.xlu0 %2274
        %2278 = vset.pattern.permute.xlu0 0
        %2279 = vperm.xlu0 %2278, %v2201
        %v2280 = vpop.permute.xlu0 %2279
        %2283 = vset.pattern.permute.xlu0 0
        %2284 = vperm.xlu0 %2283, %v2202
        %v2285 = vpop.permute.xlu0 %2284
        %2288 = vset.pattern.permute.xlu0 0
        %2289 = vperm.xlu0 %2288, %v2203
        %v2290 = vpop.permute.xlu0 %2289
        %2293 = vset.pattern.permute.xlu0 0
        %2294 = vperm.xlu0 %2293, %v2204
        %v2295 = vpop.permute.xlu0 %2294
        %2298 = vset.pattern.permute.xlu0 0
        %2299 = vperm.xlu0 %2298, %v2205
        %v2300 = vpop.permute.xlu0 %2299
        %v2302 = vmul.f32 %v2225, %v2206
        %v2303 = vmul.f32 %v2230, %v2207
        %v2304 = vmul.f32 %v2235, %v2208
        %v2305 = vmul.f32 %v2240, %v2209
        %v2306 = vmul.f32 %v2245, %v2210
        %v2307 = vmul.f32 %v2250, %v2211
        %v2308 = vmul.f32 %v2255, %v2212
        %v2309 = vmul.f32 %v2260, %v2213
        %v2310 = vmul.f32 %v2265, %v2214
        %v2311 = vmul.f32 %v2270, %v2215
        %v2312 = vmul.f32 %v2275, %v2216
        %v2313 = vmul.f32 %v2280, %v2217
        %v2314 = vmul.f32 %v2285, %v2218
        %v2315 = vmul.f32 %v2290, %v2219
        %v2316 = vmul.f32 %v2295, %v2220
        %v2317 = vmul.f32 %v2300, %v2221
        %v2318 = vld [vmem:[#allocation3] sm:$0xff]
        %v2319 = vld [vmem:[#allocation3 + $0x8] sm:$0xff]
        %v2320 = vld [vmem:[#allocation3 + $0x10] sm:$0xff]
        %v2321 = vld [vmem:[#allocation3 + $0x18] sm:$0xff]
        %v2322 = vld [vmem:[#allocation3 + $0x20] sm:$0xff]
        %v2323 = vld [vmem:[#allocation3 + $0x28] sm:$0xff]
        %v2324 = vld [vmem:[#allocation3 + $0x30] sm:$0xff]
        %v2325 = vld [vmem:[#allocation3 + $0x38] sm:$0xff]
        %v2326 = vld [vmem:[#allocation3 + $0x40] sm:$0xff]
        %v2327 = vld [vmem:[#allocation3 + $0x48] sm:$0xff]
        %v2328 = vld [vmem:[#allocation3 + $0x50] sm:$0xff]
        %v2329 = vld [vmem:[#allocation3 + $0x58] sm:$0xff]
        %v2330 = vld [vmem:[#allocation3 + $0x60] sm:$0xff]
        %v2331 = vld [vmem:[#allocation3 + $0x68] sm:$0xff]
        %v2332 = vld [vmem:[#allocation3 + $0x70] sm:$0xff]
        %v2333 = vld [vmem:[#allocation3 + $0x78] sm:$0xff]
        %v2334 = vld [vmem:[#allocation3 + $0x80] sm:$0xff]
        %v2335 = vld [vmem:[#allocation3 + $0x88] sm:$0xff]
        %v2336 = vld [vmem:[#allocation3 + $0x90] sm:$0xff]
        %v2337 = vld [vmem:[#allocation3 + $0x98] sm:$0xff]
        %v2338 = vld [vmem:[#allocation3 + $0xa0] sm:$0xff]
        %v2339 = vld [vmem:[#allocation3 + $0xa8] sm:$0xff]
        %v2340 = vld [vmem:[#allocation3 + $0xb0] sm:$0xff]
        %v2341 = vld [vmem:[#allocation3 + $0xb8] sm:$0xff]
        %v2342 = vld [vmem:[#allocation3 + $0xc0] sm:$0xff]
        %v2343 = vld [vmem:[#allocation3 + $0xc8] sm:$0xff]
        %v2344 = vld [vmem:[#allocation3 + $0xd0] sm:$0xff]
        %v2345 = vld [vmem:[#allocation3 + $0xd8] sm:$0xff]
        %v2346 = vld [vmem:[#allocation3 + $0xe0] sm:$0xff]
        %v2347 = vld [vmem:[#allocation3 + $0xe8] sm:$0xff]
        %v2348 = vld [vmem:[#allocation3 + $0xf0] sm:$0xff]
        %v2349 = vld [vmem:[#allocation3 + $0xf8] sm:$0xff]
        %2350 = vset.pattern.permute.xlu0 1
        %2351 = vperm.xlu0 %2350, %v2190
        %v2352 = vpop.permute.xlu0 %2351
        %2354 = vset.pattern.permute.xlu0 1
        %2355 = vperm.xlu0 %2354, %v2191
        %v2356 = vpop.permute.xlu0 %2355
        %2358 = vset.pattern.permute.xlu0 1
        %2359 = vperm.xlu0 %2358, %v2192
        %v2360 = vpop.permute.xlu0 %2359
        %2362 = vset.pattern.permute.xlu0 1
        %2363 = vperm.xlu0 %2362, %v2193
        %v2364 = vpop.permute.xlu0 %2363
        %2366 = vset.pattern.permute.xlu0 1
        %2367 = vperm.xlu0 %2366, %v2194
        %v2368 = vpop.permute.xlu0 %2367
        %2370 = vset.pattern.permute.xlu0 1
        %2371 = vperm.xlu0 %2370, %v2195
        %v2372 = vpop.permute.xlu0 %2371
        %2374 = vset.pattern.permute.xlu0 1
        %2375 = vperm.xlu0 %2374, %v2196
        %v2376 = vpop.permute.xlu0 %2375
        %2378 = vset.pattern.permute.xlu0 1
        %2379 = vperm.xlu0 %2378, %v2197
        %v2380 = vpop.permute.xlu0 %2379
        %2382 = vset.pattern.permute.xlu0 1
        %2383 = vperm.xlu0 %2382, %v2198
        %v2384 = vpop.permute.xlu0 %2383
        %2386 = vset.pattern.permute.xlu0 1
        %2387 = vperm.xlu0 %2386, %v2199
        %v2388 = vpop.permute.xlu0 %2387
        %2390 = vset.pattern.permute.xlu0 1
        %2391 = vperm.xlu0 %2390, %v2200
        %v2392 = vpop.permute.xlu0 %2391
        %2394 = vset.pattern.permute.xlu0 1
        %2395 = vperm.xlu0 %2394, %v2201
        %v2396 = vpop.permute.xlu0 %2395
        %2398 = vset.pattern.permute.xlu0 1
        %2399 = vperm.xlu0 %2398, %v2202
        %v2400 = vpop.permute.xlu0 %2399
        %2402 = vset.pattern.permute.xlu0 1
        %2403 = vperm.xlu0 %2402, %v2203
        %v2404 = vpop.permute.xlu0 %2403
        %2406 = vset.pattern.permute.xlu0 1
        %2407 = vperm.xlu0 %2406, %v2204
        %v2408 = vpop.permute.xlu0 %2407
        %2410 = vset.pattern.permute.xlu0 1
        %2411 = vperm.xlu0 %2410, %v2205
        %v2412 = vpop.permute.xlu0 %2411
        %v2414 = vmul.f32 %v2352, %v2318
        %v2415 = vmul.f32 %v2352, %v2319
        %v2416 = vmul.f32 %v2356, %v2320
        %v2417 = vmul.f32 %v2356, %v2321
        %v2418 = vmul.f32 %v2360, %v2322
        %v2419 = vmul.f32 %v2360, %v2323
        %v2420 = vmul.f32 %v2364, %v2324
        %v2421 = vmul.f32 %v2364, %v2325
        %v2422 = vmul.f32 %v2368, %v2326
        %v2423 = vmul.f32 %v2368, %v2327
        %v2424 = vmul.f32 %v2372, %v2328
        %v2425 = vmul.f32 %v2372, %v2329
        %v2426 = vmul.f32 %v2376, %v2330
        %v2427 = vmul.f32 %v2376, %v2331
        %v2428 = vmul.f32 %v2380, %v2332
        %v2429 = vmul.f32 %v2380, %v2333
        %v2430 = vmul.f32 %v2384, %v2334
        %v2431 = vmul.f32 %v2384, %v2335
        %v2432 = vmul.f32 %v2388, %v2336
        %v2433 = vmul.f32 %v2388, %v2337
        %v2434 = vmul.f32 %v2392, %v2338
        %v2435 = vmul.f32 %v2392, %v2339
        %v2436 = vmul.f32 %v2396, %v2340
        %v2437 = vmul.f32 %v2396, %v2341
        %v2438 = vmul.f32 %v2400, %v2342
        %v2439 = vmul.f32 %v2400, %v2343
        %v2440 = vmul.f32 %v2404, %v2344
        %v2441 = vmul.f32 %v2404, %v2345
        %v2442 = vmul.f32 %v2408, %v2346
        %v2443 = vmul.f32 %v2408, %v2347
        %v2444 = vmul.f32 %v2412, %v2348
        %v2445 = vmul.f32 %v2412, %v2349
        %2478 = vrot.lane.b32.xlu0 %v2414, 127
        %v2479 = vpop.permute.xlu0 %2478
        %2480 = vrot.lane.b32.xlu0 %v2415, 127
        %v2481 = vpop.permute.xlu0 %2480
        %2482 = vrot.lane.b32.xlu0 %v2416, 127
        %v2483 = vpop.permute.xlu0 %2482
        %2484 = vrot.lane.b32.xlu0 %v2417, 127
        %v2485 = vpop.permute.xlu0 %2484
        %2486 = vrot.lane.b32.xlu0 %v2418, 127
        %v2487 = vpop.permute.xlu0 %2486
        %2488 = vrot.lane.b32.xlu0 %v2419, 127
        %v2489 = vpop.permute.xlu0 %2488
        %2490 = vrot.lane.b32.xlu0 %v2420, 127
        %v2491 = vpop.permute.xlu0 %2490
        %2492 = vrot.lane.b32.xlu0 %v2421, 127
        %v2493 = vpop.permute.xlu0 %2492
        %2494 = vrot.lane.b32.xlu0 %v2422, 127
        %v2495 = vpop.permute.xlu0 %2494
        %2496 = vrot.lane.b32.xlu0 %v2423, 127
        %v2497 = vpop.permute.xlu0 %2496
        %2498 = vrot.lane.b32.xlu0 %v2424, 127
        %v2499 = vpop.permute.xlu0 %2498
        %2500 = vrot.lane.b32.xlu0 %v2425, 127
        %v2501 = vpop.permute.xlu0 %2500
        %2502 = vrot.lane.b32.xlu0 %v2426, 127
        %v2503 = vpop.permute.xlu0 %2502
        %2504 = vrot.lane.b32.xlu0 %v2427, 127
        %v2505 = vpop.permute.xlu0 %2504
        %2506 = vrot.lane.b32.xlu0 %v2428, 127
        %v2507 = vpop.permute.xlu0 %2506
        %2508 = vrot.lane.b32.xlu0 %v2429, 127
        %v2509 = vpop.permute.xlu0 %2508
        %2510 = vrot.lane.b32.xlu0 %v2430, 127
        %v2511 = vpop.permute.xlu0 %2510
        %2512 = vrot.lane.b32.xlu0 %v2431, 127
        %v2513 = vpop.permute.xlu0 %2512
        %2514 = vrot.lane.b32.xlu0 %v2432, 127
        %v2515 = vpop.permute.xlu0 %2514
        %2516 = vrot.lane.b32.xlu0 %v2433, 127
        %v2517 = vpop.permute.xlu0 %2516
        %2518 = vrot.lane.b32.xlu0 %v2434, 127
        %v2519 = vpop.permute.xlu0 %2518
        %2520 = vrot.lane.b32.xlu0 %v2435, 127
        %v2521 = vpop.permute.xlu0 %2520
        %2522 = vrot.lane.b32.xlu0 %v2436, 127
        %v2523 = vpop.permute.xlu0 %2522
        %2524 = vrot.lane.b32.xlu0 %v2437, 127
        %v2525 = vpop.permute.xlu0 %2524
        %2526 = vrot.lane.b32.xlu0 %v2438, 127
        %v2527 = vpop.permute.xlu0 %2526
        %2528 = vrot.lane.b32.xlu0 %v2439, 127
        %v2529 = vpop.permute.xlu0 %2528
        %2530 = vrot.lane.b32.xlu0 %v2440, 127
        %v2531 = vpop.permute.xlu0 %2530
        %2532 = vrot.lane.b32.xlu0 %v2441, 127
        %v2533 = vpop.permute.xlu0 %2532
        %2534 = vrot.lane.b32.xlu0 %v2442, 127
        %v2535 = vpop.permute.xlu0 %2534
        %2536 = vrot.lane.b32.xlu0 %v2443, 127
        %v2537 = vpop.permute.xlu0 %2536
        %2538 = vrot.lane.b32.xlu0 %v2444, 127
        %v2539 = vpop.permute.xlu0 %2538
        %2540 = vrot.lane.b32.xlu0 %v2445, 127
        %v2541 = vpop.permute.xlu0 %2540
        %v2542 = vsel %vm1108, %v2479, %v2481
        %v2543 = vsel %vm1108, %v2483, %v2485
        %v2544 = vsel %vm1108, %v2487, %v2489
        %v2545 = vsel %vm1108, %v2491, %v2493
        %v2546 = vsel %vm1108, %v2495, %v2497
        %v2547 = vsel %vm1108, %v2499, %v2501
        %v2548 = vsel %vm1108, %v2503, %v2505
        %v2549 = vsel %vm1108, %v2507, %v2509
        %v2550 = vsel %vm1108, %v2511, %v2513
        %v2551 = vsel %vm1108, %v2515, %v2517
        %v2552 = vsel %vm1108, %v2519, %v2521
        %v2553 = vsel %vm1108, %v2523, %v2525
        %v2554 = vsel %vm1108, %v2527, %v2529
        %v2555 = vsel %vm1108, %v2531, %v2533
        %v2556 = vsel %vm1108, %v2535, %v2537
        %v2557 = vsel %vm1108, %v2539, %v2541
        %v2574 = vadd.f32 %v2302, %v2542
        %v2575 = vadd.f32 %v2303, %v2543
        %v2576 = vadd.f32 %v2304, %v2544
        %v2577 = vadd.f32 %v2305, %v2545
        %v2578 = vadd.f32 %v2306, %v2546
        %v2579 = vadd.f32 %v2307, %v2547
        %v2580 = vadd.f32 %v2308, %v2548
        %v2581 = vadd.f32 %v2309, %v2549
        %v2582 = vadd.f32 %v2310, %v2550
        %v2583 = vadd.f32 %v2311, %v2551
        %v2584 = vadd.f32 %v2312, %v2552
        %v2585 = vadd.f32 %v2313, %v2553
        %v2586 = vadd.f32 %v2314, %v2554
        %v2587 = vadd.f32 %v2315, %v2555
        %v2588 = vadd.f32 %v2316, %v2556
        %v2589 = vadd.f32 %v2317, %v2557
        %2590 = vset.pattern.permute.xlu0 2
        %2591 = vperm.xlu0 %2590, %v2190
        %v2592 = vpop.permute.xlu0 %2591
        %2594 = vset.pattern.permute.xlu0 2
        %2595 = vperm.xlu0 %2594, %v2191
        %v2596 = vpop.permute.xlu0 %2595
        %2598 = vset.pattern.permute.xlu0 2
        %2599 = vperm.xlu0 %2598, %v2192
        %v2600 = vpop.permute.xlu0 %2599
        %2602 = vset.pattern.permute.xlu0 2
        %2603 = vperm.xlu0 %2602, %v2193
        %v2604 = vpop.permute.xlu0 %2603
        %2606 = vset.pattern.permute.xlu0 2
        %2607 = vperm.xlu0 %2606, %v2194
        %v2608 = vpop.permute.xlu0 %2607
        %2610 = vset.pattern.permute.xlu0 2
        %2611 = vperm.xlu0 %2610, %v2195
        %v2612 = vpop.permute.xlu0 %2611
        %2614 = vset.pattern.permute.xlu0 2
        %2615 = vperm.xlu0 %2614, %v2196
        %v2616 = vpop.permute.xlu0 %2615
        %2618 = vset.pattern.permute.xlu0 2
        %2619 = vperm.xlu0 %2618, %v2197
        %v2620 = vpop.permute.xlu0 %2619
        %2622 = vset.pattern.permute.xlu0 2
        %2623 = vperm.xlu0 %2622, %v2198
        %v2624 = vpop.permute.xlu0 %2623
        %2626 = vset.pattern.permute.xlu0 2
        %2627 = vperm.xlu0 %2626, %v2199
        %v2628 = vpop.permute.xlu0 %2627
        %2630 = vset.pattern.permute.xlu0 2
        %2631 = vperm.xlu0 %2630, %v2200
        %v2632 = vpop.permute.xlu0 %2631
        %2634 = vset.pattern.permute.xlu0 2
        %2635 = vperm.xlu0 %2634, %v2201
        %v2636 = vpop.permute.xlu0 %2635
        %2638 = vset.pattern.permute.xlu0 2
        %2639 = vperm.xlu0 %2638, %v2202
        %v2640 = vpop.permute.xlu0 %2639
        %2642 = vset.pattern.permute.xlu0 2
        %2643 = vperm.xlu0 %2642, %v2203
        %v2644 = vpop.permute.xlu0 %2643
        %2646 = vset.pattern.permute.xlu0 2
        %2647 = vperm.xlu0 %2646, %v2204
        %v2648 = vpop.permute.xlu0 %2647
        %2650 = vset.pattern.permute.xlu0 2
        %2651 = vperm.xlu0 %2650, %v2205
        %v2652 = vpop.permute.xlu0 %2651
        %v2654 = vmul.f32 %v2592, %v2318
        %v2655 = vmul.f32 %v2592, %v2319
        %v2656 = vmul.f32 %v2596, %v2320
        %v2657 = vmul.f32 %v2596, %v2321
        %v2658 = vmul.f32 %v2600, %v2322
        %v2659 = vmul.f32 %v2600, %v2323
        %v2660 = vmul.f32 %v2604, %v2324
        %v2661 = vmul.f32 %v2604, %v2325
        %v2662 = vmul.f32 %v2608, %v2326
        %v2663 = vmul.f32 %v2608, %v2327
        %v2664 = vmul.f32 %v2612, %v2328
        %v2665 = vmul.f32 %v2612, %v2329
        %v2666 = vmul.f32 %v2616, %v2330
        %v2667 = vmul.f32 %v2616, %v2331
        %v2668 = vmul.f32 %v2620, %v2332
        %v2669 = vmul.f32 %v2620, %v2333
        %v2670 = vmul.f32 %v2624, %v2334
        %v2671 = vmul.f32 %v2624, %v2335
        %v2672 = vmul.f32 %v2628, %v2336
        %v2673 = vmul.f32 %v2628, %v2337
        %v2674 = vmul.f32 %v2632, %v2338
        %v2675 = vmul.f32 %v2632, %v2339
        %v2676 = vmul.f32 %v2636, %v2340
        %v2677 = vmul.f32 %v2636, %v2341
        %v2678 = vmul.f32 %v2640, %v2342
        %v2679 = vmul.f32 %v2640, %v2343
        %v2680 = vmul.f32 %v2644, %v2344
        %v2681 = vmul.f32 %v2644, %v2345
        %v2682 = vmul.f32 %v2648, %v2346
        %v2683 = vmul.f32 %v2648, %v2347
        %v2684 = vmul.f32 %v2652, %v2348
        %v2685 = vmul.f32 %v2652, %v2349
        %2718 = vrot.lane.b32.xlu0 %v2654, 126
        %v2719 = vpop.permute.xlu0 %2718
        %2720 = vrot.lane.b32.xlu0 %v2655, 126
        %v2721 = vpop.permute.xlu0 %2720
        %2722 = vrot.lane.b32.xlu0 %v2656, 126
        %v2723 = vpop.permute.xlu0 %2722
        %2724 = vrot.lane.b32.xlu0 %v2657, 126
        %v2725 = vpop.permute.xlu0 %2724
        %2726 = vrot.lane.b32.xlu0 %v2658, 126
        %v2727 = vpop.permute.xlu0 %2726
        %2728 = vrot.lane.b32.xlu0 %v2659, 126
        %v2729 = vpop.permute.xlu0 %2728
        %2730 = vrot.lane.b32.xlu0 %v2660, 126
        %v2731 = vpop.permute.xlu0 %2730
        %2732 = vrot.lane.b32.xlu0 %v2661, 126
        %v2733 = vpop.permute.xlu0 %2732
        %2734 = vrot.lane.b32.xlu0 %v2662, 126
        %v2735 = vpop.permute.xlu0 %2734
        %2736 = vrot.lane.b32.xlu0 %v2663, 126
        %v2737 = vpop.permute.xlu0 %2736
        %2738 = vrot.lane.b32.xlu0 %v2664, 126
        %v2739 = vpop.permute.xlu0 %2738
        %2740 = vrot.lane.b32.xlu0 %v2665, 126
        %v2741 = vpop.permute.xlu0 %2740
        %2742 = vrot.lane.b32.xlu0 %v2666, 126
        %v2743 = vpop.permute.xlu0 %2742
        %2744 = vrot.lane.b32.xlu0 %v2667, 126
        %v2745 = vpop.permute.xlu0 %2744
        %2746 = vrot.lane.b32.xlu0 %v2668, 126
        %v2747 = vpop.permute.xlu0 %2746
        %2748 = vrot.lane.b32.xlu0 %v2669, 126
        %v2749 = vpop.permute.xlu0 %2748
        %2750 = vrot.lane.b32.xlu0 %v2670, 126
        %v2751 = vpop.permute.xlu0 %2750
        %2752 = vrot.lane.b32.xlu0 %v2671, 126
        %v2753 = vpop.permute.xlu0 %2752
        %2754 = vrot.lane.b32.xlu0 %v2672, 126
        %v2755 = vpop.permute.xlu0 %2754
        %2756 = vrot.lane.b32.xlu0 %v2673, 126
        %v2757 = vpop.permute.xlu0 %2756
        %2758 = vrot.lane.b32.xlu0 %v2674, 126
        %v2759 = vpop.permute.xlu0 %2758
        %2760 = vrot.lane.b32.xlu0 %v2675, 126
        %v2761 = vpop.permute.xlu0 %2760
        %2762 = vrot.lane.b32.xlu0 %v2676, 126
        %v2763 = vpop.permute.xlu0 %2762
        %2764 = vrot.lane.b32.xlu0 %v2677, 126
        %v2765 = vpop.permute.xlu0 %2764
        %2766 = vrot.lane.b32.xlu0 %v2678, 126
        %v2767 = vpop.permute.xlu0 %2766
        %2768 = vrot.lane.b32.xlu0 %v2679, 126
        %v2769 = vpop.permute.xlu0 %2768
        %2770 = vrot.lane.b32.xlu0 %v2680, 126
        %v2771 = vpop.permute.xlu0 %2770
        %2772 = vrot.lane.b32.xlu0 %v2681, 126
        %v2773 = vpop.permute.xlu0 %2772
        %2774 = vrot.lane.b32.xlu0 %v2682, 126
        %v2775 = vpop.permute.xlu0 %2774
        %2776 = vrot.lane.b32.xlu0 %v2683, 126
        %v2777 = vpop.permute.xlu0 %2776
        %2778 = vrot.lane.b32.xlu0 %v2684, 126
        %v2779 = vpop.permute.xlu0 %2778
        %2780 = vrot.lane.b32.xlu0 %v2685, 126
        %v2781 = vpop.permute.xlu0 %2780
        %v2782 = vsel %vm1397, %v2719, %v2721
        %v2783 = vsel %vm1397, %v2723, %v2725
        %v2784 = vsel %vm1397, %v2727, %v2729
        %v2785 = vsel %vm1397, %v2731, %v2733
        %v2786 = vsel %vm1397, %v2735, %v2737
        %v2787 = vsel %vm1397, %v2739, %v2741
        %v2788 = vsel %vm1397, %v2743, %v2745
        %v2789 = vsel %vm1397, %v2747, %v2749
        %v2790 = vsel %vm1397, %v2751, %v2753
        %v2791 = vsel %vm1397, %v2755, %v2757
        %v2792 = vsel %vm1397, %v2759, %v2761
        %v2793 = vsel %vm1397, %v2763, %v2765
        %v2794 = vsel %vm1397, %v2767, %v2769
        %v2795 = vsel %vm1397, %v2771, %v2773
        %v2796 = vsel %vm1397, %v2775, %v2777
        %v2797 = vsel %vm1397, %v2779, %v2781
        %v2814 = vadd.f32 %v2574, %v2782
        %v2815 = vadd.f32 %v2575, %v2783
        %v2816 = vadd.f32 %v2576, %v2784
        %v2817 = vadd.f32 %v2577, %v2785
        %v2818 = vadd.f32 %v2578, %v2786
        %v2819 = vadd.f32 %v2579, %v2787
        %v2820 = vadd.f32 %v2580, %v2788
        %v2821 = vadd.f32 %v2581, %v2789
        %v2822 = vadd.f32 %v2582, %v2790
        %v2823 = vadd.f32 %v2583, %v2791
        %v2824 = vadd.f32 %v2584, %v2792
        %v2825 = vadd.f32 %v2585, %v2793
        %v2826 = vadd.f32 %v2586, %v2794
        %v2827 = vadd.f32 %v2587, %v2795
        %v2828 = vadd.f32 %v2588, %v2796
        %v2829 = vadd.f32 %v2589, %v2797
        %v2830 = vld [vmem:[%s6] sm:$0xf]
        %v2831 = vld [vmem:[%s6 + $0x4] sm:$0xf]
        %v2832 = vld [vmem:[%s6 + $0x8] sm:$0xf]
        %v2833 = vld [vmem:[%s6 + $0xc] sm:$0xf]
        %v2834 = vld [vmem:[%s6 + $0x10] sm:$0xf]
        %v2835 = vld [vmem:[%s6 + $0x14] sm:$0xf]
        %v2836 = vld [vmem:[%s6 + $0x18] sm:$0xf]
        %v2837 = vld [vmem:[%s6 + $0x1c] sm:$0xf]
        %v2838 = vld [vmem:[%s6 + $0x20] sm:$0xf]
        %v2839 = vld [vmem:[%s6 + $0x24] sm:$0xf]
        %v2840 = vld [vmem:[%s6 + $0x28] sm:$0xf]
        %v2841 = vld [vmem:[%s6 + $0x2c] sm:$0xf]
        %v2842 = vld [vmem:[%s6 + $0x30] sm:$0xf]
        %v2843 = vld [vmem:[%s6 + $0x34] sm:$0xf]
        %v2844 = vld [vmem:[%s6 + $0x38] sm:$0xf]
        %v2845 = vld [vmem:[%s6 + $0x3c] sm:$0xf]
        %v2846 = vpack.c.bf16 %v2815, %v2814
        %v2847 = vpack.c.bf16 %v2817, %v2816
        %v2848 = vpack.c.bf16 %v2819, %v2818
        %v2849 = vpack.c.bf16 %v2821, %v2820
        %v2850 = vpack.c.bf16 %v2823, %v2822
        %v2851 = vpack.c.bf16 %v2825, %v2824
        %v2852 = vpack.c.bf16 %v2827, %v2826
        %v2853 = vpack.c.bf16 %v2829, %v2828
        %v2854 = vld [vmem:[%s7] sm:$0xff]
        %v2855 = vld [vmem:[%s7 + $0x8] sm:$0xff]
        %v2856 = vld [vmem:[%s7 + $0x10] sm:$0xff]
        %v2857 = vld [vmem:[%s7 + $0x18] sm:$0xff]
        %v2858 = vld [vmem:[%s7 + $0x20] sm:$0xff]
        %v2859 = vld [vmem:[%s7 + $0x28] sm:$0xff]
        %v2860 = vld [vmem:[%s7 + $0x30] sm:$0xff]
        %v2861 = vld [vmem:[%s7 + $0x38] sm:$0xff]
        %v2862 = vld [vmem:[%s7 + $0x40] sm:$0xff]
        %v2863 = vld [vmem:[%s7 + $0x48] sm:$0xff]
        %v2864 = vld [vmem:[%s7 + $0x50] sm:$0xff]
        %v2865 = vld [vmem:[%s7 + $0x58] sm:$0xff]
        %v2866 = vld [vmem:[%s7 + $0x60] sm:$0xff]
        %v2867 = vld [vmem:[%s7 + $0x68] sm:$0xff]
        %v2868 = vld [vmem:[%s7 + $0x70] sm:$0xff]
        %v2869 = vld [vmem:[%s7 + $0x78] sm:$0xff]
        %2871 = vset.pattern.permute.xlu0 0
        %2872 = vperm.xlu0 %2871, %v2854
        %v2873 = vpop.permute.xlu0 %2872
        %2876 = vset.pattern.permute.xlu0 0
        %2877 = vperm.xlu0 %2876, %v2855
        %v2878 = vpop.permute.xlu0 %2877
        %2881 = vset.pattern.permute.xlu0 0
        %2882 = vperm.xlu0 %2881, %v2856
        %v2883 = vpop.permute.xlu0 %2882
        %2886 = vset.pattern.permute.xlu0 0
        %2887 = vperm.xlu0 %2886, %v2857
        %v2888 = vpop.permute.xlu0 %2887
        %2891 = vset.pattern.permute.xlu0 0
        %2892 = vperm.xlu0 %2891, %v2858
        %v2893 = vpop.permute.xlu0 %2892
        %2896 = vset.pattern.permute.xlu0 0
        %2897 = vperm.xlu0 %2896, %v2859
        %v2898 = vpop.permute.xlu0 %2897
        %2901 = vset.pattern.permute.xlu0 0
        %2902 = vperm.xlu0 %2901, %v2860
        %v2903 = vpop.permute.xlu0 %2902
        %2906 = vset.pattern.permute.xlu0 0
        %2907 = vperm.xlu0 %2906, %v2861
        %v2908 = vpop.permute.xlu0 %2907
        %2911 = vset.pattern.permute.xlu0 0
        %2912 = vperm.xlu0 %2911, %v2862
        %v2913 = vpop.permute.xlu0 %2912
        %2916 = vset.pattern.permute.xlu0 0
        %2917 = vperm.xlu0 %2916, %v2863
        %v2918 = vpop.permute.xlu0 %2917
        %2921 = vset.pattern.permute.xlu0 0
        %2922 = vperm.xlu0 %2921, %v2864
        %v2923 = vpop.permute.xlu0 %2922
        %2926 = vset.pattern.permute.xlu0 0
        %2927 = vperm.xlu0 %2926, %v2865
        %v2928 = vpop.permute.xlu0 %2927
        %2931 = vset.pattern.permute.xlu0 0
        %2932 = vperm.xlu0 %2931, %v2866
        %v2933 = vpop.permute.xlu0 %2932
        %2936 = vset.pattern.permute.xlu0 0
        %2937 = vperm.xlu0 %2936, %v2867
        %v2938 = vpop.permute.xlu0 %2937
        %2941 = vset.pattern.permute.xlu0 0
        %2942 = vperm.xlu0 %2941, %v2868
        %v2943 = vpop.permute.xlu0 %2942
        %2946 = vset.pattern.permute.xlu0 0
        %2947 = vperm.xlu0 %2946, %v2869
        %v2948 = vpop.permute.xlu0 %2947
        %v2966 = vunpack.c.l.b16 %v2830
        %v2967 = vunpack.c.l.b16 %v2831
        %v2968 = vunpack.c.l.b16 %v2832
        %v2969 = vunpack.c.l.b16 %v2833
        %v2970 = vunpack.c.l.b16 %v2834
        %v2971 = vunpack.c.l.b16 %v2835
        %v2972 = vunpack.c.l.b16 %v2836
        %v2973 = vunpack.c.l.b16 %v2837
        %v2974 = vunpack.c.l.b16 %v2838
        %v2975 = vunpack.c.l.b16 %v2839
        %v2976 = vunpack.c.l.b16 %v2840
        %v2977 = vunpack.c.l.b16 %v2841
        %v2978 = vunpack.c.l.b16 %v2842
        %v2979 = vunpack.c.l.b16 %v2843
        %v2980 = vunpack.c.l.b16 %v2844
        %v2981 = vunpack.c.l.b16 %v2845
        %v2982 = vpack.c.b16 %v2967, %v2966
        %v2983 = vpack.c.b16 %v2969, %v2968
        %v2984 = vpack.c.b16 %v2971, %v2970
        %v2985 = vpack.c.b16 %v2973, %v2972
        %v2986 = vpack.c.b16 %v2975, %v2974
        %v2987 = vpack.c.b16 %v2977, %v2976
        %v2988 = vpack.c.b16 %v2979, %v2978
        %v2989 = vpack.c.b16 %v2981, %v2980
        %2998 = vmatpush.bf16.msra.mxu0 %v2853
        %2999 = vmatpush.bf16.msra.mxu0 %v2852
        %3000 = vmatpush.bf16.msra.mxu0 %v2851
        %3001 = vmatpush.bf16.msra.mxu0 %v2850
        %3002 = vmatpush.bf16.msra.mxu0 %v2849
        %3003 = vmatpush.bf16.msra.mxu0 %v2848
        %3004 = vmatpush.bf16.msra.mxu0 %v2847
        %3005 = vmatpush.bf16.msra.mxu0 %v2846
        %3006 = vmatmul.bf16.gmra.mxu0 %v2982
        %v3007 = vpop.f32.mrf.mxu0
        %v3008 = vadd.f32 %v2873, %v3007
        %v3009 = vpop.f32.mrf.mxu0
        %v3010 = vadd.f32 %v2878, %v3009
        %3011 = vmatmul.bf16.gmra.mxu0 %v2983
        %v3012 = vpop.f32.mrf.mxu0
        %v3013 = vadd.f32 %v2883, %v3012
        %v3014 = vpop.f32.mrf.mxu0
        %v3015 = vadd.f32 %v2888, %v3014
        %3016 = vmatmul.bf16.gmra.mxu0 %v2984
        %v3017 = vpop.f32.mrf.mxu0
        %v3018 = vadd.f32 %v2893, %v3017
        %v3019 = vpop.f32.mrf.mxu0
        %v3020 = vadd.f32 %v2898, %v3019
        %3021 = vmatmul.bf16.gmra.mxu0 %v2985
        %v3022 = vpop.f32.mrf.mxu0
        %v3023 = vadd.f32 %v2903, %v3022
        %v3024 = vpop.f32.mrf.mxu0
        %v3025 = vadd.f32 %v2908, %v3024
        %3026 = vmatmul.bf16.gmra.mxu0 %v2986
        %v3027 = vpop.f32.mrf.mxu0
        %v3028 = vadd.f32 %v2913, %v3027
        %v3029 = vpop.f32.mrf.mxu0
        %v3030 = vadd.f32 %v2918, %v3029
        %3031 = vmatmul.bf16.gmra.mxu0 %v2987
        %v3032 = vpop.f32.mrf.mxu0
        %v3033 = vadd.f32 %v2923, %v3032
        %v3034 = vpop.f32.mrf.mxu0
        %v3035 = vadd.f32 %v2928, %v3034
        %3036 = vmatmul.bf16.gmra.mxu0 %v2988
        %v3037 = vpop.f32.mrf.mxu0
        %v3038 = vadd.f32 %v2933, %v3037
        %v3039 = vpop.f32.mrf.mxu0
        %v3040 = vadd.f32 %v2938, %v3039
        %3041 = vmatmul.bf16.gmra.mxu0 %v2989
        %v3042 = vpop.f32.mrf.mxu0
        %v3043 = vadd.f32 %v2943, %v3042
        %v3044 = vpop.f32.mrf.mxu0
        %v3045 = vadd.f32 %v2948, %v3044
        %3046 = vdwg.mxu0
        %v3047 = vmax.f32 %v3008, 0.0
        %v3048 = vmax.f32 %v3010, 0.0
        %v3049 = vmax.f32 %v3013, 0.0
        %v3050 = vmax.f32 %v3015, 0.0
        %v3051 = vmax.f32 %v3018, 0.0
        %v3052 = vmax.f32 %v3020, 0.0
        %v3053 = vmax.f32 %v3023, 0.0
        %v3054 = vmax.f32 %v3025, 0.0
        %v3055 = vmax.f32 %v3028, 0.0
        %v3056 = vmax.f32 %v3030, 0.0
        %v3057 = vmax.f32 %v3033, 0.0
        %v3058 = vmax.f32 %v3035, 0.0
        %v3059 = vmax.f32 %v3038, 0.0
        %v3060 = vmax.f32 %v3040, 0.0
        %v3061 = vmax.f32 %v3043, 0.0
        %v3062 = vmax.f32 %v3045, 0.0
        %v3063 = vadd.f32 %v3047, %v2151
        %v3064 = vadd.f32 %v3048, %v2153
        %v3065 = vadd.f32 %v3049, %v2156
        %v3066 = vadd.f32 %v3050, %v2158
        %v3067 = vadd.f32 %v3051, %v2161
        %v3068 = vadd.f32 %v3052, %v2163
        %v3069 = vadd.f32 %v3053, %v2166
        %v3070 = vadd.f32 %v3054, %v2168
        %v3071 = vadd.f32 %v3055, %v2171
        %v3072 = vadd.f32 %v3056, %v2173
        %v3073 = vadd.f32 %v3057, %v2176
        %v3074 = vadd.f32 %v3058, %v2178
        %v3075 = vadd.f32 %v3059, %v2181
        %v3076 = vadd.f32 %v3060, %v2183
        %v3077 = vadd.f32 %v3061, %v2186
        %v3078 = vadd.f32 %v3062, %v2188
        %v3079 = vmax.f32 %v3063, 0.0
        %v3080 = vmax.f32 %v3064, 0.0
        %v3081 = vmax.f32 %v3065, 0.0
        %v3082 = vmax.f32 %v3066, 0.0
        %v3083 = vmax.f32 %v3067, 0.0
        %v3084 = vmax.f32 %v3068, 0.0
        %v3085 = vmax.f32 %v3069, 0.0
        %v3086 = vmax.f32 %v3070, 0.0
        %v3087 = vmax.f32 %v3071, 0.0
        %v3088 = vmax.f32 %v3072, 0.0
        %v3089 = vmax.f32 %v3073, 0.0
        %v3090 = vmax.f32 %v3074, 0.0
        %v3091 = vmax.f32 %v3075, 0.0
        %v3092 = vmax.f32 %v3076, 0.0
        %v3093 = vmax.f32 %v3077, 0.0
        %v3094 = vmax.f32 %v3078, 0.0
        %3095 = vst [vmem:[%s399] sm:$0xff] %v3079
        %3096 = vst [vmem:[%s399 + $0x8] sm:$0xff] %v3080
        %3097 = vst [vmem:[%s399 + $0x10] sm:$0xff] %v3081
        %3098 = vst [vmem:[%s399 + $0x18] sm:$0xff] %v3082
        %3099 = vst [vmem:[%s399 + $0x20] sm:$0xff] %v3083
        %3100 = vst [vmem:[%s399 + $0x28] sm:$0xff] %v3084
        %3101 = vst [vmem:[%s399 + $0x30] sm:$0xff] %v3085
        %3102 = vst [vmem:[%s399 + $0x38] sm:$0xff] %v3086
        %3103 = vst [vmem:[%s399 + $0x40] sm:$0xff] %v3087
        %3104 = vst [vmem:[%s399 + $0x48] sm:$0xff] %v3088
        %3105 = vst [vmem:[%s399 + $0x50] sm:$0xff] %v3089
        %3106 = vst [vmem:[%s399 + $0x58] sm:$0xff] %v3090
        %3107 = vst [vmem:[%s399 + $0x60] sm:$0xff] %v3091
        %3108 = vst [vmem:[%s399 + $0x68] sm:$0xff] %v3092
        %3109 = vst [vmem:[%s399 + $0x70] sm:$0xff] %v3093
        %3110 = vst [vmem:[%s399 + $0x78] sm:$0xff] %v3094
        %s3111 = sand.u32 %s270, 1
        %s3112 = scalar_lea.sflag [#allocation5], %s3111
        %s3113 = sand.u32 %s270, 1
        %s3114 = smul.addr %s3113, 128
        %s3115 = scalar_lea.vmem [#allocation4], %s3114
        // Predicated region
        $region65: #{tpu_custom_call.1} parent=59 // pred_check
          %p3116 = pneg %p280
        $region66: #{tpu_custom_call.1} parent=59 // pred_check_branch
          %3118 = sbr.rel (%p3116) target = $region68
        $region67: #{tpu_custom_call.1} parent=59 // pred_region
          %3120 = vsyncadd %s3112, 0
          %s3121 = smul.addr %s28, 16
          %s3122 = sadd.s32 %s29, %s3121
          %s3123 = smul.addr %s3122, 8
          %s3124 = scalar_lea.hbm %s10, %s3123
          %s3125 = sshll.u32 %s3115, 4
          %s3126 = int_to_ptr.vmem [resolvable:$true] %s3125
          %s3127 = sshll.u32 %s3124, 4
          %s3128 = int_to_ptr.hbm [resolvable:$true] %s3127
          %3133 = dma.vmem_to_hbm [thread:$0]  %s3126, 2048, %s3128, %s3112, 128, 128, 8
        $region68: #{tpu_custom_call.1} parent=59 // pred_fallthru
          _
      $region60: #{tpu_custom_call.1} parent=5 // pred_fallthru
        _
      %p3134 = scmp.le.s32.totalorder 2, %s19
      // Predicated region
      $region69: #{tpu_custom_call.1} parent=5 // pred_check
        %p3135 = pneg %p3134
      $region70: #{tpu_custom_call.1} parent=5 // pred_check_branch
        %3137 = sbr.rel (%p3135) target = $region72
      $region71: #{tpu_custom_call.1} parent=5 // pred_region
        %s3138 = ssub.s32 %s19, 2
        // Predicated region
        $region73: #{tpu_custom_call.1} parent=71 // pred_check
          %p3139 = pneg %p286
        $region74: #{tpu_custom_call.1} parent=71 // pred_check_branch
          %3141 = sbr.rel (%p3139) target = $region76
        $region75: #{tpu_custom_call.1} parent=71 // pred_region
          %s3142 = sand.u32 %s271, 1
          %s3143 = scalar_lea.sflag [#allocation5], %s3142
          %s3144 = sand.u32 %s271, 1
          %s3145 = smul.addr %s3144, 128
          %s3146 = scalar_lea.vmem [#allocation4], %s3145
          %3148 = dma.done %s3143, 2048
        $region76: #{tpu_custom_call.1} parent=71 // pred_fallthru
          _
      $region72: #{tpu_custom_call.1} parent=5 // pred_fallthru
        _
    $region6: #{tpu_custom_call.1} parent=1 // loop_footer
      %s23 = sadd.s32 1, %s19
    $region7: #{tpu_custom_call.1} parent=1 // loop_footer_branch
      %18 = sbr.rel target = $region3
    $region8: #{tpu_custom_call.1} parent=1 // loop_exit
      _
    %3149 = vsyncpa [#allocation5], 1
    %s3150 = scalar_lea.sflag [#allocation5], 1
    %3151 = vsyncpa %s3150, 1

// kernel: tpu_custom_call.1
$region0: #{tpu_custom_call.1}
  #allocation0 [shape = 'u32[]', space=smem, size = 0x4, offset = 0x4, fixed_abs, tag = 'smem constant byte address 0x4 - core index']
  #allocation1 [shape = 'u32[72,128]{1,0:T(1,128)}', space=vmem, size = 0x9000, scoped, tag = 'internal scratch']
  #allocation2 [shape = 'f32[128,258]{1,0:T(8,128)}', space=vmem, size = 0x30000, scoped, tag = 'scratch operand']
  #allocation3 [shape = 'f32[128,130]{1,0:T(8,128)}', space=vmem, size = 0x20000, scoped, tag = 'scratch operand']
  %s0 = inlined_call_operand.vmem [shape: f32[2,128,128], index: 0, kind: input, shape index: {}]
  %s1 = inlined_call_operand.vmem [shape: f32[2,1,128,4], index: 1, kind: input, shape index: {}]
  %s2 = inlined_call_operand.vmem [shape: f32[128,3], index: 2, kind: input, shape index: {}]
  %s3 = inlined_call_operand.vmem [shape: bf16[128,128], index: 3, kind: input, shape index: {}]
  %s4 = inlined_call_operand.vmem [shape: f32[128,1], index: 4, kind: input, shape index: {}]
  %s5 = inlined_call_operand.vmem [shape: f32[128,3], index: 5, kind: input, shape index: {}]
  %s6 = inlined_call_operand.vmem [shape: bf16[128,128], index: 6, kind: input, shape index: {}]
  %s7 = inlined_call_operand.vmem [shape: f32[128,1], index: 7, kind: input, shape index: {}]
  %s8 = inlined_call_operand.vmem [shape: bf16[128,128], index: 8, kind: input, shape index: {}]
  %s9 = inlined_call_operand.vmem [shape: f32[128,1], index: 9, kind: input, shape index: {}]
  %s10 = inlined_call_operand.hbm [shape: f32[2,128,128], index: 10, kind: output, shape index: {}]
  %s11 = sld [smem:[#allocation0]]
  $region77: #{tpu_custom_call.1} parent=0
    _
  %s13 = ssub.s32 1, %s11
  %s14 = scalar_select 0, %s13, %s11
  $region1: #{tpu_custom_call.1} parent=0
    #allocation4 [shape = 'u8[131072]{0}', space=vmem, size = 0x20000, scoped, tag = 'output window, operand 0']
    #allocation5 [shape = 's32[2]{0}', space=sflag, size = 0x8, scoped, tag = 'scoped memory for tpu_custom_call.1']
    %15 = vsyncpa [#allocation5], 0
    %s16 = scalar_lea.sflag [#allocation5], 1
    %17 = vsyncpa %s16, 0
    loop: start=0, step=1, limit=4
    $region2: #{tpu_custom_call.1} parent=1 // loop_pre_header
      _
    $region3: #{tpu_custom_call.1} parent=1 // loop_header
      %s19 = sphi 0, %s23
      %p20 = scmp.ge.s32.totalorder %s19, 4
      %s26 = sphi 0, %s38
      %s27 = sphi 0, %s34
      %s28 = sphi 0, %s26
      %s29 = sphi 0, %s27
      %s30 = sphi 0, %s28
      %s31 = sphi 0, %s29
      %s43 = sphi 0, %s45
      %s46 = sphi 0, %s43
      %s47 = sphi 0, %s46
      %s63 = sphi 0, %s47
      %s71 = sphi 0, %s73
      %s74 = sphi 0, %s71
      %s75 = sphi 0, %s74
      %s91 = sphi 0, %s75
      %s95 = sphi 0, %s95
      %s97 = sphi 0, %s95
      %s98 = sphi 0, %s97
      %s112 = sphi 0, %s98
      %s116 = sphi 0, %s116
      %s118 = sphi 0, %s116
      %s119 = sphi 0, %s118
      %s133 = sphi 0, %s119
      %s137 = sphi 0, %s137
      %s139 = sphi 0, %s137
      %s140 = sphi 0, %s139
      %s154 = sphi 0, %s140
      %s158 = sphi 0, %s158
      %s160 = sphi 0, %s158
      %s161 = sphi 0, %s160
      %s175 = sphi 0, %s161
      %s179 = sphi 0, %s179
      %s181 = sphi 0, %s179
      %s182 = sphi 0, %s181
      %s196 = sphi 0, %s182
      %s200 = sphi 0, %s200
      %s202 = sphi 0, %s200
      %s203 = sphi 0, %s202
      %s217 = sphi 0, %s203
      %s221 = sphi 0, %s221
      %s223 = sphi 0, %s221
      %s224 = sphi 0, %s223
      %s238 = sphi 0, %s224
      %s242 = sphi 0, %s242
      %s244 = sphi 0, %s242
      %s245 = sphi 0, %s244
      %s259 = sphi 0, %s245
      %s267 = sphi 0, %s269
      %s270 = sphi 0, %s267
      %s271 = sphi 0, %s270
      %s287 = sphi 0, %s271
    $region4: #{tpu_custom_call.1} parent=1 // loop_header_branch
      %22 = sbr.rel (%p20) target = $region8
    $region5: #{tpu_custom_call.1} parent=1 // loop_body
      %s24 = ssub.s32 %s19, 1
      %s25 = ssub.s32 %s19, 2
      %s32 = sadd.s32 1, %s27
      %p33 = scmp.ge.s32.totalorder %s32, 1
      %s34 = scalar_select %p33, 0, %s32
      %s35 = sadd.s32 1, %s26
      %s36 = scalar_select %p33, %s35, %s26
      %p37 = scmp.ge.s32.totalorder %s36, 2
      %s38 = scalar_select %p37, 0, %s36
      %s39 = ssub.s32 %s26, %s38
      %s40 = ssub.s32 %s27, %s34
      %s41 = sor.u32 %s39, %s40
      %p42 = scmp.eq.s32.totalorder %s41, 0
      %s44 = sadd.s32 %s43, 1
      %s45 = scalar_select %p42, %s43, %s44
      %p48 = pneg %p42
      %p49 = scmp.eq.s32.totalorder %s19, 1
      %p50 = por %p48, %p49
      %p51 = scmp.ne.s32.totalorder %s43, %s46
      %p52 = scmp.eq.s32.totalorder %s19, 0
      %p53 = por %p51, %p52
      %p54 = scmp.ne.s32.totalorder %s43, %s46
      %p55 = scmp.eq.s32.totalorder %s24, 1
      %p56 = por %p54, %p55
      %p57 = scmp.ne.s32.totalorder %s46, %s47
      %p58 = scmp.eq.s32.totalorder %s24, 0
      %p59 = por %p57, %p58
      %p60 = scmp.ne.s32.totalorder %s46, %s47
      %p61 = scmp.eq.s32.totalorder %s25, 1
      %p62 = por %p60, %p61
      %p64 = scmp.ne.s32.totalorder %s47, %s63
      %p65 = scmp.eq.s32.totalorder %s25, 0
      %p66 = por %p64, %p65
      %s67 = ssub.s32 %s26, %s38
      %s68 = ssub.s32 %s27, %s34
      %s69 = sor.u32 %s67, %s68
      %p70 = scmp.eq.s32.totalorder %s69, 0
      %s72 = sadd.s32 %s71, 1
      %s73 = scalar_select %p70, %s71, %s72
      %p76 = pneg %p70
      %p77 = scmp.eq.s32.totalorder %s19, 1
      %p78 = por %p76, %p77
      %p79 = scmp.ne.s32.totalorder %s71, %s74
      %p80 = scmp.eq.s32.totalorder %s19, 0
      %p81 = por %p79, %p80
      %p82 = scmp.ne.s32.totalorder %s71, %s74
      %p83 = scmp.eq.s32.totalorder %s24, 1
      %p84 = por %p82, %p83
      %p85 = scmp.ne.s32.totalorder %s74, %s75
      %p86 = scmp.eq.s32.totalorder %s24, 0
      %p87 = por %p85, %p86
      %p88 = scmp.ne.s32.totalorder %s74, %s75
      %p89 = scmp.eq.s32.totalorder %s25, 1
      %p90 = por %p88, %p89
      %p92 = scmp.ne.s32.totalorder %s75, %s91
      %p93 = scmp.eq.s32.totalorder %s25, 0
      %p94 = por %p92, %p93
      %s96 = sadd.s32 %s95, 1
      %p99 = scmp.eq.s32.totalorder %s19, 1
      %p100 = scmp.ne.s32.totalorder %s95, %s97
      %p101 = scmp.eq.s32.totalorder %s19, 0
      %p102 = por %p100, %p101
      %p103 = scmp.ne.s32.totalorder %s95, %s97
      %p104 = scmp.eq.s32.totalorder %s24, 1
      %p105 = por %p103, %p104
      %p106 = scmp.ne.s32.totalorder %s97, %s98
      %p107 = scmp.eq.s32.totalorder %s24, 0
      %p108 = por %p106, %p107
      %p109 = scmp.ne.s32.totalorder %s97, %s98
      %p110 = scmp.eq.s32.totalorder %s25, 1
      %p111 = por %p109, %p110
      %p113 = scmp.ne.s32.totalorder %s98, %s112
      %p114 = scmp.eq.s32.totalorder %s25, 0
      %p115 = por %p113, %p114
      %s117 = sadd.s32 %s116, 1
      %p120 = scmp.eq.s32.totalorder %s19, 1
      %p121 = scmp.ne.s32.totalorder %s116, %s118
      %p122 = scmp.eq.s32.totalorder %s19, 0
      %p123 = por %p121, %p122
      %p124 = scmp.ne.s32.totalorder %s116, %s118
      %p125 = scmp.eq.s32.totalorder %s24, 1
      %p126 = por %p124, %p125
      %p127 = scmp.ne.s32.totalorder %s118, %s119
      %p128 = scmp.eq.s32.totalorder %s24, 0
      %p129 = por %p127, %p128
      %p130 = scmp.ne.s32.totalorder %s118, %s119
      %p131 = scmp.eq.s32.totalorder %s25, 1
      %p132 = por %p130, %p131
      %p134 = scmp.ne.s32.totalorder %s119, %s133
      %p135 = scmp.eq.s32.totalorder %s25, 0
      %p136 = por %p134, %p135
      %s138 = sadd.s32 %s137, 1
      %p141 = scmp.eq.s32.totalorder %s19, 1
      %p142 = scmp.ne.s32.totalorder %s137, %s139
      %p143 = scmp.eq.s32.totalorder %s19, 0
      %p144 = por %p142, %p143
      %p145 = scmp.ne.s32.totalorder %s137, %s139
      %p146 = scmp.eq.s32.totalorder %s24, 1
      %p147 = por %p145, %p146
      %p148 = scmp.ne.s32.totalorder %s139, %s140
      %p149 = scmp.eq.s32.totalorder %s24, 0
      %p150 = por %p148, %p149
      %p151 = scmp.ne.s32.totalorder %s139, %s140
      %p152 = scmp.eq.s32.totalorder %s25, 1
      %p153 = por %p151, %p152
      %p155 = scmp.ne.s32.totalorder %s140, %s154
      %p156 = scmp.eq.s32.totalorder %s25, 0
      %p157 = por %p155, %p156
      %s159 = sadd.s32 %s158, 1
      %p162 = scmp.eq.s32.totalorder %s19, 1
      %p163 = scmp.ne.s32.totalorder %s158, %s160
      %p164 = scmp.eq.s32.totalorder %s19, 0
      %p165 = por %p163, %p164
      %p166 = scmp.ne.s32.totalorder %s158, %s160
      %p167 = scmp.eq.s32.totalorder %s24, 1
      %p168 = por %p166, %p167
      %p169 = scmp.ne.s32.totalorder %s160, %s161
      %p170 = scmp.eq.s32.totalorder %s24, 0
      %p171 = por %p169, %p170
      %p172 = scmp.ne.s32.totalorder %s160, %s161
      %p173 = scmp.eq.s32.totalorder %s25, 1
      %p174 = por %p172, %p173
      %p176 = scmp.ne.s32.totalorder %s161, %s175
      %p177 = scmp.eq.s32.totalorder %s25, 0
      %p178 = por %p176, %p177
      %s180 = sadd.s32 %s179, 1
      %p183 = scmp.eq.s32.totalorder %s19, 1
      %p184 = scmp.ne.s32.totalorder %s179, %s181
      %p185 = scmp.eq.s32.totalorder %s19, 0
      %p186 = por %p184, %p185
      %p187 = scmp.ne.s32.totalorder %s179, %s181
      %p188 = scmp.eq.s32.totalorder %s24, 1
      %p189 = por %p187, %p188
      %p190 = scmp.ne.s32.totalorder %s181, %s182
      %p191 = scmp.eq.s32.totalorder %s24, 0
      %p192 = por %p190, %p191
      %p193 = scmp.ne.s32.totalorder %s181, %s182
      %p194 = scmp.eq.s32.totalorder %s25, 1
      %p195 = por %p193, %p194
      %p197 = scmp.ne.s32.totalorder %s182, %s196
      %p198 = scmp.eq.s32.totalorder %s25, 0
      %p199 = por %p197, %p198
      %s201 = sadd.s32 %s200, 1
      %p204 = scmp.eq.s32.totalorder %s19, 1
      %p205 = scmp.ne.s32.totalorder %s200, %s202
      %p206 = scmp.eq.s32.totalorder %s19, 0
      %p207 = por %p205, %p206
      %p208 = scmp.ne.s32.totalorder %s200, %s202
      %p209 = scmp.eq.s32.totalorder %s24, 1
      %p210 = por %p208, %p209
      %p211 = scmp.ne.s32.totalorder %s202, %s203
      %p212 = scmp.eq.s32.totalorder %s24, 0
      %p213 = por %p211, %p212
      %p214 = scmp.ne.s32.totalorder %s202, %s203
      %p215 = scmp.eq.s32.totalorder %s25, 1
      %p216 = por %p214, %p215
      %p218 = scmp.ne.s32.totalorder %s203, %s217
      %p219 = scmp.eq.s32.totalorder %s25, 0
      %p220 = por %p218, %p219
      %s222 = sadd.s32 %s221, 1
      %p225 = scmp.eq.s32.totalorder %s19, 1
      %p226 = scmp.ne.s32.totalorder %s221, %s223
      %p227 = scmp.eq.s32.totalorder %s19, 0
      %p228 = por %p226, %p227
      %p229 = scmp.ne.s32.totalorder %s221, %s223
      %p230 = scmp.eq.s32.totalorder %s24, 1
      %p231 = por %p229, %p230
      %p232 = scmp.ne.s32.totalorder %s223, %s224
      %p233 = scmp.eq.s32.totalorder %s24, 0
      %p234 = por %p232, %p233
      %p235 = scmp.ne.s32.totalorder %s223, %s224
      %p236 = scmp.eq.s32.totalorder %s25, 1
      %p237 = por %p235, %p236
      %p239 = scmp.ne.s32.totalorder %s224, %s238
      %p240 = scmp.eq.s32.totalorder %s25, 0
      %p241 = por %p239, %p240
      %s243 = sadd.s32 %s242, 1
      %p246 = scmp.eq.s32.totalorder %s19, 1
      %p247 = scmp.ne.s32.totalorder %s242, %s244
      %p248 = scmp.eq.s32.totalorder %s19, 0
      %p249 = por %p247, %p248
      %p250 = scmp.ne.s32.totalorder %s242, %s244
      %p251 = scmp.eq.s32.totalorder %s24, 1
      %p252 = por %p250, %p251
      %p253 = scmp.ne.s32.totalorder %s244, %s245
      %p254 = scmp.eq.s32.totalorder %s24, 0
      %p255 = por %p253, %p254
      %p256 = scmp.ne.s32.totalorder %s244, %s245
      %p257 = scmp.eq.s32.totalorder %s25, 1
      %p258 = por %p256, %p257
      %p260 = scmp.ne.s32.totalorder %s245, %s259
      %p261 = scmp.eq.s32.totalorder %s25, 0
      %p262 = por %p260, %p261
      %s263 = ssub.s32 %s26, %s38
      %s264 = ssub.s32 %s27, %s34
      %s265 = sor.u32 %s263, %s264
      %p266 = scmp.eq.s32.totalorder %s265, 0
      %s268 = sadd.s32 %s267, 1
      %s269 = scalar_select %p266, %s267, %s268
      %p272 = pneg %p266
      %p273 = scmp.eq.s32.totalorder %s19, 1
      %p274 = por %p272, %p273
      %p275 = scmp.ne.s32.totalorder %s267, %s270
      %p276 = scmp.eq.s32.totalorder %s19, 0
      %p277 = por %p275, %p276
      %p278 = scmp.ne.s32.totalorder %s267, %s270
      %p279 = scmp.eq.s32.totalorder %s24, 1
      %p280 = por %p278, %p279
      %p281 = scmp.ne.s32.totalorder %s270, %s271
      %p282 = scmp.eq.s32.totalorder %s24, 0
      %p283 = por %p281, %p282
      %p284 = scmp.ne.s32.totalorder %s270, %s271
      %p285 = scmp.eq.s32.totalorder %s25, 1
      %p286 = por %p284, %p285
      %p288 = scmp.ne.s32.totalorder %s271, %s287
      %p289 = scmp.eq.s32.totalorder %s25, 0
      %p290 = por %p288, %p289
      %p291 = scmp.le.s32.totalorder 1, %s19
      %p292 = scmp.lt.s32.totalorder %s19, 3
      %p293 = pnand %p291, %p292
      %p294 = pneg %p293
      // Predicated region
      $region9: #{tpu_custom_call.1} parent=5 // pred_check
        _
      $region10: #{tpu_custom_call.1} parent=5 // pred_check_branch
        %296 = sbr.rel (%p293) target = $region12
      $region11: #{tpu_custom_call.1} parent=5 // pred_region
        %s297 = ssub.s32 %s19, 1
        // Predicated region
        $region13: #{tpu_custom_call.1} parent=11 // pred_check
          %p298 = pneg %p108
        $region14: #{tpu_custom_call.1} parent=11 // pred_check_branch
          %300 = sbr.rel (%p298) target = $region16
        $region15: #{tpu_custom_call.1} parent=11 // pred_region
          _
        $region16: #{tpu_custom_call.1} parent=11 // pred_fallthru
          _
        // Predicated region
        $region17: #{tpu_custom_call.1} parent=11 // pred_check
          %p301 = pneg %p129
        $region18: #{tpu_custom_call.1} parent=11 // pred_check_branch
          %303 = sbr.rel (%p301) target = $region20
        $region19: #{tpu_custom_call.1} parent=11 // pred_region
          _
        $region20: #{tpu_custom_call.1} parent=11 // pred_fallthru
          _
        // Predicated region
        $region21: #{tpu_custom_call.1} parent=11 // pred_check
          %p304 = pneg %p150
        $region22: #{tpu_custom_call.1} parent=11 // pred_check_branch
          %306 = sbr.rel (%p304) target = $region24
        $region23: #{tpu_custom_call.1} parent=11 // pred_region
          _
        $region24: #{tpu_custom_call.1} parent=11 // pred_fallthru
          _
        // Predicated region
        $region25: #{tpu_custom_call.1} parent=11 // pred_check
          %p307 = pneg %p171
        $region26: #{tpu_custom_call.1} parent=11 // pred_check_branch
          %309 = sbr.rel (%p307) target = $region28
        $region27: #{tpu_custom_call.1} parent=11 // pred_region
          _
        $region28: #{tpu_custom_call.1} parent=11 // pred_fallthru
          _
        // Predicated region
        $region29: #{tpu_custom_call.1} parent=11 // pred_check
          %p310 = pneg %p192
        $region30: #{tpu_custom_call.1} parent=11 // pred_check_branch
          %312 = sbr.rel (%p310) target = $region32
        $region31: #{tpu_custom_call.1} parent=11 // pred_region
          _
        $region32: #{tpu_custom_call.1} parent=11 // pred_fallthru
          _
        // Predicated region
        $region33: #{tpu_custom_call.1} parent=11 // pred_check
          %p313 = pneg %p213
        $region34: #{tpu_custom_call.1} parent=11 // pred_check_branch
          %315 = sbr.rel (%p313) target = $region36
        $region35: #{tpu_custom_call.1} parent=11 // pred_region
          _
        $region36: #{tpu_custom_call.1} parent=11 // pred_fallthru
          _
        // Predicated region
        $region37: #{tpu_custom_call.1} parent=11 // pred_check
          %p316 = pneg %p234
        $region38: #{tpu_custom_call.1} parent=11 // pred_check_branch
          %318 = sbr.rel (%p316) target = $region40
        $region39: #{tpu_custom_call.1} parent=11 // pred_region
          _
        $region40: #{tpu_custom_call.1} parent=11 // pred_fallthru
          _
        // Predicated region
        $region41: #{tpu_custom_call.1} parent=11 // pred_check
          %p319 = pneg %p255
        $region42: #{tpu_custom_call.1} parent=11 // pred_check_branch
          %321 = sbr.rel (%p319) target = $region44
        $region43: #{tpu_custom_call.1} parent=11 // pred_region
          _
        $region44: #{tpu_custom_call.1} parent=11 // pred_fallthru
          _
      $region12: #{tpu_custom_call.1} parent=5 // pred_fallthru
        _
      %p322 = scmp.lt.s32.totalorder %s19, 2
      // Predicated region
      $region45: #{tpu_custom_call.1} parent=5 // pred_check
        %p323 = pneg %p322
      $region46: #{tpu_custom_call.1} parent=5 // pred_check_branch
        %325 = sbr.rel (%p323) target = $region48
      $region47: #{tpu_custom_call.1} parent=5 // pred_region
        // Predicated region
        $region49: #{tpu_custom_call.1} parent=47 // pred_check
          %p326 = pneg %p53
        $region50: #{tpu_custom_call.1} parent=47 // pred_check_branch
          %328 = sbr.rel (%p326) target = $region52
        $region51: #{tpu_custom_call.1} parent=47 // pred_region
          %p329 = scmp.lt.s32.totalorder %s26, 1
          %s330 = scalar_select %p329, %s26, 1
          %p331 = scmp.lt.s32.totalorder %s27, 0
          %s332 = scalar_select %p331, %s27, 0
          %s333 = smul.addr %s330, 16
          %s334 = sadd.s32 %s332, %s333
          %s335 = smul.addr %s334, 8
          %s336 = scalar_lea.vmem %s0, %s335
        $region52: #{tpu_custom_call.1} parent=47 // pred_fallthru
          _
        // Predicated region
        $region53: #{tpu_custom_call.1} parent=47 // pred_check
          %p337 = pneg %p81
        $region54: #{tpu_custom_call.1} parent=47 // pred_check_branch
          %339 = sbr.rel (%p337) target = $region56
        $region55: #{tpu_custom_call.1} parent=47 // pred_region
          %p340 = scmp.lt.s32.totalorder %s26, 1
          %s341 = scalar_select %p340, %s26, 1
          %p342 = scmp.lt.s32.totalorder %s27, 0
          %s343 = scalar_select %p342, %s27, 0
          %s344 = smul.addr %s343, 16
          %s345 = smul.addr %s341, 16
          %s346 = sadd.s32 %s344, %s345
          %s347 = smul.addr %s346, 8
          %s348 = scalar_lea.vmem %s1, %s347
        $region56: #{tpu_custom_call.1} parent=47 // pred_fallthru
          _
      $region48: #{tpu_custom_call.1} parent=5 // pred_fallthru
        _
      %p349 = scmp.le.s32.totalorder 1, %s19
      %p350 = scmp.lt.s32.totalorder %s19, 3
      %p351 = pnand %p349, %p350
      %p352 = pneg %p351
      // Predicated region
      $region57: #{tpu_custom_call.1} parent=5 // pred_check
        _
      $region58: #{tpu_custom_call.1} parent=5 // pred_check_branch
        %354 = sbr.rel (%p351) target = $region60
      $region59: #{tpu_custom_call.1} parent=5 // pred_region
        %s355 = ssub.s32 %s19, 1
        %p356 = scmp.lt.s32.totalorder %s28, 1
        %s357 = scalar_select %p356, %s28, 1
        %p358 = scmp.lt.s32.totalorder %s29, 0
        %s359 = scalar_select %p358, %s29, 0
        %s360 = smul.addr %s357, 16
        %s361 = sadd.s32 %s359, %s360
        %s362 = smul.addr %s361, 8
        %s363 = scalar_lea.vmem %s0, %s362
        %p364 = pneg %p59
        %p365 = pneg %p56
        %p366 = scmp.lt.s32.totalorder %s28, 1
        %s367 = scalar_select %p366, %s28, 1
        %p368 = scmp.lt.s32.totalorder %s29, 0
        %s369 = scalar_select %p368, %s29, 0
        %s370 = smul.addr %s369, 16
        %s371 = smul.addr %s367, 16
        %s372 = sadd.s32 %s370, %s371
        %s373 = smul.addr %s372, 8
        %s374 = scalar_lea.vmem %s1, %s373
        %p375 = pneg %p87
        %p376 = pneg %p84
        %p377 = pneg %p108
        %p378 = pneg %p105
        %p379 = pneg %p129
        %p380 = pneg %p126
        %p381 = pneg %p150
        %p382 = pneg %p147
        %p383 = pneg %p171
        %p384 = pneg %p168
        %p385 = pneg %p192
        %p386 = pneg %p189
        %p387 = pneg %p213
        %p388 = pneg %p210
        %p389 = pneg %p234
        %p390 = pneg %p231
        %p391 = pneg %p255
        %p392 = pneg %p252
        %p393 = pneg %p283
        %p394 = pneg %p280
        %s395 = sand.u32 %s270, 1
        %s396 = scalar_lea.sflag [#allocation5], %s395
        %s397 = sand.u32 %s270, 1
        %s398 = smul.addr %s397, 128
        %s399 = scalar_lea.vmem [#allocation4], %s398
        %p400 = scmp.lt.s32.totalorder %s28, 1
        %s401 = scalar_select %p400, %s28, 1
        %p402 = scmp.lt.s32.totalorder %s29, 0
        %s403 = scalar_select %p402, %s29, 0
        %s404 = smul.addr %s401, 16
        %s405 = sadd.s32 %s403, %s404
        %s406 = smul.addr %s405, 8
        %s407 = scalar_lea.vmem %s0, %s406
        %p408 = scmp.lt.s32.totalorder %s28, 1
        %s409 = scalar_select %p408, %s28, 1
        %p410 = scmp.lt.s32.totalorder %s29, 0
        %s411 = scalar_select %p410, %s29, 0
        %s412 = smul.addr %s411, 16
        %s413 = smul.addr %s409, 16
        %s414 = sadd.s32 %s412, %s413
        %s415 = smul.addr %s414, 8
        %s416 = scalar_lea.vmem %s1, %s415
        %s417 = smul.u32 %s29, 128
        %v418 = vld [vmem:[%s407] sm:$0xff]
        %v419 = vld [vmem:[%s407 + $0x8] sm:$0xff]
        %v420 = vld [vmem:[%s407 + $0x10] sm:$0xff]
        %v421 = vld [vmem:[%s407 + $0x18] sm:$0xff]
        %v422 = vld [vmem:[%s407 + $0x20] sm:$0xff]
        %v423 = vld [vmem:[%s407 + $0x28] sm:$0xff]
        %v424 = vld [vmem:[%s407 + $0x30] sm:$0xff]
        %v425 = vld [vmem:[%s407 + $0x38] sm:$0xff]
        %v426 = vld [vmem:[%s407 + $0x40] sm:$0xff]
        %v427 = vld [vmem:[%s407 + $0x48] sm:$0xff]
        %v428 = vld [vmem:[%s407 + $0x50] sm:$0xff]
        %v429 = vld [vmem:[%s407 + $0x58] sm:$0xff]
        %v430 = vld [vmem:[%s407 + $0x60] sm:$0xff]
        %v431 = vld [vmem:[%s407 + $0x68] sm:$0xff]
        %v432 = vld [vmem:[%s407 + $0x70] sm:$0xff]
        %v433 = vld [vmem:[%s407 + $0x78] sm:$0xff]
        %434 = vst [vmem:[#allocation2 + $0x8] sm:$0xff] %v418
        %435 = vst [vmem:[#allocation2 + $0x20] sm:$0xff] %v419
        %436 = vst [vmem:[#allocation2 + $0x38] sm:$0xff] %v420
        %437 = vst [vmem:[#allocation2 + $0x50] sm:$0xff] %v421
        %438 = vst [vmem:[#allocation2 + $0x68] sm:$0xff] %v422
        %439 = vst [vmem:[#allocation2 + $0x80] sm:$0xff] %v423
        %440 = vst [vmem:[#allocation2 + $0x98] sm:$0xff] %v424
        %441 = vst [vmem:[#allocation2 + $0xb0] sm:$0xff] %v425
        %442 = vst [vmem:[#allocation2 + $0xc8] sm:$0xff] %v426
        %443 = vst [vmem:[#allocation2 + $0xe0] sm:$0xff] %v427
        %444 = vst [vmem:[#allocation2 + $0xf8] sm:$0xff] %v428
        %445 = vst [vmem:[#allocation2 + $0x110] sm:$0xff] %v429
        %446 = vst [vmem:[#allocation2 + $0x128] sm:$0xff] %v430
        %447 = vst [vmem:[#allocation2 + $0x140] sm:$0xff] %v431
        %448 = vst [vmem:[#allocation2 + $0x158] sm:$0xff] %v432
        %449 = vst [vmem:[#allocation2 + $0x170] sm:$0xff] %v433
        %v450 = vld [vmem:[%s416] sm:$0xff]
        %v451 = vld [vmem:[%s416 + $0x8] sm:$0xff]
        %v452 = vld [vmem:[%s416 + $0x10] sm:$0xff]
        %v453 = vld [vmem:[%s416 + $0x18] sm:$0xff]
        %v454 = vld [vmem:[%s416 + $0x20] sm:$0xff]
        %v455 = vld [vmem:[%s416 + $0x28] sm:$0xff]
        %v456 = vld [vmem:[%s416 + $0x30] sm:$0xff]
        %v457 = vld [vmem:[%s416 + $0x38] sm:$0xff]
        %v458 = vld [vmem:[%s416 + $0x40] sm:$0xff]
        %v459 = vld [vmem:[%s416 + $0x48] sm:$0xff]
        %v460 = vld [vmem:[%s416 + $0x50] sm:$0xff]
        %v461 = vld [vmem:[%s416 + $0x58] sm:$0xff]
        %v462 = vld [vmem:[%s416 + $0x60] sm:$0xff]
        %v463 = vld [vmem:[%s416 + $0x68] sm:$0xff]
        %v464 = vld [vmem:[%s416 + $0x70] sm:$0xff]
        %v465 = vld [vmem:[%s416 + $0x78] sm:$0xff]
        %482 = vrot.lane.b32.xlu0 %v450, 126
        %v483 = vpop.permute.xlu0 %482
        %484 = vrot.lane.b32.xlu0 %v451, 126
        %v485 = vpop.permute.xlu0 %484
        %486 = vrot.lane.b32.xlu0 %v452, 126
        %v487 = vpop.permute.xlu0 %486
        %488 = vrot.lane.b32.xlu0 %v453, 126
        %v489 = vpop.permute.xlu0 %488
        %490 = vrot.lane.b32.xlu0 %v454, 126
        %v491 = vpop.permute.xlu0 %490
        %492 = vrot.lane.b32.xlu0 %v455, 126
        %v493 = vpop.permute.xlu0 %492
        %494 = vrot.lane.b32.xlu0 %v456, 126
        %v495 = vpop.permute.xlu0 %494
        %496 = vrot.lane.b32.xlu0 %v457, 126
        %v497 = vpop.permute.xlu0 %496
        %498 = vrot.lane.b32.xlu0 %v458, 126
        %v499 = vpop.permute.xlu0 %498
        %500 = vrot.lane.b32.xlu0 %v459, 126
        %v501 = vpop.permute.xlu0 %500
        %502 = vrot.lane.b32.xlu0 %v460, 126
        %v503 = vpop.permute.xlu0 %502
        %504 = vrot.lane.b32.xlu0 %v461, 126
        %v505 = vpop.permute.xlu0 %504
        %506 = vrot.lane.b32.xlu0 %v462, 126
        %v507 = vpop.permute.xlu0 %506
        %508 = vrot.lane.b32.xlu0 %v463, 126
        %v509 = vpop.permute.xlu0 %508
        %510 = vrot.lane.b32.xlu0 %v464, 126
        %v511 = vpop.permute.xlu0 %510
        %512 = vrot.lane.b32.xlu0 %v465, 126
        %v513 = vpop.permute.xlu0 %512
        %vm530 = vcmask 1048560
        %531 = vst.msk [vmem:[#allocation2] sm:$0xff] %vm530, %v483
        %532 = vst.msk [vmem:[#allocation2 + $0x18] sm:$0xff] %vm530, %v485
        %533 = vst.msk [vmem:[#allocation2 + $0x30] sm:$0xff] %vm530, %v487
        %534 = vst.msk [vmem:[#allocation2 + $0x48] sm:$0xff] %vm530, %v489
        %535 = vst.msk [vmem:[#allocation2 + $0x60] sm:$0xff] %vm530, %v491
        %536 = vst.msk [vmem:[#allocation2 + $0x78] sm:$0xff] %vm530, %v493
        %537 = vst.msk [vmem:[#allocation2 + $0x90] sm:$0xff] %vm530, %v495
        %538 = vst.msk [vmem:[#allocation2 + $0xa8] sm:$0xff] %vm530, %v497
        %539 = vst.msk [vmem:[#allocation2 + $0xc0] sm:$0xff] %vm530, %v499
        %540 = vst.msk [vmem:[#allocation2 + $0xd8] sm:$0xff] %vm530, %v501
        %541 = vst.msk [vmem:[#allocation2 + $0xf0] sm:$0xff] %vm530, %v503
        %542 = vst.msk [vmem:[#allocation2 + $0x108] sm:$0xff] %vm530, %v505
        %543 = vst.msk [vmem:[#allocation2 + $0x120] sm:$0xff] %vm530, %v507
        %544 = vst.msk [vmem:[#allocation2 + $0x138] sm:$0xff] %vm530, %v509
        %545 = vst.msk [vmem:[#allocation2 + $0x150] sm:$0xff] %vm530, %v511
        %546 = vst.msk [vmem:[#allocation2 + $0x168] sm:$0xff] %vm530, %v513
        %v547 = vld [vmem:[%s416] sm:$0xff]
        %v548 = vld [vmem:[%s416 + $0x8] sm:$0xff]
        %v549 = vld [vmem:[%s416 + $0x10] sm:$0xff]
        %v550 = vld [vmem:[%s416 + $0x18] sm:$0xff]
        %v551 = vld [vmem:[%s416 + $0x20] sm:$0xff]
        %v552 = vld [vmem:[%s416 + $0x28] sm:$0xff]
        %v553 = vld [vmem:[%s416 + $0x30] sm:$0xff]
        %v554 = vld [vmem:[%s416 + $0x38] sm:$0xff]
        %v555 = vld [vmem:[%s416 + $0x40] sm:$0xff]
        %v556 = vld [vmem:[%s416 + $0x48] sm:$0xff]
        %v557 = vld [vmem:[%s416 + $0x50] sm:$0xff]
        %v558 = vld [vmem:[%s416 + $0x58] sm:$0xff]
        %v559 = vld [vmem:[%s416 + $0x60] sm:$0xff]
        %v560 = vld [vmem:[%s416 + $0x68] sm:$0xff]
        %v561 = vld [vmem:[%s416 + $0x70] sm:$0xff]
        %v562 = vld [vmem:[%s416 + $0x78] sm:$0xff]
        %579 = vrot.lane.b32.xlu0 %v547, 126
        %v580 = vpop.permute.xlu0 %579
        %581 = vrot.lane.b32.xlu0 %v548, 126
        %v582 = vpop.permute.xlu0 %581
        %583 = vrot.lane.b32.xlu0 %v549, 126
        %v584 = vpop.permute.xlu0 %583
        %585 = vrot.lane.b32.xlu0 %v550, 126
        %v586 = vpop.permute.xlu0 %585
        %587 = vrot.lane.b32.xlu0 %v551, 126
        %v588 = vpop.permute.xlu0 %587
        %589 = vrot.lane.b32.xlu0 %v552, 126
        %v590 = vpop.permute.xlu0 %589
        %591 = vrot.lane.b32.xlu0 %v553, 126
        %v592 = vpop.permute.xlu0 %591
        %593 = vrot.lane.b32.xlu0 %v554, 126
        %v594 = vpop.permute.xlu0 %593
        %595 = vrot.lane.b32.xlu0 %v555, 126
        %v596 = vpop.permute.xlu0 %595
        %597 = vrot.lane.b32.xlu0 %v556, 126
        %v598 = vpop.permute.xlu0 %597
        %599 = vrot.lane.b32.xlu0 %v557, 126
        %v600 = vpop.permute.xlu0 %599
        %601 = vrot.lane.b32.xlu0 %v558, 126
        %v602 = vpop.permute.xlu0 %601
        %603 = vrot.lane.b32.xlu0 %v559, 126
        %v604 = vpop.permute.xlu0 %603
        %605 = vrot.lane.b32.xlu0 %v560, 126
        %v606 = vpop.permute.xlu0 %605
        %607 = vrot.lane.b32.xlu0 %v561, 126
        %v608 = vpop.permute.xlu0 %607
        %609 = vrot.lane.b32.xlu0 %v562, 126
        %v610 = vpop.permute.xlu0 %609
        %vm627 = vcmask 15360
        %628 = vst.msk [vmem:[#allocation2 + $0x10] sm:$0xff] %vm627, %v580
        %629 = vst.msk [vmem:[#allocation2 + $0x28] sm:$0xff] %vm627, %v582
        %630 = vst.msk [vmem:[#allocation2 + $0x40] sm:$0xff] %vm627, %v584
        %631 = vst.msk [vmem:[#allocation2 + $0x58] sm:$0xff] %vm627, %v586
        %632 = vst.msk [vmem:[#allocation2 + $0x70] sm:$0xff] %vm627, %v588
        %633 = vst.msk [vmem:[#allocation2 + $0x88] sm:$0xff] %vm627, %v590
        %634 = vst.msk [vmem:[#allocation2 + $0xa0] sm:$0xff] %vm627, %v592
        %635 = vst.msk [vmem:[#allocation2 + $0xb8] sm:$0xff] %vm627, %v594
        %636 = vst.msk [vmem:[#allocation2 + $0xd0] sm:$0xff] %vm627, %v596
        %637 = vst.msk [vmem:[#allocation2 + $0xe8] sm:$0xff] %vm627, %v598
        %638 = vst.msk [vmem:[#allocation2 + $0x100] sm:$0xff] %vm627, %v600
        %639 = vst.msk [vmem:[#allocation2 + $0x118] sm:$0xff] %vm627, %v602
        %640 = vst.msk [vmem:[#allocation2 + $0x130] sm:$0xff] %vm627, %v604
        %641 = vst.msk [vmem:[#allocation2 + $0x148] sm:$0xff] %vm627, %v606
        %642 = vst.msk [vmem:[#allocation2 + $0x160] sm:$0xff] %vm627, %v608
        %643 = vst.msk [vmem:[#allocation2 + $0x178] sm:$0xff] %vm627, %v610
        %v644 = vld [vmem:[%s2] sm:$0xff]
        %v645 = vld [vmem:[%s2 + $0x8] sm:$0xff]
        %v646 = vld [vmem:[%s2 + $0x10] sm:$0xff]
        %v647 = vld [vmem:[%s2 + $0x18] sm:$0xff]
        %v648 = vld [vmem:[%s2 + $0x20] sm:$0xff]
        %v649 = vld [vmem:[%s2 + $0x28] sm:$0xff]
        %v650 = vld [vmem:[%s2 + $0x30] sm:$0xff]
        %v651 = vld [vmem:[%s2 + $0x38] sm:$0xff]
        %v652 = vld [vmem:[%s2 + $0x40] sm:$0xff]
        %v653 = vld [vmem:[%s2 + $0x48] sm:$0xff]
        %v654 = vld [vmem:[%s2 + $0x50] sm:$0xff]
        %v655 = vld [vmem:[%s2 + $0x58] sm:$0xff]
        %v656 = vld [vmem:[%s2 + $0x60] sm:$0xff]
        %v657 = vld [vmem:[%s2 + $0x68] sm:$0xff]
        %v658 = vld [vmem:[%s2 + $0x70] sm:$0xff]
        %v659 = vld [vmem:[%s2 + $0x78] sm:$0xff]
        %v660 = vld [vmem:[#allocation2] sm:$0xff]
        %v661 = vld [vmem:[#allocation2 + $0x8] sm:$0xff]
        %v662 = vld [vmem:[#allocation2 + $0x18] sm:$0xff]
        %v663 = vld [vmem:[#allocation2 + $0x20] sm:$0xff]
        %v664 = vld [vmem:[#allocation2 + $0x30] sm:$0xff]
        %v665 = vld [vmem:[#allocation2 + $0x38] sm:$0xff]
        %v666 = vld [vmem:[#allocation2 + $0x48] sm:$0xff]
        %v667 = vld [vmem:[#allocation2 + $0x50] sm:$0xff]
        %v668 = vld [vmem:[#allocation2 + $0x60] sm:$0xff]
        %v669 = vld [vmem:[#allocation2 + $0x68] sm:$0xff]
        %v670 = vld [vmem:[#allocation2 + $0x78] sm:$0xff]
        %v671 = vld [vmem:[#allocation2 + $0x80] sm:$0xff]
        %v672 = vld [vmem:[#allocation2 + $0x90] sm:$0xff]
        %v673 = vld [vmem:[#allocation2 + $0x98] sm:$0xff]
        %v674 = vld [vmem:[#allocation2 + $0xa8] sm:$0xff]
        %v675 = vld [vmem:[#allocation2 + $0xb0] sm:$0xff]
        %v676 = vld [vmem:[#allocation2 + $0xc0] sm:$0xff]
        %v677 = vld [vmem:[#allocation2 + $0xc8] sm:$0xff]
        %v678 = vld [vmem:[#allocation2 + $0xd8] sm:$0xff]
        %v679 = vld [vmem:[#allocation2 + $0xe0] sm:$0xff]
        %v680 = vld [vmem:[#allocation2 + $0xf0] sm:$0xff]
        %v681 = vld [vmem:[#allocation2 + $0xf8] sm:$0xff]
        %v682 = vld [vmem:[#allocation2 + $0x108] sm:$0xff]
        %v683 = vld [vmem:[#allocation2 + $0x110] sm:$0xff]
        %v684 = vld [vmem:[#allocation2 + $0x120] sm:$0xff]
        %v685 = vld [vmem:[#allocation2 + $0x128] sm:$0xff]
        %v686 = vld [vmem:[#allocation2 + $0x138] sm:$0xff]
        %v687 = vld [vmem:[#allocation2 + $0x140] sm:$0xff]
        %v688 = vld [vmem:[#allocation2 + $0x150] sm:$0xff]
        %v689 = vld [vmem:[#allocation2 + $0x158] sm:$0xff]
        %v690 = vld [vmem:[#allocation2 + $0x168] sm:$0xff]
        %v691 = vld [vmem:[#allocation2 + $0x170] sm:$0xff]
        %693 = vset.pattern.permute.xlu0 0
        %694 = vperm.xlu0 %693, %v644
        %v695 = vpop.permute.xlu0 %694
        %698 = vset.pattern.permute.xlu0 0
        %699 = vperm.xlu0 %698, %v645
        %v700 = vpop.permute.xlu0 %699
        %703 = vset.pattern.permute.xlu0 0
        %704 = vperm.xlu0 %703, %v646
        %v705 = vpop.permute.xlu0 %704
        %708 = vset.pattern.permute.xlu0 0
        %709 = vperm.xlu0 %708, %v647
        %v710 = vpop.permute.xlu0 %709
        %713 = vset.pattern.permute.xlu0 0
        %714 = vperm.xlu0 %713, %v648
        %v715 = vpop.permute.xlu0 %714
        %718 = vset.pattern.permute.xlu0 0
        %719 = vperm.xlu0 %718, %v649
        %v720 = vpop.permute.xlu0 %719
        %723 = vset.pattern.permute.xlu0 0
        %724 = vperm.xlu0 %723, %v650
        %v725 = vpop.permute.xlu0 %724
        %728 = vset.pattern.permute.xlu0 0
        %729 = vperm.xlu0 %728, %v651
        %v730 = vpop.permute.xlu0 %729
        %733 = vset.pattern.permute.xlu0 0
        %734 = vperm.xlu0 %733, %v652
        %v735 = vpop.permute.xlu0 %734
        %738 = vset.pattern.permute.xlu0 0
        %739 = vperm.xlu0 %738, %v653
        %v740 = vpop.permute.xlu0 %739
        %743 = vset.pattern.permute.xlu0 0
        %744 = vperm.xlu0 %743, %v654
        %v745 = vpop.permute.xlu0 %744
        %748 = vset.pattern.permute.xlu0 0
        %749 = vperm.xlu0 %748, %v655
        %v750 = vpop.permute.xlu0 %749
        %753 = vset.pattern.permute.xlu0 0
        %754 = vperm.xlu0 %753, %v656
        %v755 = vpop.permute.xlu0 %754
        %758 = vset.pattern.permute.xlu0 0
        %759 = vperm.xlu0 %758, %v657
        %v760 = vpop.permute.xlu0 %759
        %763 = vset.pattern.permute.xlu0 0
        %764 = vperm.xlu0 %763, %v658
        %v765 = vpop.permute.xlu0 %764
        %768 = vset.pattern.permute.xlu0 0
        %769 = vperm.xlu0 %768, %v659
        %v770 = vpop.permute.xlu0 %769
        %v772 = vmul.f32 %v695, %v660
        %v773 = vmul.f32 %v695, %v661
        %v774 = vmul.f32 %v700, %v662
        %v775 = vmul.f32 %v700, %v663
        %v776 = vmul.f32 %v705, %v664
        %v777 = vmul.f32 %v705, %v665
        %v778 = vmul.f32 %v710, %v666
        %v779 = vmul.f32 %v710, %v667
        %v780 = vmul.f32 %v715, %v668
        %v781 = vmul.f32 %v715, %v669
        %v782 = vmul.f32 %v720, %v670
        %v783 = vmul.f32 %v720, %v671
        %v784 = vmul.f32 %v725, %v672
        %v785 = vmul.f32 %v725, %v673
        %v786 = vmul.f32 %v730, %v674
        %v787 = vmul.f32 %v730, %v675
        %v788 = vmul.f32 %v735, %v676
        %v789 = vmul.f32 %v735, %v677
        %v790 = vmul.f32 %v740, %v678
        %v791 = vmul.f32 %v740, %v679
        %v792 = vmul.f32 %v745, %v680
        %v793 = vmul.f32 %v745, %v681
        %v794 = vmul.f32 %v750, %v682
        %v795 = vmul.f32 %v750, %v683
        %v796 = vmul.f32 %v755, %v684
        %v797 = vmul.f32 %v755, %v685
        %v798 = vmul.f32 %v760, %v686
        %v799 = vmul.f32 %v760, %v687
        %v800 = vmul.f32 %v765, %v688
        %v801 = vmul.f32 %v765, %v689
        %v802 = vmul.f32 %v770, %v690
        %v803 = vmul.f32 %v770, %v691
        %v804 = vld [vmem:[#allocation2] sm:$0xff]
        %v805 = vld [vmem:[#allocation2 + $0x8] sm:$0xff]
        %v806 = vld [vmem:[#allocation2 + $0x10] sm:$0xff]
        %v807 = vld [vmem:[#allocation2 + $0x18] sm:$0xff]
        %v808 = vld [vmem:[#allocation2 + $0x20] sm:$0xff]
        %v809 = vld [vmem:[#allocation2 + $0x28] sm:$0xff]
        %v810 = vld [vmem:[#allocation2 + $0x30] sm:$0xff]
        %v811 = vld [vmem:[#allocation2 + $0x38] sm:$0xff]
        %v812 = vld [vmem:[#allocation2 + $0x40] sm:$0xff]
        %v813 = vld [vmem:[#allocation2 + $0x48] sm:$0xff]
        %v814 = vld [vmem:[#allocation2 + $0x50] sm:$0xff]
        %v815 = vld [vmem:[#allocation2 + $0x58] sm:$0xff]
        %v816 = vld [vmem:[#allocation2 + $0x60] sm:$0xff]
        %v817 = vld [vmem:[#allocation2 + $0x68] sm:$0xff]
        %v818 = vld [vmem:[#allocation2 + $0x70] sm:$0xff]
        %v819 = vld [vmem:[#allocation2 + $0x78] sm:$0xff]
        %v820 = vld [vmem:[#allocation2 + $0x80] sm:$0xff]
        %v821 = vld [vmem:[#allocation2 + $0x88] sm:$0xff]
        %v822 = vld [vmem:[#allocation2 + $0x90] sm:$0xff]
        %v823 = vld [vmem:[#allocation2 + $0x98] sm:$0xff]
        %v824 = vld [vmem:[#allocation2 + $0xa0] sm:$0xff]
        %v825 = vld [vmem:[#allocation2 + $0xa8] sm:$0xff]
        %v826 = vld [vmem:[#allocation2 + $0xb0] sm:$0xff]
        %v827 = vld [vmem:[#allocation2 + $0xb8] sm:$0xff]
        %v828 = vld [vmem:[#allocation2 + $0xc0] sm:$0xff]
        %v829 = vld [vmem:[#allocation2 + $0xc8] sm:$0xff]
        %v830 = vld [vmem:[#allocation2 + $0xd0] sm:$0xff]
        %v831 = vld [vmem:[#allocation2 + $0xd8] sm:$0xff]
        %v832 = vld [vmem:[#allocation2 + $0xe0] sm:$0xff]
        %v833 = vld [vmem:[#allocation2 + $0xe8] sm:$0xff]
        %v834 = vld [vmem:[#allocation2 + $0xf0] sm:$0xff]
        %v835 = vld [vmem:[#allocation2 + $0xf8] sm:$0xff]
        %v836 = vld [vmem:[#allocation2 + $0x100] sm:$0xff]
        %v837 = vld [vmem:[#allocation2 + $0x108] sm:$0xff]
        %v838 = vld [vmem:[#allocation2 + $0x110] sm:$0xff]
        %v839 = vld [vmem:[#allocation2 + $0x118] sm:$0xff]
        %v840 = vld [vmem:[#allocation2 + $0x120] sm:$0xff]
        %v841 = vld [vmem:[#allocation2 + $0x128] sm:$0xff]
        %v842 = vld [vmem:[#allocation2 + $0x130] sm:$0xff]
        %v843 = vld [vmem:[#allocation2 + $0x138] sm:$0xff]
        %v844 = vld [vmem:[#allocation2 + $0x140] sm:$0xff]
        %v845 = vld [vmem:[#allocation2 + $0x148] sm:$0xff]
        %v846 = vld [vmem:[#allocation2 + $0x150] sm:$0xff]
        %v847 = vld [vmem:[#allocation2 + $0x158] sm:$0xff]
        %v848 = vld [vmem:[#allocation2 + $0x160] sm:$0xff]
        %v849 = vld [vmem:[#allocation2 + $0x168] sm:$0xff]
        %v850 = vld [vmem:[#allocation2 + $0x170] sm:$0xff]
        %v851 = vld [vmem:[#allocation2 + $0x178] sm:$0xff]
        %852 = vset.pattern.permute.xlu0 1
        %853 = vperm.xlu0 %852, %v644
        %v854 = vpop.permute.xlu0 %853
        %856 = vset.pattern.permute.xlu0 1
        %857 = vperm.xlu0 %856, %v645
        %v858 = vpop.permute.xlu0 %857
        %860 = vset.pattern.permute.xlu0 1
        %861 = vperm.xlu0 %860, %v646
        %v862 = vpop.permute.xlu0 %861
        %864 = vset.pattern.permute.xlu0 1
        %865 = vperm.xlu0 %864, %v647
        %v866 = vpop.permute.xlu0 %865
        %868 = vset.pattern.permute.xlu0 1
        %869 = vperm.xlu0 %868, %v648
        %v870 = vpop.permute.xlu0 %869
        %872 = vset.pattern.permute.xlu0 1
        %873 = vperm.xlu0 %872, %v649
        %v874 = vpop.permute.xlu0 %873
        %876 = vset.pattern.permute.xlu0 1
        %877 = vperm.xlu0 %876, %v650
        %v878 = vpop.permute.xlu0 %877
        %880 = vset.pattern.permute.xlu0 1
        %881 = vperm.xlu0 %880, %v651
        %v882 = vpop.permute.xlu0 %881
        %884 = vset.pattern.permute.xlu0 1
        %885 = vperm.xlu0 %884, %v652
        %v886 = vpop.permute.xlu0 %885
        %888 = vset.pattern.permute.xlu0 1
        %889 = vperm.xlu0 %888, %v653
        %v890 = vpop.permute.xlu0 %889
        %892 = vset.pattern.permute.xlu0 1
        %893 = vperm.xlu0 %892, %v654
        %v894 = vpop.permute.xlu0 %893
        %896 = vset.pattern.permute.xlu0 1
        %897 = vperm.xlu0 %896, %v655
        %v898 = vpop.permute.xlu0 %897
        %900 = vset.pattern.permute.xlu0 1
        %901 = vperm.xlu0 %900, %v656
        %v902 = vpop.permute.xlu0 %901
        %904 = vset.pattern.permute.xlu0 1
        %905 = vperm.xlu0 %904, %v657
        %v906 = vpop.permute.xlu0 %905
        %908 = vset.pattern.permute.xlu0 1
        %909 = vperm.xlu0 %908, %v658
        %v910 = vpop.permute.xlu0 %909
        %912 = vset.pattern.permute.xlu0 1
        %913 = vperm.xlu0 %912, %v659
        %v914 = vpop.permute.xlu0 %913
        %v916 = vmul.f32 %v854, %v804
        %v917 = vmul.f32 %v854, %v805
        %v918 = vmul.f32 %v854, %v806
        %v919 = vmul.f32 %v858, %v807
        %v920 = vmul.f32 %v858, %v808
        %v921 = vmul.f32 %v858, %v809
        %v922 = vmul.f32 %v862, %v810
        %v923 = vmul.f32 %v862, %v811
        %v924 = vmul.f32 %v862, %v812
        %v925 = vmul.f32 %v866, %v813
        %v926 = vmul.f32 %v866, %v814
        %v927 = vmul.f32 %v866, %v815
        %v928 = vmul.f32 %v870, %v816
        %v929 = vmul.f32 %v870, %v817
        %v930 = vmul.f32 %v870, %v818
        %v931 = vmul.f32 %v874, %v819
        %v932 = vmul.f32 %v874, %v820
        %v933 = vmul.f32 %v874, %v821
        %v934 = vmul.f32 %v878, %v822
        %v935 = vmul.f32 %v878, %v823
        %v936 = vmul.f32 %v878, %v824
        %v937 = vmul.f32 %v882, %v825
        %v938 = vmul.f32 %v882, %v826
        %v939 = vmul.f32 %v882, %v827
        %v940 = vmul.f32 %v886, %v828
        %v941 = vmul.f32 %v886, %v829
        %v942 = vmul.f32 %v886, %v830
        %v943 = vmul.f32 %v890, %v831
        %v944 = vmul.f32 %v890, %v832
        %v945 = vmul.f32 %v890, %v833
        %v946 = vmul.f32 %v894, %v834
        %v947 = vmul.f32 %v894, %v835
        %v948 = vmul.f32 %v894, %v836
        %v949 = vmul.f32 %v898, %v837
        %v950 = vmul.f32 %v898, %v838
        %v951 = vmul.f32 %v898, %v839
        %v952 = vmul.f32 %v902, %v840
        %v953 = vmul.f32 %v902, %v841
        %v954 = vmul.f32 %v902, %v842
        %v955 = vmul.f32 %v906, %v843
        %v956 = vmul.f32 %v906, %v844
        %v957 = vmul.f32 %v906, %v845
        %v958 = vmul.f32 %v910, %v846
        %v959 = vmul.f32 %v910, %v847
        %v960 = vmul.f32 %v910, %v848
        %v961 = vmul.f32 %v914, %v849
        %v962 = vmul.f32 %v914, %v850
        %v963 = vmul.f32 %v914, %v851
        %1012 = vrot.lane.b32.xlu0 %v916, 127
        %v1013 = vpop.permute.xlu0 %1012
        %1014 = vrot.lane.b32.xlu0 %v917, 127
        %v1015 = vpop.permute.xlu0 %1014
        %1016 = vrot.lane.b32.xlu0 %v918, 127
        %v1017 = vpop.permute.xlu0 %1016
        %1018 = vrot.lane.b32.xlu0 %v919, 127
        %v1019 = vpop.permute.xlu0 %1018
        %1020 = vrot.lane.b32.xlu0 %v920, 127
        %v1021 = vpop.permute.xlu0 %1020
        %1022 = vrot.lane.b32.xlu0 %v921, 127
        %v1023 = vpop.permute.xlu0 %1022
        %1024 = vrot.lane.b32.xlu0 %v922, 127
        %v1025 = vpop.permute.xlu0 %1024
        %1026 = vrot.lane.b32.xlu0 %v923, 127
        %v1027 = vpop.permute.xlu0 %1026
        %1028 = vrot.lane.b32.xlu0 %v924, 127
        %v1029 = vpop.permute.xlu0 %1028
        %1030 = vrot.lane.b32.xlu0 %v925, 127
        %v1031 = vpop.permute.xlu0 %1030
        %1032 = vrot.lane.b32.xlu0 %v926, 127
        %v1033 = vpop.permute.xlu0 %1032
        %1034 = vrot.lane.b32.xlu0 %v927, 127
        %v1035 = vpop.permute.xlu0 %1034
        %1036 = vrot.lane.b32.xlu0 %v928, 127
        %v1037 = vpop.permute.xlu0 %1036
        %1038 = vrot.lane.b32.xlu0 %v929, 127
        %v1039 = vpop.permute.xlu0 %1038
        %1040 = vrot.lane.b32.xlu0 %v930, 127
        %v1041 = vpop.permute.xlu0 %1040
        %1042 = vrot.lane.b32.xlu0 %v931, 127
        %v1043 = vpop.permute.xlu0 %1042
        %1044 = vrot.lane.b32.xlu0 %v932, 127
        %v1045 = vpop.permute.xlu0 %1044
        %1046 = vrot.lane.b32.xlu0 %v933, 127
        %v1047 = vpop.permute.xlu0 %1046
        %1048 = vrot.lane.b32.xlu0 %v934, 127
        %v1049 = vpop.permute.xlu0 %1048
        %1050 = vrot.lane.b32.xlu0 %v935, 127
        %v1051 = vpop.permute.xlu0 %1050
        %1052 = vrot.lane.b32.xlu0 %v936, 127
        %v1053 = vpop.permute.xlu0 %1052
        %1054 = vrot.lane.b32.xlu0 %v937, 127
        %v1055 = vpop.permute.xlu0 %1054
        %1056 = vrot.lane.b32.xlu0 %v938, 127
        %v1057 = vpop.permute.xlu0 %1056
        %1058 = vrot.lane.b32.xlu0 %v939, 127
        %v1059 = vpop.permute.xlu0 %1058
        %1060 = vrot.lane.b32.xlu0 %v940, 127
        %v1061 = vpop.permute.xlu0 %1060
        %1062 = vrot.lane.b32.xlu0 %v941, 127
        %v1063 = vpop.permute.xlu0 %1062
        %1064 = vrot.lane.b32.xlu0 %v942, 127
        %v1065 = vpop.permute.xlu0 %1064
        %1066 = vrot.lane.b32.xlu0 %v943, 127
        %v1067 = vpop.permute.xlu0 %1066
        %1068 = vrot.lane.b32.xlu0 %v944, 127
        %v1069 = vpop.permute.xlu0 %1068
        %1070 = vrot.lane.b32.xlu0 %v945, 127
        %v1071 = vpop.permute.xlu0 %1070
        %1072 = vrot.lane.b32.xlu0 %v946, 127
        %v1073 = vpop.permute.xlu0 %1072
        %1074 = vrot.lane.b32.xlu0 %v947, 127
        %v1075 = vpop.permute.xlu0 %1074
        %1076 = vrot.lane.b32.xlu0 %v948, 127
        %v1077 = vpop.permute.xlu0 %1076
        %1078 = vrot.lane.b32.xlu0 %v949, 127
        %v1079 = vpop.permute.xlu0 %1078
        %1080 = vrot.lane.b32.xlu0 %v950, 127
        %v1081 = vpop.permute.xlu0 %1080
        %1082 = vrot.lane.b32.xlu0 %v951, 127
        %v1083 = vpop.permute.xlu0 %1082
        %1084 = vrot.lane.b32.xlu0 %v952, 127
        %v1085 = vpop.permute.xlu0 %1084
        %1086 = vrot.lane.b32.xlu0 %v953, 127
        %v1087 = vpop.permute.xlu0 %1086
        %1088 = vrot.lane.b32.xlu0 %v954, 127
        %v1089 = vpop.permute.xlu0 %1088
        %1090 = vrot.lane.b32.xlu0 %v955, 127
        %v1091 = vpop.permute.xlu0 %1090
        %1092 = vrot.lane.b32.xlu0 %v956, 127
        %v1093 = vpop.permute.xlu0 %1092
        %1094 = vrot.lane.b32.xlu0 %v957, 127
        %v1095 = vpop.permute.xlu0 %1094
        %1096 = vrot.lane.b32.xlu0 %v958, 127
        %v1097 = vpop.permute.xlu0 %1096
        %1098 = vrot.lane.b32.xlu0 %v959, 127
        %v1099 = vpop.permute.xlu0 %1098
        %1100 = vrot.lane.b32.xlu0 %v960, 127
        %v1101 = vpop.permute.xlu0 %1100
        %1102 = vrot.lane.b32.xlu0 %v961, 127
        %v1103 = vpop.permute.xlu0 %1102
        %1104 = vrot.lane.b32.xlu0 %v962, 127
        %v1105 = vpop.permute.xlu0 %1104
        %1106 = vrot.lane.b32.xlu0 %v963, 127
        %v1107 = vpop.permute.xlu0 %1106
        %vm1108 = vcmask 1039360
        %v1109 = vsel %vm1108, %v1013, %v1015
        %v1110 = vsel %vm1108, %v1015, %v1017
        %v1111 = vsel %vm1108, %v1019, %v1021
        %v1112 = vsel %vm1108, %v1021, %v1023
        %v1113 = vsel %vm1108, %v1025, %v1027
        %v1114 = vsel %vm1108, %v1027, %v1029
        %v1115 = vsel %vm1108, %v1031, %v1033
        %v1116 = vsel %vm1108, %v1033, %v1035
        %v1117 = vsel %vm1108, %v1037, %v1039
        %v1118 = vsel %vm1108, %v1039, %v1041
        %v1119 = vsel %vm1108, %v1043, %v1045
        %v1120 = vsel %vm1108, %v1045, %v1047
        %v1121 = vsel %vm1108, %v1049, %v1051
        %v1122 = vsel %vm1108, %v1051, %v1053
        %v1123 = vsel %vm1108, %v1055, %v1057
        %v1124 = vsel %vm1108, %v1057, %v1059
        %v1125 = vsel %vm1108, %v1061, %v1063
        %v1126 = vsel %vm1108, %v1063, %v1065
        %v1127 = vsel %vm1108, %v1067, %v1069
        %v1128 = vsel %vm1108, %v1069, %v1071
        %v1129 = vsel %vm1108, %v1073, %v1075
        %v1130 = vsel %vm1108, %v1075, %v1077
        %v1131 = vsel %vm1108, %v1079, %v1081
        %v1132 = vsel %vm1108, %v1081, %v1083
        %v1133 = vsel %vm1108, %v1085, %v1087
        %v1134 = vsel %vm1108, %v1087, %v1089
        %v1135 = vsel %vm1108, %v1091, %v1093
        %v1136 = vsel %vm1108, %v1093, %v1095
        %v1137 = vsel %vm1108, %v1097, %v1099
        %v1138 = vsel %vm1108, %v1099, %v1101
        %v1139 = vsel %vm1108, %v1103, %v1105
        %v1140 = vsel %vm1108, %v1105, %v1107
        %v1173 = vadd.f32 %v772, %v1109
        %v1174 = vadd.f32 %v773, %v1110
        %v1175 = vadd.f32 %v774, %v1111
        %v1176 = vadd.f32 %v775, %v1112
        %v1177 = vadd.f32 %v776, %v1113
        %v1178 = vadd.f32 %v777, %v1114
        %v1179 = vadd.f32 %v778, %v1115
        %v1180 = vadd.f32 %v779, %v1116
        %v1181 = vadd.f32 %v780, %v1117
        %v1182 = vadd.f32 %v781, %v1118
        %v1183 = vadd.f32 %v782, %v1119
        %v1184 = vadd.f32 %v783, %v1120
        %v1185 = vadd.f32 %v784, %v1121
        %v1186 = vadd.f32 %v785, %v1122
        %v1187 = vadd.f32 %v786, %v1123
        %v1188 = vadd.f32 %v787, %v1124
        %v1189 = vadd.f32 %v788, %v1125
        %v1190 = vadd.f32 %v789, %v1126
        %v1191 = vadd.f32 %v790, %v1127
        %v1192 = vadd.f32 %v791, %v1128
        %v1193 = vadd.f32 %v792, %v1129
        %v1194 = vadd.f32 %v793, %v1130
        %v1195 = vadd.f32 %v794, %v1131
        %v1196 = vadd.f32 %v795, %v1132
        %v1197 = vadd.f32 %v796, %v1133
        %v1198 = vadd.f32 %v797, %v1134
        %v1199 = vadd.f32 %v798, %v1135
        %v1200 = vadd.f32 %v799, %v1136
        %v1201 = vadd.f32 %v800, %v1137
        %v1202 = vadd.f32 %v801, %v1138
        %v1203 = vadd.f32 %v802, %v1139
        %v1204 = vadd.f32 %v803, %v1140
        %1205 = vset.pattern.permute.xlu0 2
        %1206 = vperm.xlu0 %1205, %v644
        %v1207 = vpop.permute.xlu0 %1206
        %1209 = vset.pattern.permute.xlu0 2
        %1210 = vperm.xlu0 %1209, %v645
        %v1211 = vpop.permute.xlu0 %1210
        %1213 = vset.pattern.permute.xlu0 2
        %1214 = vperm.xlu0 %1213, %v646
        %v1215 = vpop.permute.xlu0 %1214
        %1217 = vset.pattern.permute.xlu0 2
        %1218 = vperm.xlu0 %1217, %v647
        %v1219 = vpop.permute.xlu0 %1218
        %1221 = vset.pattern.permute.xlu0 2
        %1222 = vperm.xlu0 %1221, %v648
        %v1223 = vpop.permute.xlu0 %1222
        %1225 = vset.pattern.permute.xlu0 2
        %1226 = vperm.xlu0 %1225, %v649
        %v1227 = vpop.permute.xlu0 %1226
        %1229 = vset.pattern.permute.xlu0 2
        %1230 = vperm.xlu0 %1229, %v650
        %v1231 = vpop.permute.xlu0 %1230
        %1233 = vset.pattern.permute.xlu0 2
        %1234 = vperm.xlu0 %1233, %v651
        %v1235 = vpop.permute.xlu0 %1234
        %1237 = vset.pattern.permute.xlu0 2
        %1238 = vperm.xlu0 %1237, %v652
        %v1239 = vpop.permute.xlu0 %1238
        %1241 = vset.pattern.permute.xlu0 2
        %1242 = vperm.xlu0 %1241, %v653
        %v1243 = vpop.permute.xlu0 %1242
        %1245 = vset.pattern.permute.xlu0 2
        %1246 = vperm.xlu0 %1245, %v654
        %v1247 = vpop.permute.xlu0 %1246
        %1249 = vset.pattern.permute.xlu0 2
        %1250 = vperm.xlu0 %1249, %v655
        %v1251 = vpop.permute.xlu0 %1250
        %1253 = vset.pattern.permute.xlu0 2
        %1254 = vperm.xlu0 %1253, %v656
        %v1255 = vpop.permute.xlu0 %1254
        %1257 = vset.pattern.permute.xlu0 2
        %1258 = vperm.xlu0 %1257, %v657
        %v1259 = vpop.permute.xlu0 %1258
        %1261 = vset.pattern.permute.xlu0 2
        %1262 = vperm.xlu0 %1261, %v658
        %v1263 = vpop.permute.xlu0 %1262
        %1265 = vset.pattern.permute.xlu0 2
        %1266 = vperm.xlu0 %1265, %v659
        %v1267 = vpop.permute.xlu0 %1266
        %v1269 = vmul.f32 %v1207, %v805
        %v1270 = vmul.f32 %v1207, %v806
        %v1271 = vmul.f32 %v1211, %v808
        %v1272 = vmul.f32 %v1211, %v809
        %v1273 = vmul.f32 %v1215, %v811
        %v1274 = vmul.f32 %v1215, %v812
        %v1275 = vmul.f32 %v1219, %v814
        %v1276 = vmul.f32 %v1219, %v815
        %v1277 = vmul.f32 %v1223, %v817
        %v1278 = vmul.f32 %v1223, %v818
        %v1279 = vmul.f32 %v1227, %v820
        %v1280 = vmul.f32 %v1227, %v821
        %v1281 = vmul.f32 %v1231, %v823
        %v1282 = vmul.f32 %v1231, %v824
        %v1283 = vmul.f32 %v1235, %v826
        %v1284 = vmul.f32 %v1235, %v827
        %v1285 = vmul.f32 %v1239, %v829
        %v1286 = vmul.f32 %v1239, %v830
        %v1287 = vmul.f32 %v1243, %v832
        %v1288 = vmul.f32 %v1243, %v833
        %v1289 = vmul.f32 %v1247, %v835
        %v1290 = vmul.f32 %v1247, %v836
        %v1291 = vmul.f32 %v1251, %v838
        %v1292 = vmul.f32 %v1251, %v839
        %v1293 = vmul.f32 %v1255, %v841
        %v1294 = vmul.f32 %v1255, %v842
        %v1295 = vmul.f32 %v1259, %v844
        %v1296 = vmul.f32 %v1259, %v845
        %v1297 = vmul.f32 %v1263, %v847
        %v1298 = vmul.f32 %v1263, %v848
        %v1299 = vmul.f32 %v1267, %v850
        %v1300 = vmul.f32 %v1267, %v851
        %1333 = vrot.lane.b32.xlu0 %v1269, 126
        %v1334 = vpop.permute.xlu0 %1333
        %1335 = vrot.lane.b32.xlu0 %v1270, 126
        %v1336 = vpop.permute.xlu0 %1335
        %1337 = vrot.lane.b32.xlu0 %v1271, 126
        %v1338 = vpop.permute.xlu0 %1337
        %1339 = vrot.lane.b32.xlu0 %v1272, 126
        %v1340 = vpop.permute.xlu0 %1339
        %1341 = vrot.lane.b32.xlu0 %v1273, 126
        %v1342 = vpop.permute.xlu0 %1341
        %1343 = vrot.lane.b32.xlu0 %v1274, 126
        %v1344 = vpop.permute.xlu0 %1343
        %1345 = vrot.lane.b32.xlu0 %v1275, 126
        %v1346 = vpop.permute.xlu0 %1345
        %1347 = vrot.lane.b32.xlu0 %v1276, 126
        %v1348 = vpop.permute.xlu0 %1347
        %1349 = vrot.lane.b32.xlu0 %v1277, 126
        %v1350 = vpop.permute.xlu0 %1349
        %1351 = vrot.lane.b32.xlu0 %v1278, 126
        %v1352 = vpop.permute.xlu0 %1351
        %1353 = vrot.lane.b32.xlu0 %v1279, 126
        %v1354 = vpop.permute.xlu0 %1353
        %1355 = vrot.lane.b32.xlu0 %v1280, 126
        %v1356 = vpop.permute.xlu0 %1355
        %1357 = vrot.lane.b32.xlu0 %v1281, 126
        %v1358 = vpop.permute.xlu0 %1357
        %1359 = vrot.lane.b32.xlu0 %v1282, 126
        %v1360 = vpop.permute.xlu0 %1359
        %1361 = vrot.lane.b32.xlu0 %v1283, 126
        %v1362 = vpop.permute.xlu0 %1361
        %1363 = vrot.lane.b32.xlu0 %v1284, 126
        %v1364 = vpop.permute.xlu0 %1363
        %1365 = vrot.lane.b32.xlu0 %v1285, 126
        %v1366 = vpop.permute.xlu0 %1365
        %1367 = vrot.lane.b32.xlu0 %v1286, 126
        %v1368 = vpop.permute.xlu0 %1367
        %1369 = vrot.lane.b32.xlu0 %v1287, 126
        %v1370 = vpop.permute.xlu0 %1369
        %1371 = vrot.lane.b32.xlu0 %v1288, 126
        %v1372 = vpop.permute.xlu0 %1371
        %1373 = vrot.lane.b32.xlu0 %v1289, 126
        %v1374 = vpop.permute.xlu0 %1373
        %1375 = vrot.lane.b32.xlu0 %v1290, 126
        %v1376 = vpop.permute.xlu0 %1375
        %1377 = vrot.lane.b32.xlu0 %v1291, 126
        %v1378 = vpop.permute.xlu0 %1377
        %1379 = vrot.lane.b32.xlu0 %v1292, 126
        %v1380 = vpop.permute.xlu0 %1379
        %1381 = vrot.lane.b32.xlu0 %v1293, 126
        %v1382 = vpop.permute.xlu0 %1381
        %1383 = vrot.lane.b32.xlu0 %v1294, 126
        %v1384 = vpop.permute.xlu0 %1383
        %1385 = vrot.lane.b32.xlu0 %v1295, 126
        %v1386 = vpop.permute.xlu0 %1385
        %1387 = vrot.lane.b32.xlu0 %v1296, 126
        %v1388 = vpop.permute.xlu0 %1387
        %1389 = vrot.lane.b32.xlu0 %v1297, 126
        %v1390 = vpop.permute.xlu0 %1389
        %1391 = vrot.lane.b32.xlu0 %v1298, 126
        %v1392 = vpop.permute.xlu0 %1391
        %1393 = vrot.lane.b32.xlu0 %v1299, 126
        %v1394 = vpop.permute.xlu0 %1393
        %1395 = vrot.lane.b32.xlu0 %v1300, 126
        %v1396 = vpop.permute.xlu0 %1395
        %vm1397 = vcmask 1031168
        %v1398 = vsel %vm1397, %v1334, %v1336
        %v1399 = vsel %vm1397, %v1338, %v1340
        %v1400 = vsel %vm1397, %v1342, %v1344
        %v1401 = vsel %vm1397, %v1346, %v1348
        %v1402 = vsel %vm1397, %v1350, %v1352
        %v1403 = vsel %vm1397, %v1354, %v1356
        %v1404 = vsel %vm1397, %v1358, %v1360
        %v1405 = vsel %vm1397, %v1362, %v1364
        %v1406 = vsel %vm1397, %v1366, %v1368
        %v1407 = vsel %vm1397, %v1370, %v1372
        %v1408 = vsel %vm1397, %v1374, %v1376
        %v1409 = vsel %vm1397, %v1378, %v1380
        %v1410 = vsel %vm1397, %v1382, %v1384
        %v1411 = vsel %vm1397, %v1386, %v1388
        %v1412 = vsel %vm1397, %v1390, %v1392
        %v1413 = vsel %vm1397, %v1394, %v1396
        %v1446 = vadd.f32 %v1173, %v1334
        %v1447 = vadd.f32 %v1174, %v1398
        %v1448 = vadd.f32 %v1175, %v1338
        %v1449 = vadd.f32 %v1176, %v1399
        %v1450 = vadd.f32 %v1177, %v1342
        %v1451 = vadd.f32 %v1178, %v1400
        %v1452 = vadd.f32 %v1179, %v1346
        %v1453 = vadd.f32 %v1180, %v1401
        %v1454 = vadd.f32 %v1181, %v1350
        %v1455 = vadd.f32 %v1182, %v1402
        %v1456 = vadd.f32 %v1183, %v1354
        %v1457 = vadd.f32 %v1184, %v1403
        %v1458 = vadd.f32 %v1185, %v1358
        %v1459 = vadd.f32 %v1186, %v1404
        %v1460 = vadd.f32 %v1187, %v1362
        %v1461 = vadd.f32 %v1188, %v1405
        %v1462 = vadd.f32 %v1189, %v1366
        %v1463 = vadd.f32 %v1190, %v1406
        %v1464 = vadd.f32 %v1191, %v1370
        %v1465 = vadd.f32 %v1192, %v1407
        %v1466 = vadd.f32 %v1193, %v1374
        %v1467 = vadd.f32 %v1194, %v1408
        %v1468 = vadd.f32 %v1195, %v1378
        %v1469 = vadd.f32 %v1196, %v1409
        %v1470 = vadd.f32 %v1197, %v1382
        %v1471 = vadd.f32 %v1198, %v1410
        %v1472 = vadd.f32 %v1199, %v1386
        %v1473 = vadd.f32 %v1200, %v1411
        %v1474 = vadd.f32 %v1201, %v1390
        %v1475 = vadd.f32 %v1202, %v1412
        %v1476 = vadd.f32 %v1203, %v1394
        %v1477 = vadd.f32 %v1204, %v1413
        %v1478 = vld [vmem:[%s3] sm:$0xf]
        %v1479 = vld [vmem:[%s3 + $0x4] sm:$0xf]
        %v1480 = vld [vmem:[%s3 + $0x8] sm:$0xf]
        %v1481 = vld [vmem:[%s3 + $0xc] sm:$0xf]
        %v1482 = vld [vmem:[%s3 + $0x10] sm:$0xf]
        %v1483 = vld [vmem:[%s3 + $0x14] sm:$0xf]
        %v1484 = vld [vmem:[%s3 + $0x18] sm:$0xf]
        %v1485 = vld [vmem:[%s3 + $0x1c] sm:$0xf]
        %v1486 = vld [vmem:[%s3 + $0x20] sm:$0xf]
        %v1487 = vld [vmem:[%s3 + $0x24] sm:$0xf]
        %v1488 = vld [vmem:[%s3 + $0x28] sm:$0xf]
        %v1489 = vld [vmem:[%s3 + $0x2c] sm:$0xf]
        %v1490 = vld [vmem:[%s3 + $0x30] sm:$0xf]
        %v1491 = vld [vmem:[%s3 + $0x34] sm:$0xf]
        %v1492 = vld [vmem:[%s3 + $0x38] sm:$0xf]
        %v1493 = vld [vmem:[%s3 + $0x3c] sm:$0xf]
        %v1494 = vpack.c.bf16 %v1448, %v1446
        %v1495 = vpack.c.bf16 %v1449, %v1447
        %v1496 = vpack.c.bf16 %v1452, %v1450
        %v1497 = vpack.c.bf16 %v1453, %v1451
        %v1498 = vpack.c.bf16 %v1456, %v1454
        %v1499 = vpack.c.bf16 %v1457, %v1455
        %v1500 = vpack.c.bf16 %v1460, %v1458
        %v1501 = vpack.c.bf16 %v1461, %v1459
        %v1502 = vpack.c.bf16 %v1464, %v1462
        %v1503 = vpack.c.bf16 %v1465, %v1463
        %v1504 = vpack.c.bf16 %v1468, %v1466
        %v1505 = vpack.c.bf16 %v1469, %v1467
        %v1506 = vpack.c.bf16 %v1472, %v1470
        %v1507 = vpack.c.bf16 %v1473, %v1471
        %v1508 = vpack.c.bf16 %v1476, %v1474
        %v1509 = vpack.c.bf16 %v1477, %v1475
        %v1510 = vld [vmem:[%s4] sm:$0xff]
        %v1511 = vld [vmem:[%s4 + $0x8] sm:$0xff]
        %v1512 = vld [vmem:[%s4 + $0x10] sm:$0xff]
        %v1513 = vld [vmem:[%s4 + $0x18] sm:$0xff]
        %v1514 = vld [vmem:[%s4 + $0x20] sm:$0xff]
        %v1515 = vld [vmem:[%s4 + $0x28] sm:$0xff]
        %v1516 = vld [vmem:[%s4 + $0x30] sm:$0xff]
        %v1517 = vld [vmem:[%s4 + $0x38] sm:$0xff]
        %v1518 = vld [vmem:[%s4 + $0x40] sm:$0xff]
        %v1519 = vld [vmem:[%s4 + $0x48] sm:$0xff]
        %v1520 = vld [vmem:[%s4 + $0x50] sm:$0xff]
        %v1521 = vld [vmem:[%s4 + $0x58] sm:$0xff]
        %v1522 = vld [vmem:[%s4 + $0x60] sm:$0xff]
        %v1523 = vld [vmem:[%s4 + $0x68] sm:$0xff]
        %v1524 = vld [vmem:[%s4 + $0x70] sm:$0xff]
        %v1525 = vld [vmem:[%s4 + $0x78] sm:$0xff]
        %1527 = vset.pattern.permute.xlu0 0
        %1528 = vperm.xlu0 %1527, %v1510
        %v1529 = vpop.permute.xlu0 %1528
        %1532 = vset.pattern.permute.xlu0 0
        %1533 = vperm.xlu0 %1532, %v1511
        %v1534 = vpop.permute.xlu0 %1533
        %1537 = vset.pattern.permute.xlu0 0
        %1538 = vperm.xlu0 %1537, %v1512
        %v1539 = vpop.permute.xlu0 %1538
        %1542 = vset.pattern.permute.xlu0 0
        %1543 = vperm.xlu0 %1542, %v1513
        %v1544 = vpop.permute.xlu0 %1543
        %1547 = vset.pattern.permute.xlu0 0
        %1548 = vperm.xlu0 %1547, %v1514
        %v1549 = vpop.permute.xlu0 %1548
        %1552 = vset.pattern.permute.xlu0 0
        %1553 = vperm.xlu0 %1552, %v1515
        %v1554 = vpop.permute.xlu0 %1553
        %1557 = vset.pattern.permute.xlu0 0
        %1558 = vperm.xlu0 %1557, %v1516
        %v1559 = vpop.permute.xlu0 %1558
        %1562 = vset.pattern.permute.xlu0 0
        %1563 = vperm.xlu0 %1562, %v1517
        %v1564 = vpop.permute.xlu0 %1563
        %1567 = vset.pattern.permute.xlu0 0
        %1568 = vperm.xlu0 %1567, %v1518
        %v1569 = vpop.permute.xlu0 %1568
        %1572 = vset.pattern.permute.xlu0 0
        %1573 = vperm.xlu0 %1572, %v1519
        %v1574 = vpop.permute.xlu0 %1573
        %1577 = vset.pattern.permute.xlu0 0
        %1578 = vperm.xlu0 %1577, %v1520
        %v1579 = vpop.permute.xlu0 %1578
        %1582 = vset.pattern.permute.xlu0 0
        %1583 = vperm.xlu0 %1582, %v1521
        %v1584 = vpop.permute.xlu0 %1583
        %1587 = vset.pattern.permute.xlu0 0
        %1588 = vperm.xlu0 %1587, %v1522
        %v1589 = vpop.permute.xlu0 %1588
        %1592 = vset.pattern.permute.xlu0 0
        %1593 = vperm.xlu0 %1592, %v1523
        %v1594 = vpop.permute.xlu0 %1593
        %1597 = vset.pattern.permute.xlu0 0
        %1598 = vperm.xlu0 %1597, %v1524
        %v1599 = vpop.permute.xlu0 %1598
        %1602 = vset.pattern.permute.xlu0 0
        %1603 = vperm.xlu0 %1602, %v1525
        %v1604 = vpop.permute.xlu0 %1603
        %v1622 = vunpack.c.l.b16 %v1478
        %v1623 = vunpack.c.l.b16 %v1479
        %v1624 = vunpack.c.l.b16 %v1480
        %v1625 = vunpack.c.l.b16 %v1481
        %v1626 = vunpack.c.l.b16 %v1482
        %v1627 = vunpack.c.l.b16 %v1483
        %v1628 = vunpack.c.l.b16 %v1484
        %v1629 = vunpack.c.l.b16 %v1485
        %v1630 = vunpack.c.l.b16 %v1486
        %v1631 = vunpack.c.l.b16 %v1487
        %v1632 = vunpack.c.l.b16 %v1488
        %v1633 = vunpack.c.l.b16 %v1489
        %v1634 = vunpack.c.l.b16 %v1490
        %v1635 = vunpack.c.l.b16 %v1491
        %v1636 = vunpack.c.l.b16 %v1492
        %v1637 = vunpack.c.l.b16 %v1493
        %v1638 = vpack.c.b16 %v1623, %v1622
        %v1639 = vpack.c.b16 %v1625, %v1624
        %v1640 = vpack.c.b16 %v1627, %v1626
        %v1641 = vpack.c.b16 %v1629, %v1628
        %v1642 = vpack.c.b16 %v1631, %v1630
        %v1643 = vpack.c.b16 %v1633, %v1632
        %v1644 = vpack.c.b16 %v1635, %v1634
        %v1645 = vpack.c.b16 %v1637, %v1636
        %1670 = vrot.lane.b32.xlu0 %v1494, 2
        %v1671 = vpop.permute.xlu0 %1670
        %1672 = vrot.lane.b32.xlu0 %v1495, 2
        %v1673 = vpop.permute.xlu0 %1672
        %1674 = vrot.lane.b32.xlu0 %v1496, 2
        %v1675 = vpop.permute.xlu0 %1674
        %1676 = vrot.lane.b32.xlu0 %v1497, 2
        %v1677 = vpop.permute.xlu0 %1676
        %1678 = vrot.lane.b32.xlu0 %v1498, 2
        %v1679 = vpop.permute.xlu0 %1678
        %1680 = vrot.lane.b32.xlu0 %v1499, 2
        %v1681 = vpop.permute.xlu0 %1680
        %1682 = vrot.lane.b32.xlu0 %v1500, 2
        %v1683 = vpop.permute.xlu0 %1682
        %1684 = vrot.lane.b32.xlu0 %v1501, 2
        %v1685 = vpop.permute.xlu0 %1684
        %1686 = vrot.lane.b32.xlu0 %v1502, 2
        %v1687 = vpop.permute.xlu0 %1686
        %1688 = vrot.lane.b32.xlu0 %v1503, 2
        %v1689 = vpop.permute.xlu0 %1688
        %1690 = vrot.lane.b32.xlu0 %v1504, 2
        %v1691 = vpop.permute.xlu0 %1690
        %1692 = vrot.lane.b32.xlu0 %v1505, 2
        %v1693 = vpop.permute.xlu0 %1692
        %1694 = vrot.lane.b32.xlu0 %v1506, 2
        %v1695 = vpop.permute.xlu0 %1694
        %1696 = vrot.lane.b32.xlu0 %v1507, 2
        %v1697 = vpop.permute.xlu0 %1696
        %1698 = vrot.lane.b32.xlu0 %v1508, 2
        %v1699 = vpop.permute.xlu0 %1698
        %1700 = vrot.lane.b32.xlu0 %v1509, 2
        %v1701 = vpop.permute.xlu0 %1700
        %vm1702 = vcmask 15360
        %v1703 = vsel %vm1702, %v1671, %v1673
        %v1704 = vsel %vm1702, %v1675, %v1677
        %v1705 = vsel %vm1702, %v1679, %v1681
        %v1706 = vsel %vm1702, %v1683, %v1685
        %v1707 = vsel %vm1702, %v1687, %v1689
        %v1708 = vsel %vm1702, %v1691, %v1693
        %v1709 = vsel %vm1702, %v1695, %v1697
        %v1710 = vsel %vm1702, %v1699, %v1701
        %1727 = vmatpush.bf16.msra.mxu0 %v1710
        %1728 = vmatpush.bf16.msra.mxu0 %v1709
        %1729 = vmatpush.bf16.msra.mxu0 %v1708
        %1730 = vmatpush.bf16.msra.mxu0 %v1707
        %1731 = vmatpush.bf16.msra.mxu0 %v1706
        %1732 = vmatpush.bf16.msra.mxu0 %v1705
        %1733 = vmatpush.bf16.msra.mxu0 %v1704
        %1734 = vmatpush.bf16.msra.mxu0 %v1703
        %1735 = vmatmul.bf16.gmra.mxu0 %v1638
        %v1736 = vpop.f32.mrf.mxu0
        %v1737 = vadd.f32 %v1529, %v1736
        %v1738 = vpop.f32.mrf.mxu0
        %v1739 = vadd.f32 %v1534, %v1738
        %1740 = vmatmul.bf16.gmra.mxu0 %v1639
        %v1741 = vpop.f32.mrf.mxu0
        %v1742 = vadd.f32 %v1539, %v1741
        %v1743 = vpop.f32.mrf.mxu0
        %v1744 = vadd.f32 %v1544, %v1743
        %1745 = vmatmul.bf16.gmra.mxu0 %v1640
        %v1746 = vpop.f32.mrf.mxu0
        %v1747 = vadd.f32 %v1549, %v1746
        %v1748 = vpop.f32.mrf.mxu0
        %v1749 = vadd.f32 %v1554, %v1748
        %1750 = vmatmul.bf16.gmra.mxu0 %v1641
        %v1751 = vpop.f32.mrf.mxu0
        %v1752 = vadd.f32 %v1559, %v1751
        %v1753 = vpop.f32.mrf.mxu0
        %v1754 = vadd.f32 %v1564, %v1753
        %1755 = vmatmul.bf16.gmra.mxu0 %v1642
        %v1756 = vpop.f32.mrf.mxu0
        %v1757 = vadd.f32 %v1569, %v1756
        %v1758 = vpop.f32.mrf.mxu0
        %v1759 = vadd.f32 %v1574, %v1758
        %1760 = vmatmul.bf16.gmra.mxu0 %v1643
        %v1761 = vpop.f32.mrf.mxu0
        %v1762 = vadd.f32 %v1579, %v1761
        %v1763 = vpop.f32.mrf.mxu0
        %v1764 = vadd.f32 %v1584, %v1763
        %1765 = vmatmul.bf16.gmra.mxu0 %v1644
        %v1766 = vpop.f32.mrf.mxu0
        %v1767 = vadd.f32 %v1589, %v1766
        %v1768 = vpop.f32.mrf.mxu0
        %v1769 = vadd.f32 %v1594, %v1768
        %1770 = vmatmul.bf16.gmra.mxu0 %v1645
        %v1771 = vpop.f32.mrf.mxu0
        %v1772 = vadd.f32 %v1599, %v1771
        %v1773 = vpop.f32.mrf.mxu0
        %v1774 = vadd.f32 %v1604, %v1773
        %1775 = vdwg.mxu0
        %1776 = vmatpush.bf16.msra.mxu0 %v1701
        %1777 = vmatpush.bf16.msra.mxu0 %v1697
        %1778 = vmatpush.bf16.msra.mxu0 %v1693
        %1779 = vmatpush.bf16.msra.mxu0 %v1689
        %1780 = vmatpush.bf16.msra.mxu0 %v1685
        %1781 = vmatpush.bf16.msra.mxu0 %v1681
        %1782 = vmatpush.bf16.msra.mxu0 %v1677
        %1783 = vmatpush.bf16.msra.mxu0 %v1673
        %1784 = vmatmul.bf16.gmra.mxu0 %v1638
        %v1785 = vpop.f32.mrf.mxu0
        %v1786 = vadd.f32 %v1529, %v1785
        %v1787 = vpop.f32.mrf.mxu0
        %v1788 = vadd.f32 %v1534, %v1787
        %1789 = vmatmul.bf16.gmra.mxu0 %v1639
        %v1790 = vpop.f32.mrf.mxu0
        %v1791 = vadd.f32 %v1539, %v1790
        %v1792 = vpop.f32.mrf.mxu0
        %v1793 = vadd.f32 %v1544, %v1792
        %1794 = vmatmul.bf16.gmra.mxu0 %v1640
        %v1795 = vpop.f32.mrf.mxu0
        %v1796 = vadd.f32 %v1549, %v1795
        %v1797 = vpop.f32.mrf.mxu0
        %v1798 = vadd.f32 %v1554, %v1797
        %1799 = vmatmul.bf16.gmra.mxu0 %v1641
        %v1800 = vpop.f32.mrf.mxu0
        %v1801 = vadd.f32 %v1559, %v1800
        %v1802 = vpop.f32.mrf.mxu0
        %v1803 = vadd.f32 %v1564, %v1802
        %1804 = vmatmul.bf16.gmra.mxu0 %v1642
        %v1805 = vpop.f32.mrf.mxu0
        %v1806 = vadd.f32 %v1569, %v1805
        %v1807 = vpop.f32.mrf.mxu0
        %v1808 = vadd.f32 %v1574, %v1807
        %1809 = vmatmul.bf16.gmra.mxu0 %v1643
        %v1810 = vpop.f32.mrf.mxu0
        %v1811 = vadd.f32 %v1579, %v1810
        %v1812 = vpop.f32.mrf.mxu0
        %v1813 = vadd.f32 %v1584, %v1812
        %1814 = vmatmul.bf16.gmra.mxu0 %v1644
        %v1815 = vpop.f32.mrf.mxu0
        %v1816 = vadd.f32 %v1589, %v1815
        %v1817 = vpop.f32.mrf.mxu0
        %v1818 = vadd.f32 %v1594, %v1817
        %1819 = vmatmul.bf16.gmra.mxu0 %v1645
        %v1820 = vpop.f32.mrf.mxu0
        %v1821 = vadd.f32 %v1599, %v1820
        %v1822 = vpop.f32.mrf.mxu0
        %v1823 = vadd.f32 %v1604, %v1822
        %1824 = vdwg.mxu0
        %v1825 = vmax.f32 %v1737, 0.0
        %v1826 = vmax.f32 %v1786, 0.0
        %v1827 = vmax.f32 %v1739, 0.0
        %v1828 = vmax.f32 %v1788, 0.0
        %v1829 = vmax.f32 %v1742, 0.0
        %v1830 = vmax.f32 %v1791, 0.0
        %v1831 = vmax.f32 %v1744, 0.0
        %v1832 = vmax.f32 %v1793, 0.0
        %v1833 = vmax.f32 %v1747, 0.0
        %v1834 = vmax.f32 %v1796, 0.0
        %v1835 = vmax.f32 %v1749, 0.0
        %v1836 = vmax.f32 %v1798, 0.0
        %v1837 = vmax.f32 %v1752, 0.0
        %v1838 = vmax.f32 %v1801, 0.0
        %v1839 = vmax.f32 %v1754, 0.0
        %v1840 = vmax.f32 %v1803, 0.0
        %v1841 = vmax.f32 %v1757, 0.0
        %v1842 = vmax.f32 %v1806, 0.0
        %v1843 = vmax.f32 %v1759, 0.0
        %v1844 = vmax.f32 %v1808, 0.0
        %v1845 = vmax.f32 %v1762, 0.0
        %v1846 = vmax.f32 %v1811, 0.0
        %v1847 = vmax.f32 %v1764, 0.0
        %v1848 = vmax.f32 %v1813, 0.0
        %v1849 = vmax.f32 %v1767, 0.0
        %v1850 = vmax.f32 %v1816, 0.0
        %v1851 = vmax.f32 %v1769, 0.0
        %v1852 = vmax.f32 %v1818, 0.0
        %v1853 = vmax.f32 %v1772, 0.0
        %v1854 = vmax.f32 %v1821, 0.0
        %v1855 = vmax.f32 %v1774, 0.0
        %v1856 = vmax.f32 %v1823, 0.0
        %1857 = vst [vmem:[#allocation3] sm:$0xff] %v1825
        %1858 = vst.msk [vmem:[#allocation3 + $0x8] sm:$0xff] %vm627, %v1826
        %1859 = vst [vmem:[#allocation3 + $0x10] sm:$0xff] %v1827
        %1860 = vst.msk [vmem:[#allocation3 + $0x18] sm:$0xff] %vm627, %v1828
        %1861 = vst [vmem:[#allocation3 + $0x20] sm:$0xff] %v1829
        %1862 = vst.msk [vmem:[#allocation3 + $0x28] sm:$0xff] %vm627, %v1830
        %1863 = vst [vmem:[#allocation3 + $0x30] sm:$0xff] %v1831
        %1864 = vst.msk [vmem:[#allocation3 + $0x38] sm:$0xff] %vm627, %v1832
        %1865 = vst [vmem:[#allocation3 + $0x40] sm:$0xff] %v1833
        %1866 = vst.msk [vmem:[#allocation3 + $0x48] sm:$0xff] %vm627, %v1834
        %1867 = vst [vmem:[#allocation3 + $0x50] sm:$0xff] %v1835
        %1868 = vst.msk [vmem:[#allocation3 + $0x58] sm:$0xff] %vm627, %v1836
        %1869 = vst [vmem:[#allocation3 + $0x60] sm:$0xff] %v1837
        %1870 = vst.msk [vmem:[#allocation3 + $0x68] sm:$0xff] %vm627, %v1838
        %1871 = vst [vmem:[#allocation3 + $0x70] sm:$0xff] %v1839
        %1872 = vst.msk [vmem:[#allocation3 + $0x78] sm:$0xff] %vm627, %v1840
        %1873 = vst [vmem:[#allocation3 + $0x80] sm:$0xff] %v1841
        %1874 = vst.msk [vmem:[#allocation3 + $0x88] sm:$0xff] %vm627, %v1842
        %1875 = vst [vmem:[#allocation3 + $0x90] sm:$0xff] %v1843
        %1876 = vst.msk [vmem:[#allocation3 + $0x98] sm:$0xff] %vm627, %v1844
        %1877 = vst [vmem:[#allocation3 + $0xa0] sm:$0xff] %v1845
        %1878 = vst.msk [vmem:[#allocation3 + $0xa8] sm:$0xff] %vm627, %v1846
        %1879 = vst [vmem:[#allocation3 + $0xb0] sm:$0xff] %v1847
        %1880 = vst.msk [vmem:[#allocation3 + $0xb8] sm:$0xff] %vm627, %v1848
        %1881 = vst [vmem:[#allocation3 + $0xc0] sm:$0xff] %v1849
        %1882 = vst.msk [vmem:[#allocation3 + $0xc8] sm:$0xff] %vm627, %v1850
        %1883 = vst [vmem:[#allocation3 + $0xd0] sm:$0xff] %v1851
        %1884 = vst.msk [vmem:[#allocation3 + $0xd8] sm:$0xff] %vm627, %v1852
        %1885 = vst [vmem:[#allocation3 + $0xe0] sm:$0xff] %v1853
        %1886 = vst.msk [vmem:[#allocation3 + $0xe8] sm:$0xff] %vm627, %v1854
        %1887 = vst [vmem:[#allocation3 + $0xf0] sm:$0xff] %v1855
        %1888 = vst.msk [vmem:[#allocation3 + $0xf8] sm:$0xff] %vm627, %v1856
        %p1889 = scmp.eq.s32.totalorder %s29, 0
        %s1890 = sadd.s32 %s417, 129
        %p1891 = scmp.gt.s32.totalorder %s1890, 16
        %p1892 = por %p1889, %p1891
        // Predicated region
        $region61: #{tpu_custom_call.1} parent=59 // pred_check
          %p1893 = pneg %p1892
        $region62: #{tpu_custom_call.1} parent=59 // pred_check_branch
          %1895 = sbr.rel (%p1893) target = $region64
        $region63: #{tpu_custom_call.1} parent=59 // pred_region
          %s1896 = ssub.s32 %s417, 1
          %v1897 = vlaneseq
          %v1898 = vand.u32 %v1897, 127
          %v1899 = vadd.s32 %v1898, 128
          %v1900 = vstv %s1896
          %v1901 = vadd.s32 %v1900, %v1898
          %v1902 = vadd.s32 %v1900, %v1899
          %vm1903 = vcmp.ge.s32.totalorder %v1901, 0
          %vm1904 = vcmp.ge.s32.totalorder %v1902, 0
          %vm1905 = vcmp.lt.s32.totalorder %v1901, 16
          %vm1906 = vcmp.lt.s32.totalorder %v1902, 16
          %vm1907 = vmand %vm1903, %vm1905
          %vm1908 = vmand %vm1904, %vm1906
          %v1909 = vsel %vm1907, %v1825, 0.0
          %v1910 = vsel %vm1908, %v1826, 0.0
          %v1911 = vsel %vm1907, %v1827, 0.0
          %v1912 = vsel %vm1908, %v1828, 0.0
          %v1913 = vsel %vm1907, %v1829, 0.0
          %v1914 = vsel %vm1908, %v1830, 0.0
          %v1915 = vsel %vm1907, %v1831, 0.0
          %v1916 = vsel %vm1908, %v1832, 0.0
          %v1917 = vsel %vm1907, %v1833, 0.0
          %v1918 = vsel %vm1908, %v1834, 0.0
          %v1919 = vsel %vm1907, %v1835, 0.0
          %v1920 = vsel %vm1908, %v1836, 0.0
          %v1921 = vsel %vm1907, %v1837, 0.0
          %v1922 = vsel %vm1908, %v1838, 0.0
          %v1923 = vsel %vm1907, %v1839, 0.0
          %v1924 = vsel %vm1908, %v1840, 0.0
          %v1925 = vsel %vm1907, %v1841, 0.0
          %v1926 = vsel %vm1908, %v1842, 0.0
          %v1927 = vsel %vm1907, %v1843, 0.0
          %v1928 = vsel %vm1908, %v1844, 0.0
          %v1929 = vsel %vm1907, %v1845, 0.0
          %v1930 = vsel %vm1908, %v1846, 0.0
          %v1931 = vsel %vm1907, %v1847, 0.0
          %v1932 = vsel %vm1908, %v1848, 0.0
          %v1933 = vsel %vm1907, %v1849, 0.0
          %v1934 = vsel %vm1908, %v1850, 0.0
          %v1935 = vsel %vm1907, %v1851, 0.0
          %v1936 = vsel %vm1908, %v1852, 0.0
          %v1937 = vsel %vm1907, %v1853, 0.0
          %v1938 = vsel %vm1908, %v1854, 0.0
          %v1939 = vsel %vm1907, %v1855, 0.0
          %v1940 = vsel %vm1908, %v1856, 0.0
          %1941 = vst [vmem:[#allocation3] sm:$0xff] %v1909
          %1942 = vst.msk [vmem:[#allocation3 + $0x8] sm:$0xff] %vm627, %v1910
          %1943 = vst [vmem:[#allocation3 + $0x10] sm:$0xff] %v1911
          %1944 = vst.msk [vmem:[#allocation3 + $0x18] sm:$0xff] %vm627, %v1912
          %1945 = vst [vmem:[#allocation3 + $0x20] sm:$0xff] %v1913
          %1946 = vst.msk [vmem:[#allocation3 + $0x28] sm:$0xff] %vm627, %v1914
          %1947 = vst [vmem:[#allocation3 + $0x30] sm:$0xff] %v1915
          %1948 = vst.msk [vmem:[#allocation3 + $0x38] sm:$0xff] %vm627, %v1916
          %1949 = vst [vmem:[#allocation3 + $0x40] sm:$0xff] %v1917
          %1950 = vst.msk [vmem:[#allocation3 + $0x48] sm:$0xff] %vm627, %v1918
          %1951 = vst [vmem:[#allocation3 + $0x50] sm:$0xff] %v1919
          %1952 = vst.msk [vmem:[#allocation3 + $0x58] sm:$0xff] %vm627, %v1920
          %1953 = vst [vmem:[#allocation3 + $0x60] sm:$0xff] %v1921
          %1954 = vst.msk [vmem:[#allocation3 + $0x68] sm:$0xff] %vm627, %v1922
          %1955 = vst [vmem:[#allocation3 + $0x70] sm:$0xff] %v1923
          %1956 = vst.msk [vmem:[#allocation3 + $0x78] sm:$0xff] %vm627, %v1924
          %1957 = vst [vmem:[#allocation3 + $0x80] sm:$0xff] %v1925
          %1958 = vst.msk [vmem:[#allocation3 + $0x88] sm:$0xff] %vm627, %v1926
          %1959 = vst [vmem:[#allocation3 + $0x90] sm:$0xff] %v1927
          %1960 = vst.msk [vmem:[#allocation3 + $0x98] sm:$0xff] %vm627, %v1928
          %1961 = vst [vmem:[#allocation3 + $0xa0] sm:$0xff] %v1929
          %1962 = vst.msk [vmem:[#allocation3 + $0xa8] sm:$0xff] %vm627, %v1930
          %1963 = vst [vmem:[#allocation3 + $0xb0] sm:$0xff] %v1931
          %1964 = vst.msk [vmem:[#allocation3 + $0xb8] sm:$0xff] %vm627, %v1932
          %1965 = vst [vmem:[#allocation3 + $0xc0] sm:$0xff] %v1933
          %1966 = vst.msk [vmem:[#allocation3 + $0xc8] sm:$0xff] %vm627, %v1934
          %1967 = vst [vmem:[#allocation3 + $0xd0] sm:$0xff] %v1935
          %1968 = vst.msk [vmem:[#allocation3 + $0xd8] sm:$0xff] %vm627, %v1936
          %1969 = vst [vmem:[#allocation3 + $0xe0] sm:$0xff] %v1937
          %1970 = vst.msk [vmem:[#allocation3 + $0xe8] sm:$0xff] %vm627, %v1938
          %1971 = vst [vmem:[#allocation3 + $0xf0] sm:$0xff] %v1939
          %1972 = vst.msk [vmem:[#allocation3 + $0xf8] sm:$0xff] %vm627, %v1940
        $region64: #{tpu_custom_call.1} parent=59 // pred_fallthru
          _
        %v1973 = vld [vmem:[%s8] sm:$0xf]
        %v1974 = vld [vmem:[%s8 + $0x4] sm:$0xf]
        %v1975 = vld [vmem:[%s8 + $0x8] sm:$0xf]
        %v1976 = vld [vmem:[%s8 + $0xc] sm:$0xf]
        %v1977 = vld [vmem:[%s8 + $0x10] sm:$0xf]
        %v1978 = vld [vmem:[%s8 + $0x14] sm:$0xf]
        %v1979 = vld [vmem:[%s8 + $0x18] sm:$0xf]
        %v1980 = vld [vmem:[%s8 + $0x1c] sm:$0xf]
        %v1981 = vld [vmem:[%s8 + $0x20] sm:$0xf]
        %v1982 = vld [vmem:[%s8 + $0x24] sm:$0xf]
        %v1983 = vld [vmem:[%s8 + $0x28] sm:$0xf]
        %v1984 = vld [vmem:[%s8 + $0x2c] sm:$0xf]
        %v1985 = vld [vmem:[%s8 + $0x30] sm:$0xf]
        %v1986 = vld [vmem:[%s8 + $0x34] sm:$0xf]
        %v1987 = vld [vmem:[%s8 + $0x38] sm:$0xf]
        %v1988 = vld [vmem:[%s8 + $0x3c] sm:$0xf]
        %v1989 = vpack.c.bf16 %v419, %v418
        %v1990 = vpack.c.bf16 %v421, %v420
        %v1991 = vpack.c.bf16 %v423, %v422
        %v1992 = vpack.c.bf16 %v425, %v424
        %v1993 = vpack.c.bf16 %v427, %v426
        %v1994 = vpack.c.bf16 %v429, %v428
        %v1995 = vpack.c.bf16 %v431, %v430
        %v1996 = vpack.c.bf16 %v433, %v432
        %v1997 = vld [vmem:[%s9] sm:$0xff]
        %v1998 = vld [vmem:[%s9 + $0x8] sm:$0xff]
        %v1999 = vld [vmem:[%s9 + $0x10] sm:$0xff]
        %v2000 = vld [vmem:[%s9 + $0x18] sm:$0xff]
        %v2001 = vld [vmem:[%s9 + $0x20] sm:$0xff]
        %v2002 = vld [vmem:[%s9 + $0x28] sm:$0xff]
        %v2003 = vld [vmem:[%s9 + $0x30] sm:$0xff]
        %v2004 = vld [vmem:[%s9 + $0x38] sm:$0xff]
        %v2005 = vld [vmem:[%s9 + $0x40] sm:$0xff]
        %v2006 = vld [vmem:[%s9 + $0x48] sm:$0xff]
        %v2007 = vld [vmem:[%s9 + $0x50] sm:$0xff]
        %v2008 = vld [vmem:[%s9 + $0x58] sm:$0xff]
        %v2009 = vld [vmem:[%s9 + $0x60] sm:$0xff]
        %v2010 = vld [vmem:[%s9 + $0x68] sm:$0xff]
        %v2011 = vld [vmem:[%s9 + $0x70] sm:$0xff]
        %v2012 = vld [vmem:[%s9 + $0x78] sm:$0xff]
        %2014 = vset.pattern.permute.xlu0 0
        %2015 = vperm.xlu0 %2014, %v1997
        %v2016 = vpop.permute.xlu0 %2015
        %2019 = vset.pattern.permute.xlu0 0
        %2020 = vperm.xlu0 %2019, %v1998
        %v2021 = vpop.permute.xlu0 %2020
        %2024 = vset.pattern.permute.xlu0 0
        %2025 = vperm.xlu0 %2024, %v1999
        %v2026 = vpop.permute.xlu0 %2025
        %2029 = vset.pattern.permute.xlu0 0
        %2030 = vperm.xlu0 %2029, %v2000
        %v2031 = vpop.permute.xlu0 %2030
        %2034 = vset.pattern.permute.xlu0 0
        %2035 = vperm.xlu0 %2034, %v2001
        %v2036 = vpop.permute.xlu0 %2035
        %2039 = vset.pattern.permute.xlu0 0
        %2040 = vperm.xlu0 %2039, %v2002
        %v2041 = vpop.permute.xlu0 %2040
        %2044 = vset.pattern.permute.xlu0 0
        %2045 = vperm.xlu0 %2044, %v2003
        %v2046 = vpop.permute.xlu0 %2045
        %2049 = vset.pattern.permute.xlu0 0
        %2050 = vperm.xlu0 %2049, %v2004
        %v2051 = vpop.permute.xlu0 %2050
        %2054 = vset.pattern.permute.xlu0 0
        %2055 = vperm.xlu0 %2054, %v2005
        %v2056 = vpop.permute.xlu0 %2055
        %2059 = vset.pattern.permute.xlu0 0
        %2060 = vperm.xlu0 %2059, %v2006
        %v2061 = vpop.permute.xlu0 %2060
        %2064 = vset.pattern.permute.xlu0 0
        %2065 = vperm.xlu0 %2064, %v2007
        %v2066 = vpop.permute.xlu0 %2065
        %2069 = vset.pattern.permute.xlu0 0
        %2070 = vperm.xlu0 %2069, %v2008
        %v2071 = vpop.permute.xlu0 %2070
        %2074 = vset.pattern.permute.xlu0 0
        %2075 = vperm.xlu0 %2074, %v2009
        %v2076 = vpop.permute.xlu0 %2075
        %2079 = vset.pattern.permute.xlu0 0
        %2080 = vperm.xlu0 %2079, %v2010
        %v2081 = vpop.permute.xlu0 %2080
        %2084 = vset.pattern.permute.xlu0 0
        %2085 = vperm.xlu0 %2084, %v2011
        %v2086 = vpop.permute.xlu0 %2085
        %2089 = vset.pattern.permute.xlu0 0
        %2090 = vperm.xlu0 %2089, %v2012
        %v2091 = vpop.permute.xlu0 %2090
        %v2109 = vunpack.c.l.b16 %v1973
        %v2110 = vunpack.c.l.b16 %v1974
        %v2111 = vunpack.c.l.b16 %v1975
        %v2112 = vunpack.c.l.b16 %v1976
        %v2113 = vunpack.c.l.b16 %v1977
        %v2114 = vunpack.c.l.b16 %v1978
        %v2115 = vunpack.c.l.b16 %v1979
        %v2116 = vunpack.c.l.b16 %v1980
        %v2117 = vunpack.c.l.b16 %v1981
        %v2118 = vunpack.c.l.b16 %v1982
        %v2119 = vunpack.c.l.b16 %v1983
        %v2120 = vunpack.c.l.b16 %v1984
        %v2121 = vunpack.c.l.b16 %v1985
        %v2122 = vunpack.c.l.b16 %v1986
        %v2123 = vunpack.c.l.b16 %v1987
        %v2124 = vunpack.c.l.b16 %v1988
        %v2125 = vpack.c.b16 %v2110, %v2109
        %v2126 = vpack.c.b16 %v2112, %v2111
        %v2127 = vpack.c.b16 %v2114, %v2113
        %v2128 = vpack.c.b16 %v2116, %v2115
        %v2129 = vpack.c.b16 %v2118, %v2117
        %v2130 = vpack.c.b16 %v2120, %v2119
        %v2131 = vpack.c.b16 %v2122, %v2121
        %v2132 = vpack.c.b16 %v2124, %v2123
        %2141 = vmatpush.bf16.msra.mxu0 %v1996
        %2142 = vmatpush.bf16.msra.mxu0 %v1995
        %2143 = vmatpush.bf16.msra.mxu0 %v1994
        %2144 = vmatpush.bf16.msra.mxu0 %v1993
        %2145 = vmatpush.bf16.msra.mxu0 %v1992
        %2146 = vmatpush.bf16.msra.mxu0 %v1991
        %2147 = vmatpush.bf16.msra.mxu0 %v1990
        %2148 = vmatpush.bf16.msra.mxu0 %v1989
        %2149 = vmatmul.bf16.gmra.mxu0 %v2125
        %v2150 = vpop.f32.mrf.mxu0
        %v2151 = vadd.f32 %v2016, %v2150
        %v2152 = vpop.f32.mrf.mxu0
        %v2153 = vadd.f32 %v2021, %v2152
        %2154 = vmatmul.bf16.gmra.mxu0 %v2126
        %v2155 = vpop.f32.mrf.mxu0
        %v2156 = vadd.f32 %v2026, %v2155
        %v2157 = vpop.f32.mrf.mxu0
        %v2158 = vadd.f32 %v2031, %v2157
        %2159 = vmatmul.bf16.gmra.mxu0 %v2127
        %v2160 = vpop.f32.mrf.mxu0
        %v2161 = vadd.f32 %v2036, %v2160
        %v2162 = vpop.f32.mrf.mxu0
        %v2163 = vadd.f32 %v2041, %v2162
        %2164 = vmatmul.bf16.gmra.mxu0 %v2128
        %v2165 = vpop.f32.mrf.mxu0
        %v2166 = vadd.f32 %v2046, %v2165
        %v2167 = vpop.f32.mrf.mxu0
        %v2168 = vadd.f32 %v2051, %v2167
        %2169 = vmatmul.bf16.gmra.mxu0 %v2129
        %v2170 = vpop.f32.mrf.mxu0
        %v2171 = vadd.f32 %v2056, %v2170
        %v2172 = vpop.f32.mrf.mxu0
        %v2173 = vadd.f32 %v2061, %v2172
        %2174 = vmatmul.bf16.gmra.mxu0 %v2130
        %v2175 = vpop.f32.mrf.mxu0
        %v2176 = vadd.f32 %v2066, %v2175
        %v2177 = vpop.f32.mrf.mxu0
        %v2178 = vadd.f32 %v2071, %v2177
        %2179 = vmatmul.bf16.gmra.mxu0 %v2131
        %v2180 = vpop.f32.mrf.mxu0
        %v2181 = vadd.f32 %v2076, %v2180
        %v2182 = vpop.f32.mrf.mxu0
        %v2183 = vadd.f32 %v2081, %v2182
        %2184 = vmatmul.bf16.gmra.mxu0 %v2132
        %v2185 = vpop.f32.mrf.mxu0
        %v2186 = vadd.f32 %v2086, %v2185
        %v2187 = vpop.f32.mrf.mxu0
        %v2188 = vadd.f32 %v2091, %v2187
        %2189 = vdwg.mxu0
        %v2190 = vld [vmem:[%s5] sm:$0xff]
        %v2191 = vld [vmem:[%s5 + $0x8] sm:$0xff]
        %v2192 = vld [vmem:[%s5 + $0x10] sm:$0xff]
        %v2193 = vld [vmem:[%s5 + $0x18] sm:$0xff]
        %v2194 = vld [vmem:[%s5 + $0x20] sm:$0xff]
        %v2195 = vld [vmem:[%s5 + $0x28] sm:$0xff]
        %v2196 = vld [vmem:[%s5 + $0x30] sm:$0xff]
        %v2197 = vld [vmem:[%s5 + $0x38] sm:$0xff]
        %v2198 = vld [vmem:[%s5 + $0x40] sm:$0xff]
        %v2199 = vld [vmem:[%s5 + $0x48] sm:$0xff]
        %v2200 = vld [vmem:[%s5 + $0x50] sm:$0xff]
        %v2201 = vld [vmem:[%s5 + $0x58] sm:$0xff]
        %v2202 = vld [vmem:[%s5 + $0x60] sm:$0xff]
        %v2203 = vld [vmem:[%s5 + $0x68] sm:$0xff]
        %v2204 = vld [vmem:[%s5 + $0x70] sm:$0xff]
        %v2205 = vld [vmem:[%s5 + $0x78] sm:$0xff]
        %v2206 = vld [vmem:[#allocation3] sm:$0xff]
        %v2207 = vld [vmem:[#allocation3 + $0x10] sm:$0xff]
        %v2208 = vld [vmem:[#allocation3 + $0x20] sm:$0xff]
        %v2209 = vld [vmem:[#allocation3 + $0x30] sm:$0xff]
        %v2210 = vld [vmem:[#allocation3 + $0x40] sm:$0xff]
        %v2211 = vld [vmem:[#allocation3 + $0x50] sm:$0xff]
        %v2212 = vld [vmem:[#allocation3 + $0x60] sm:$0xff]
        %v2213 = vld [vmem:[#allocation3 + $0x70] sm:$0xff]
        %v2214 = vld [vmem:[#allocation3 + $0x80] sm:$0xff]
        %v2215 = vld [vmem:[#allocation3 + $0x90] sm:$0xff]
        %v2216 = vld [vmem:[#allocation3 + $0xa0] sm:$0xff]
        %v2217 = vld [vmem:[#allocation3 + $0xb0] sm:$0xff]
        %v2218 = vld [vmem:[#allocation3 + $0xc0] sm:$0xff]
        %v2219 = vld [vmem:[#allocation3 + $0xd0] sm:$0xff]
        %v2220 = vld [vmem:[#allocation3 + $0xe0] sm:$0xff]
        %v2221 = vld [vmem:[#allocation3 + $0xf0] sm:$0xff]
        %2223 = vset.pattern.permute.xlu0 0
        %2224 = vperm.xlu0 %2223, %v2190
        %v2225 = vpop.permute.xlu0 %2224
        %2228 = vset.pattern.permute.xlu0 0
        %2229 = vperm.xlu0 %2228, %v2191
        %v2230 = vpop.permute.xlu0 %2229
        %2233 = vset.pattern.permute.xlu0 0
        %2234 = vperm.xlu0 %2233, %v2192
        %v2235 = vpop.permute.xlu0 %2234
        %2238 = vset.pattern.permute.xlu0 0
        %2239 = vperm.xlu0 %2238, %v2193
        %v2240 = vpop.permute.xlu0 %2239
        %2243 = vset.pattern.permute.xlu0 0
        %2244 = vperm.xlu0 %2243, %v2194
        %v2245 = vpop.permute.xlu0 %2244
        %2248 = vset.pattern.permute.xlu0 0
        %2249 = vperm.xlu0 %2248, %v2195
        %v2250 = vpop.permute.xlu0 %2249
        %2253 = vset.pattern.permute.xlu0 0
        %2254 = vperm.xlu0 %2253, %v2196
        %v2255 = vpop.permute.xlu0 %2254
        %2258 = vset.pattern.permute.xlu0 0
        %2259 = vperm.xlu0 %2258, %v2197
        %v2260 = vpop.permute.xlu0 %2259
        %2263 = vset.pattern.permute.xlu0 0
        %2264 = vperm.xlu0 %2263, %v2198
        %v2265 = vpop.permute.xlu0 %2264
        %2268 = vset.pattern.permute.xlu0 0
        %2269 = vperm.xlu0 %2268, %v2199
        %v2270 = vpop.permute.xlu0 %2269
        %2273 = vset.pattern.permute.xlu0 0
        %2274 = vperm.xlu0 %2273, %v2200
        %v2275 = vpop.permute.xlu0 %2274
        %2278 = vset.pattern.permute.xlu0 0
        %2279 = vperm.xlu0 %2278, %v2201
        %v2280 = vpop.permute.xlu0 %2279
        %2283 = vset.pattern.permute.xlu0 0
        %2284 = vperm.xlu0 %2283, %v2202
        %v2285 = vpop.permute.xlu0 %2284
        %2288 = vset.pattern.permute.xlu0 0
        %2289 = vperm.xlu0 %2288, %v2203
        %v2290 = vpop.permute.xlu0 %2289
        %2293 = vset.pattern.permute.xlu0 0
        %2294 = vperm.xlu0 %2293, %v2204
        %v2295 = vpop.permute.xlu0 %2294
        %2298 = vset.pattern.permute.xlu0 0
        %2299 = vperm.xlu0 %2298, %v2205
        %v2300 = vpop.permute.xlu0 %2299
        %v2302 = vmul.f32 %v2225, %v2206
        %v2303 = vmul.f32 %v2230, %v2207
        %v2304 = vmul.f32 %v2235, %v2208
        %v2305 = vmul.f32 %v2240, %v2209
        %v2306 = vmul.f32 %v2245, %v2210
        %v2307 = vmul.f32 %v2250, %v2211
        %v2308 = vmul.f32 %v2255, %v2212
        %v2309 = vmul.f32 %v2260, %v2213
        %v2310 = vmul.f32 %v2265, %v2214
        %v2311 = vmul.f32 %v2270, %v2215
        %v2312 = vmul.f32 %v2275, %v2216
        %v2313 = vmul.f32 %v2280, %v2217
        %v2314 = vmul.f32 %v2285, %v2218
        %v2315 = vmul.f32 %v2290, %v2219
        %v2316 = vmul.f32 %v2295, %v2220
        %v2317 = vmul.f32 %v2300, %v2221
        %v2318 = vld [vmem:[#allocation3] sm:$0xff]
        %v2319 = vld [vmem:[#allocation3 + $0x8] sm:$0xff]
        %v2320 = vld [vmem:[#allocation3 + $0x10] sm:$0xff]
        %v2321 = vld [vmem:[#allocation3 + $0x18] sm:$0xff]
        %v2322 = vld [vmem:[#allocation3 + $0x20] sm:$0xff]
        %v2323 = vld [vmem:[#allocation3 + $0x28] sm:$0xff]
        %v2324 = vld [vmem:[#allocation3 + $0x30] sm:$0xff]
        %v2325 = vld [vmem:[#allocation3 + $0x38] sm:$0xff]
        %v2326 = vld [vmem:[#allocation3 + $0x40] sm:$0xff]
        %v2327 = vld [vmem:[#allocation3 + $0x48] sm:$0xff]
        %v2328 = vld [vmem:[#allocation3 + $0x50] sm:$0xff]
        %v2329 = vld [vmem:[#allocation3 + $0x58] sm:$0xff]
        %v2330 = vld [vmem:[#allocation3 + $0x60] sm:$0xff]
        %v2331 = vld [vmem:[#allocation3 + $0x68] sm:$0xff]
        %v2332 = vld [vmem:[#allocation3 + $0x70] sm:$0xff]
        %v2333 = vld [vmem:[#allocation3 + $0x78] sm:$0xff]
        %v2334 = vld [vmem:[#allocation3 + $0x80] sm:$0xff]
        %v2335 = vld [vmem:[#allocation3 + $0x88] sm:$0xff]
        %v2336 = vld [vmem:[#allocation3 + $0x90] sm:$0xff]
        %v2337 = vld [vmem:[#allocation3 + $0x98] sm:$0xff]
        %v2338 = vld [vmem:[#allocation3 + $0xa0] sm:$0xff]
        %v2339 = vld [vmem:[#allocation3 + $0xa8] sm:$0xff]
        %v2340 = vld [vmem:[#allocation3 + $0xb0] sm:$0xff]
        %v2341 = vld [vmem:[#allocation3 + $0xb8] sm:$0xff]
        %v2342 = vld [vmem:[#allocation3 + $0xc0] sm:$0xff]
        %v2343 = vld [vmem:[#allocation3 + $0xc8] sm:$0xff]
        %v2344 = vld [vmem:[#allocation3 + $0xd0] sm:$0xff]
        %v2345 = vld [vmem:[#allocation3 + $0xd8] sm:$0xff]
        %v2346 = vld [vmem:[#allocation3 + $0xe0] sm:$0xff]
        %v2347 = vld [vmem:[#allocation3 + $0xe8] sm:$0xff]
        %v2348 = vld [vmem:[#allocation3 + $0xf0] sm:$0xff]
        %v2349 = vld [vmem:[#allocation3 + $0xf8] sm:$0xff]
        %2350 = vset.pattern.permute.xlu0 1
        %2351 = vperm.xlu0 %2350, %v2190
        %v2352 = vpop.permute.xlu0 %2351
        %2354 = vset.pattern.permute.xlu0 1
        %2355 = vperm.xlu0 %2354, %v2191
        %v2356 = vpop.permute.xlu0 %2355
        %2358 = vset.pattern.permute.xlu0 1
        %2359 = vperm.xlu0 %2358, %v2192
        %v2360 = vpop.permute.xlu0 %2359
        %2362 = vset.pattern.permute.xlu0 1
        %2363 = vperm.xlu0 %2362, %v2193
        %v2364 = vpop.permute.xlu0 %2363
        %2366 = vset.pattern.permute.xlu0 1
        %2367 = vperm.xlu0 %2366, %v2194
        %v2368 = vpop.permute.xlu0 %2367
        %2370 = vset.pattern.permute.xlu0 1
        %2371 = vperm.xlu0 %2370, %v2195
        %v2372 = vpop.permute.xlu0 %2371
        %2374 = vset.pattern.permute.xlu0 1
        %2375 = vperm.xlu0 %2374, %v2196
        %v2376 = vpop.permute.xlu0 %2375
        %2378 = vset.pattern.permute.xlu0 1
        %2379 = vperm.xlu0 %2378, %v2197
        %v2380 = vpop.permute.xlu0 %2379
        %2382 = vset.pattern.permute.xlu0 1
        %2383 = vperm.xlu0 %2382, %v2198
        %v2384 = vpop.permute.xlu0 %2383
        %2386 = vset.pattern.permute.xlu0 1
        %2387 = vperm.xlu0 %2386, %v2199
        %v2388 = vpop.permute.xlu0 %2387
        %2390 = vset.pattern.permute.xlu0 1
        %2391 = vperm.xlu0 %2390, %v2200
        %v2392 = vpop.permute.xlu0 %2391
        %2394 = vset.pattern.permute.xlu0 1
        %2395 = vperm.xlu0 %2394, %v2201
        %v2396 = vpop.permute.xlu0 %2395
        %2398 = vset.pattern.permute.xlu0 1
        %2399 = vperm.xlu0 %2398, %v2202
        %v2400 = vpop.permute.xlu0 %2399
        %2402 = vset.pattern.permute.xlu0 1
        %2403 = vperm.xlu0 %2402, %v2203
        %v2404 = vpop.permute.xlu0 %2403
        %2406 = vset.pattern.permute.xlu0 1
        %2407 = vperm.xlu0 %2406, %v2204
        %v2408 = vpop.permute.xlu0 %2407
        %2410 = vset.pattern.permute.xlu0 1
        %2411 = vperm.xlu0 %2410, %v2205
        %v2412 = vpop.permute.xlu0 %2411
        %v2414 = vmul.f32 %v2352, %v2318
        %v2415 = vmul.f32 %v2352, %v2319
        %v2416 = vmul.f32 %v2356, %v2320
        %v2417 = vmul.f32 %v2356, %v2321
        %v2418 = vmul.f32 %v2360, %v2322
        %v2419 = vmul.f32 %v2360, %v2323
        %v2420 = vmul.f32 %v2364, %v2324
        %v2421 = vmul.f32 %v2364, %v2325
        %v2422 = vmul.f32 %v2368, %v2326
        %v2423 = vmul.f32 %v2368, %v2327
        %v2424 = vmul.f32 %v2372, %v2328
        %v2425 = vmul.f32 %v2372, %v2329
        %v2426 = vmul.f32 %v2376, %v2330
        %v2427 = vmul.f32 %v2376, %v2331
        %v2428 = vmul.f32 %v2380, %v2332
        %v2429 = vmul.f32 %v2380, %v2333
        %v2430 = vmul.f32 %v2384, %v2334
        %v2431 = vmul.f32 %v2384, %v2335
        %v2432 = vmul.f32 %v2388, %v2336
        %v2433 = vmul.f32 %v2388, %v2337
        %v2434 = vmul.f32 %v2392, %v2338
        %v2435 = vmul.f32 %v2392, %v2339
        %v2436 = vmul.f32 %v2396, %v2340
        %v2437 = vmul.f32 %v2396, %v2341
        %v2438 = vmul.f32 %v2400, %v2342
        %v2439 = vmul.f32 %v2400, %v2343
        %v2440 = vmul.f32 %v2404, %v2344
        %v2441 = vmul.f32 %v2404, %v2345
        %v2442 = vmul.f32 %v2408, %v2346
        %v2443 = vmul.f32 %v2408, %v2347
        %v2444 = vmul.f32 %v2412, %v2348
        %v2445 = vmul.f32 %v2412, %v2349
        %2478 = vrot.lane.b32.xlu0 %v2414, 127
        %v2479 = vpop.permute.xlu0 %2478
        %2480 = vrot.lane.b32.xlu0 %v2415, 127
        %v2481 = vpop.permute.xlu0 %2480
        %2482 = vrot.lane.b32.xlu0 %v2416, 127
        %v2483 = vpop.permute.xlu0 %2482
        %2484 = vrot.lane.b32.xlu0 %v2417, 127
        %v2485 = vpop.permute.xlu0 %2484
        %2486 = vrot.lane.b32.xlu0 %v2418, 127
        %v2487 = vpop.permute.xlu0 %2486
        %2488 = vrot.lane.b32.xlu0 %v2419, 127
        %v2489 = vpop.permute.xlu0 %2488
        %2490 = vrot.lane.b32.xlu0 %v2420, 127
        %v2491 = vpop.permute.xlu0 %2490
        %2492 = vrot.lane.b32.xlu0 %v2421, 127
        %v2493 = vpop.permute.xlu0 %2492
        %2494 = vrot.lane.b32.xlu0 %v2422, 127
        %v2495 = vpop.permute.xlu0 %2494
        %2496 = vrot.lane.b32.xlu0 %v2423, 127
        %v2497 = vpop.permute.xlu0 %2496
        %2498 = vrot.lane.b32.xlu0 %v2424, 127
        %v2499 = vpop.permute.xlu0 %2498
        %2500 = vrot.lane.b32.xlu0 %v2425, 127
        %v2501 = vpop.permute.xlu0 %2500
        %2502 = vrot.lane.b32.xlu0 %v2426, 127
        %v2503 = vpop.permute.xlu0 %2502
        %2504 = vrot.lane.b32.xlu0 %v2427, 127
        %v2505 = vpop.permute.xlu0 %2504
        %2506 = vrot.lane.b32.xlu0 %v2428, 127
        %v2507 = vpop.permute.xlu0 %2506
        %2508 = vrot.lane.b32.xlu0 %v2429, 127
        %v2509 = vpop.permute.xlu0 %2508
        %2510 = vrot.lane.b32.xlu0 %v2430, 127
        %v2511 = vpop.permute.xlu0 %2510
        %2512 = vrot.lane.b32.xlu0 %v2431, 127
        %v2513 = vpop.permute.xlu0 %2512
        %2514 = vrot.lane.b32.xlu0 %v2432, 127
        %v2515 = vpop.permute.xlu0 %2514
        %2516 = vrot.lane.b32.xlu0 %v2433, 127
        %v2517 = vpop.permute.xlu0 %2516
        %2518 = vrot.lane.b32.xlu0 %v2434, 127
        %v2519 = vpop.permute.xlu0 %2518
        %2520 = vrot.lane.b32.xlu0 %v2435, 127
        %v2521 = vpop.permute.xlu0 %2520
        %2522 = vrot.lane.b32.xlu0 %v2436, 127
        %v2523 = vpop.permute.xlu0 %2522
        %2524 = vrot.lane.b32.xlu0 %v2437, 127
        %v2525 = vpop.permute.xlu0 %2524
        %2526 = vrot.lane.b32.xlu0 %v2438, 127
        %v2527 = vpop.permute.xlu0 %2526
        %2528 = vrot.lane.b32.xlu0 %v2439, 127
        %v2529 = vpop.permute.xlu0 %2528
        %2530 = vrot.lane.b32.xlu0 %v2440, 127
        %v2531 = vpop.permute.xlu0 %2530
        %2532 = vrot.lane.b32.xlu0 %v2441, 127
        %v2533 = vpop.permute.xlu0 %2532
        %2534 = vrot.lane.b32.xlu0 %v2442, 127
        %v2535 = vpop.permute.xlu0 %2534
        %2536 = vrot.lane.b32.xlu0 %v2443, 127
        %v2537 = vpop.permute.xlu0 %2536
        %2538 = vrot.lane.b32.xlu0 %v2444, 127
        %v2539 = vpop.permute.xlu0 %2538
        %2540 = vrot.lane.b32.xlu0 %v2445, 127
        %v2541 = vpop.permute.xlu0 %2540
        %v2542 = vsel %vm1108, %v2479, %v2481
        %v2543 = vsel %vm1108, %v2483, %v2485
        %v2544 = vsel %vm1108, %v2487, %v2489
        %v2545 = vsel %vm1108, %v2491, %v2493
        %v2546 = vsel %vm1108, %v2495, %v2497
        %v2547 = vsel %vm1108, %v2499, %v2501
        %v2548 = vsel %vm1108, %v2503, %v2505
        %v2549 = vsel %vm1108, %v2507, %v2509
        %v2550 = vsel %vm1108, %v2511, %v2513
        %v2551 = vsel %vm1108, %v2515, %v2517
        %v2552 = vsel %vm1108, %v2519, %v2521
        %v2553 = vsel %vm1108, %v2523, %v2525
        %v2554 = vsel %vm1108, %v2527, %v2529
        %v2555 = vsel %vm1108, %v2531, %v2533
        %v2556 = vsel %vm1108, %v2535, %v2537
        %v2557 = vsel %vm1108, %v2539, %v2541
        %v2574 = vadd.f32 %v2302, %v2542
        %v2575 = vadd.f32 %v2303, %v2543
        %v2576 = vadd.f32 %v2304, %v2544
        %v2577 = vadd.f32 %v2305, %v2545
        %v2578 = vadd.f32 %v2306, %v2546
        %v2579 = vadd.f32 %v2307, %v2547
        %v2580 = vadd.f32 %v2308, %v2548
        %v2581 = vadd.f32 %v2309, %v2549
        %v2582 = vadd.f32 %v2310, %v2550
        %v2583 = vadd.f32 %v2311, %v2551
        %v2584 = vadd.f32 %v2312, %v2552
        %v2585 = vadd.f32 %v2313, %v2553
        %v2586 = vadd.f32 %v2314, %v2554
        %v2587 = vadd.f32 %v2315, %v2555
        %v2588 = vadd.f32 %v2316, %v2556
        %v2589 = vadd.f32 %v2317, %v2557
        %2590 = vset.pattern.permute.xlu0 2
        %2591 = vperm.xlu0 %2590, %v2190
        %v2592 = vpop.permute.xlu0 %2591
        %2594 = vset.pattern.permute.xlu0 2
        %2595 = vperm.xlu0 %2594, %v2191
        %v2596 = vpop.permute.xlu0 %2595
        %2598 = vset.pattern.permute.xlu0 2
        %2599 = vperm.xlu0 %2598, %v2192
        %v2600 = vpop.permute.xlu0 %2599
        %2602 = vset.pattern.permute.xlu0 2
        %2603 = vperm.xlu0 %2602, %v2193
        %v2604 = vpop.permute.xlu0 %2603
        %2606 = vset.pattern.permute.xlu0 2
        %2607 = vperm.xlu0 %2606, %v2194
        %v2608 = vpop.permute.xlu0 %2607
        %2610 = vset.pattern.permute.xlu0 2
        %2611 = vperm.xlu0 %2610, %v2195
        %v2612 = vpop.permute.xlu0 %2611
        %2614 = vset.pattern.permute.xlu0 2
        %2615 = vperm.xlu0 %2614, %v2196
        %v2616 = vpop.permute.xlu0 %2615
        %2618 = vset.pattern.permute.xlu0 2
        %2619 = vperm.xlu0 %2618, %v2197
        %v2620 = vpop.permute.xlu0 %2619
        %2622 = vset.pattern.permute.xlu0 2
        %2623 = vperm.xlu0 %2622, %v2198
        %v2624 = vpop.permute.xlu0 %2623
        %2626 = vset.pattern.permute.xlu0 2
        %2627 = vperm.xlu0 %2626, %v2199
        %v2628 = vpop.permute.xlu0 %2627
        %2630 = vset.pattern.permute.xlu0 2
        %2631 = vperm.xlu0 %2630, %v2200
        %v2632 = vpop.permute.xlu0 %2631
        %2634 = vset.pattern.permute.xlu0 2
        %2635 = vperm.xlu0 %2634, %v2201
        %v2636 = vpop.permute.xlu0 %2635
        %2638 = vset.pattern.permute.xlu0 2
        %2639 = vperm.xlu0 %2638, %v2202
        %v2640 = vpop.permute.xlu0 %2639
        %2642 = vset.pattern.permute.xlu0 2
        %2643 = vperm.xlu0 %2642, %v2203
        %v2644 = vpop.permute.xlu0 %2643
        %2646 = vset.pattern.permute.xlu0 2
        %2647 = vperm.xlu0 %2646, %v2204
        %v2648 = vpop.permute.xlu0 %2647
        %2650 = vset.pattern.permute.xlu0 2
        %2651 = vperm.xlu0 %2650, %v2205
        %v2652 = vpop.permute.xlu0 %2651
        %v2654 = vmul.f32 %v2592, %v2318
        %v2655 = vmul.f32 %v2592, %v2319
        %v2656 = vmul.f32 %v2596, %v2320
        %v2657 = vmul.f32 %v2596, %v2321
        %v2658 = vmul.f32 %v2600, %v2322
        %v2659 = vmul.f32 %v2600, %v2323
        %v2660 = vmul.f32 %v2604, %v2324
        %v2661 = vmul.f32 %v2604, %v2325
        %v2662 = vmul.f32 %v2608, %v2326
        %v2663 = vmul.f32 %v2608, %v2327
        %v2664 = vmul.f32 %v2612, %v2328
        %v2665 = vmul.f32 %v2612, %v2329
        %v2666 = vmul.f32 %v2616, %v2330
        %v2667 = vmul.f32 %v2616, %v2331
        %v2668 = vmul.f32 %v2620, %v2332
        %v2669 = vmul.f32 %v2620, %v2333
        %v2670 = vmul.f32 %v2624, %v2334
        %v2671 = vmul.f32 %v2624, %v2335
        %v2672 = vmul.f32 %v2628, %v2336
        %v2673 = vmul.f32 %v2628, %v2337
        %v2674 = vmul.f32 %v2632, %v2338
        %v2675 = vmul.f32 %v2632, %v2339
        %v2676 = vmul.f32 %v2636, %v2340
        %v2677 = vmul.f32 %v2636, %v2341
        %v2678 = vmul.f32 %v2640, %v2342
        %v2679 = vmul.f32 %v2640, %v2343
        %v2680 = vmul.f32 %v2644, %v2344
        %v2681 = vmul.f32 %v2644, %v2345
        %v2682 = vmul.f32 %v2648, %v2346
        %v2683 = vmul.f32 %v2648, %v2347
        %v2684 = vmul.f32 %v2652, %v2348
        %v2685 = vmul.f32 %v2652, %v2349
        %2718 = vrot.lane.b32.xlu0 %v2654, 126
        %v2719 = vpop.permute.xlu0 %2718
        %2720 = vrot.lane.b32.xlu0 %v2655, 126
        %v2721 = vpop.permute.xlu0 %2720
        %2722 = vrot.lane.b32.xlu0 %v2656, 126
        %v2723 = vpop.permute.xlu0 %2722
        %2724 = vrot.lane.b32.xlu0 %v2657, 126
        %v2725 = vpop.permute.xlu0 %2724
        %2726 = vrot.lane.b32.xlu0 %v2658, 126
        %v2727 = vpop.permute.xlu0 %2726
        %2728 = vrot.lane.b32.xlu0 %v2659, 126
        %v2729 = vpop.permute.xlu0 %2728
        %2730 = vrot.lane.b32.xlu0 %v2660, 126
        %v2731 = vpop.permute.xlu0 %2730
        %2732 = vrot.lane.b32.xlu0 %v2661, 126
        %v2733 = vpop.permute.xlu0 %2732
        %2734 = vrot.lane.b32.xlu0 %v2662, 126
        %v2735 = vpop.permute.xlu0 %2734
        %2736 = vrot.lane.b32.xlu0 %v2663, 126
        %v2737 = vpop.permute.xlu0 %2736
        %2738 = vrot.lane.b32.xlu0 %v2664, 126
        %v2739 = vpop.permute.xlu0 %2738
        %2740 = vrot.lane.b32.xlu0 %v2665, 126
        %v2741 = vpop.permute.xlu0 %2740
        %2742 = vrot.lane.b32.xlu0 %v2666, 126
        %v2743 = vpop.permute.xlu0 %2742
        %2744 = vrot.lane.b32.xlu0 %v2667, 126
        %v2745 = vpop.permute.xlu0 %2744
        %2746 = vrot.lane.b32.xlu0 %v2668, 126
        %v2747 = vpop.permute.xlu0 %2746
        %2748 = vrot.lane.b32.xlu0 %v2669, 126
        %v2749 = vpop.permute.xlu0 %2748
        %2750 = vrot.lane.b32.xlu0 %v2670, 126
        %v2751 = vpop.permute.xlu0 %2750
        %2752 = vrot.lane.b32.xlu0 %v2671, 126
        %v2753 = vpop.permute.xlu0 %2752
        %2754 = vrot.lane.b32.xlu0 %v2672, 126
        %v2755 = vpop.permute.xlu0 %2754
        %2756 = vrot.lane.b32.xlu0 %v2673, 126
        %v2757 = vpop.permute.xlu0 %2756
        %2758 = vrot.lane.b32.xlu0 %v2674, 126
        %v2759 = vpop.permute.xlu0 %2758
        %2760 = vrot.lane.b32.xlu0 %v2675, 126
        %v2761 = vpop.permute.xlu0 %2760
        %2762 = vrot.lane.b32.xlu0 %v2676, 126
        %v2763 = vpop.permute.xlu0 %2762
        %2764 = vrot.lane.b32.xlu0 %v2677, 126
        %v2765 = vpop.permute.xlu0 %2764
        %2766 = vrot.lane.b32.xlu0 %v2678, 126
        %v2767 = vpop.permute.xlu0 %2766
        %2768 = vrot.lane.b32.xlu0 %v2679, 126
        %v2769 = vpop.permute.xlu0 %2768
        %2770 = vrot.lane.b32.xlu0 %v2680, 126
        %v2771 = vpop.permute.xlu0 %2770
        %2772 = vrot.lane.b32.xlu0 %v2681, 126
        %v2773 = vpop.permute.xlu0 %2772
        %2774 = vrot.lane.b32.xlu0 %v2682, 126
        %v2775 = vpop.permute.xlu0 %2774
        %2776 = vrot.lane.b32.xlu0 %v2683, 126
        %v2777 = vpop.permute.xlu0 %2776
        %2778 = vrot.lane.b32.xlu0 %v2684, 126
        %v2779 = vpop.permute.xlu0 %2778
        %2780 = vrot.lane.b32.xlu0 %v2685, 126
        %v2781 = vpop.permute.xlu0 %2780
        %v2782 = vsel %vm1397, %v2719, %v2721
        %v2783 = vsel %vm1397, %v2723, %v2725
        %v2784 = vsel %vm1397, %v2727, %v2729
        %v2785 = vsel %vm1397, %v2731, %v2733
        %v2786 = vsel %vm1397, %v2735, %v2737
        %v2787 = vsel %vm1397, %v2739, %v2741
        %v2788 = vsel %vm1397, %v2743, %v2745
        %v2789 = vsel %vm1397, %v2747, %v2749
        %v2790 = vsel %vm1397, %v2751, %v2753
        %v2791 = vsel %vm1397, %v2755, %v2757
        %v2792 = vsel %vm1397, %v2759, %v2761
        %v2793 = vsel %vm1397, %v2763, %v2765
        %v2794 = vsel %vm1397, %v2767, %v2769
        %v2795 = vsel %vm1397, %v2771, %v2773
        %v2796 = vsel %vm1397, %v2775, %v2777
        %v2797 = vsel %vm1397, %v2779, %v2781
        %v2814 = vadd.f32 %v2574, %v2782
        %v2815 = vadd.f32 %v2575, %v2783
        %v2816 = vadd.f32 %v2576, %v2784
        %v2817 = vadd.f32 %v2577, %v2785
        %v2818 = vadd.f32 %v2578, %v2786
        %v2819 = vadd.f32 %v2579, %v2787
        %v2820 = vadd.f32 %v2580, %v2788
        %v2821 = vadd.f32 %v2581, %v2789
        %v2822 = vadd.f32 %v2582, %v2790
        %v2823 = vadd.f32 %v2583, %v2791
        %v2824 = vadd.f32 %v2584, %v2792
        %v2825 = vadd.f32 %v2585, %v2793
        %v2826 = vadd.f32 %v2586, %v2794
        %v2827 = vadd.f32 %v2587, %v2795
        %v2828 = vadd.f32 %v2588, %v2796
        %v2829 = vadd.f32 %v2589, %v2797
        %v2830 = vld [vmem:[%s6] sm:$0xf]
        %v2831 = vld [vmem:[%s6 + $0x4] sm:$0xf]
        %v2832 = vld [vmem:[%s6 + $0x8] sm:$0xf]
        %v2833 = vld [vmem:[%s6 + $0xc] sm:$0xf]
        %v2834 = vld [vmem:[%s6 + $0x10] sm:$0xf]
        %v2835 = vld [vmem:[%s6 + $0x14] sm:$0xf]
        %v2836 = vld [vmem:[%s6 + $0x18] sm:$0xf]
        %v2837 = vld [vmem:[%s6 + $0x1c] sm:$0xf]
        %v2838 = vld [vmem:[%s6 + $0x20] sm:$0xf]
        %v2839 = vld [vmem:[%s6 + $0x24] sm:$0xf]
        %v2840 = vld [vmem:[%s6 + $0x28] sm:$0xf]
        %v2841 = vld [vmem:[%s6 + $0x2c] sm:$0xf]
        %v2842 = vld [vmem:[%s6 + $0x30] sm:$0xf]
        %v2843 = vld [vmem:[%s6 + $0x34] sm:$0xf]
        %v2844 = vld [vmem:[%s6 + $0x38] sm:$0xf]
        %v2845 = vld [vmem:[%s6 + $0x3c] sm:$0xf]
        %v2846 = vpack.c.bf16 %v2815, %v2814
        %v2847 = vpack.c.bf16 %v2817, %v2816
        %v2848 = vpack.c.bf16 %v2819, %v2818
        %v2849 = vpack.c.bf16 %v2821, %v2820
        %v2850 = vpack.c.bf16 %v2823, %v2822
        %v2851 = vpack.c.bf16 %v2825, %v2824
        %v2852 = vpack.c.bf16 %v2827, %v2826
        %v2853 = vpack.c.bf16 %v2829, %v2828
        %v2854 = vld [vmem:[%s7] sm:$0xff]
        %v2855 = vld [vmem:[%s7 + $0x8] sm:$0xff]
        %v2856 = vld [vmem:[%s7 + $0x10] sm:$0xff]
        %v2857 = vld [vmem:[%s7 + $0x18] sm:$0xff]
        %v2858 = vld [vmem:[%s7 + $0x20] sm:$0xff]
        %v2859 = vld [vmem:[%s7 + $0x28] sm:$0xff]
        %v2860 = vld [vmem:[%s7 + $0x30] sm:$0xff]
        %v2861 = vld [vmem:[%s7 + $0x38] sm:$0xff]
        %v2862 = vld [vmem:[%s7 + $0x40] sm:$0xff]
        %v2863 = vld [vmem:[%s7 + $0x48] sm:$0xff]
        %v2864 = vld [vmem:[%s7 + $0x50] sm:$0xff]
        %v2865 = vld [vmem:[%s7 + $0x58] sm:$0xff]
        %v2866 = vld [vmem:[%s7 + $0x60] sm:$0xff]
        %v2867 = vld [vmem:[%s7 + $0x68] sm:$0xff]
        %v2868 = vld [vmem:[%s7 + $0x70] sm:$0xff]
        %v2869 = vld [vmem:[%s7 + $0x78] sm:$0xff]
        %2871 = vset.pattern.permute.xlu0 0
        %2872 = vperm.xlu0 %2871, %v2854
        %v2873 = vpop.permute.xlu0 %2872
        %2876 = vset.pattern.permute.xlu0 0
        %2877 = vperm.xlu0 %2876, %v2855
        %v2878 = vpop.permute.xlu0 %2877
        %2881 = vset.pattern.permute.xlu0 0
        %2882 = vperm.xlu0 %2881, %v2856
        %v2883 = vpop.permute.xlu0 %2882
        %2886 = vset.pattern.permute.xlu0 0
        %2887 = vperm.xlu0 %2886, %v2857
        %v2888 = vpop.permute.xlu0 %2887
        %2891 = vset.pattern.permute.xlu0 0
        %2892 = vperm.xlu0 %2891, %v2858
        %v2893 = vpop.permute.xlu0 %2892
        %2896 = vset.pattern.permute.xlu0 0
        %2897 = vperm.xlu0 %2896, %v2859
        %v2898 = vpop.permute.xlu0 %2897
        %2901 = vset.pattern.permute.xlu0 0
        %2902 = vperm.xlu0 %2901, %v2860
        %v2903 = vpop.permute.xlu0 %2902
        %2906 = vset.pattern.permute.xlu0 0
        %2907 = vperm.xlu0 %2906, %v2861
        %v2908 = vpop.permute.xlu0 %2907
        %2911 = vset.pattern.permute.xlu0 0
        %2912 = vperm.xlu0 %2911, %v2862
        %v2913 = vpop.permute.xlu0 %2912
        %2916 = vset.pattern.permute.xlu0 0
        %2917 = vperm.xlu0 %2916, %v2863
        %v2918 = vpop.permute.xlu0 %2917
        %2921 = vset.pattern.permute.xlu0 0
        %2922 = vperm.xlu0 %2921, %v2864
        %v2923 = vpop.permute.xlu0 %2922
        %2926 = vset.pattern.permute.xlu0 0
        %2927 = vperm.xlu0 %2926, %v2865
        %v2928 = vpop.permute.xlu0 %2927
        %2931 = vset.pattern.permute.xlu0 0
        %2932 = vperm.xlu0 %2931, %v2866
        %v2933 = vpop.permute.xlu0 %2932
        %2936 = vset.pattern.permute.xlu0 0
        %2937 = vperm.xlu0 %2936, %v2867
        %v2938 = vpop.permute.xlu0 %2937
        %2941 = vset.pattern.permute.xlu0 0
        %2942 = vperm.xlu0 %2941, %v2868
        %v2943 = vpop.permute.xlu0 %2942
        %2946 = vset.pattern.permute.xlu0 0
        %2947 = vperm.xlu0 %2946, %v2869
        %v2948 = vpop.permute.xlu0 %2947
        %v2966 = vunpack.c.l.b16 %v2830
        %v2967 = vunpack.c.l.b16 %v2831
        %v2968 = vunpack.c.l.b16 %v2832
        %v2969 = vunpack.c.l.b16 %v2833
        %v2970 = vunpack.c.l.b16 %v2834
        %v2971 = vunpack.c.l.b16 %v2835
        %v2972 = vunpack.c.l.b16 %v2836
        %v2973 = vunpack.c.l.b16 %v2837
        %v2974 = vunpack.c.l.b16 %v2838
        %v2975 = vunpack.c.l.b16 %v2839
        %v2976 = vunpack.c.l.b16 %v2840
        %v2977 = vunpack.c.l.b16 %v2841
        %v2978 = vunpack.c.l.b16 %v2842
        %v2979 = vunpack.c.l.b16 %v2843
        %v2980 = vunpack.c.l.b16 %v2844
        %v2981 = vunpack.c.l.b16 %v2845
        %v2982 = vpack.c.b16 %v2967, %v2966
        %v2983 = vpack.c.b16 %v2969, %v2968
        %v2984 = vpack.c.b16 %v2971, %v2970
        %v2985 = vpack.c.b16 %v2973, %v2972
        %v2986 = vpack.c.b16 %v2975, %v2974
        %v2987 = vpack.c.b16 %v2977, %v2976
        %v2988 = vpack.c.b16 %v2979, %v2978
        %v2989 = vpack.c.b16 %v2981, %v2980
        %2998 = vmatpush.bf16.msra.mxu0 %v2853
        %2999 = vmatpush.bf16.msra.mxu0 %v2852
        %3000 = vmatpush.bf16.msra.mxu0 %v2851
        %3001 = vmatpush.bf16.msra.mxu0 %v2850
        %3002 = vmatpush.bf16.msra.mxu0 %v2849
        %3003 = vmatpush.bf16.msra.mxu0 %v2848
        %3004 = vmatpush.bf16.msra.mxu0 %v2847
        %3005 = vmatpush.bf16.msra.mxu0 %v2846
        %3006 = vmatmul.bf16.gmra.mxu0 %v2982
        %v3007 = vpop.f32.mrf.mxu0
        %v3008 = vadd.f32 %v2873, %v3007
        %v3009 = vpop.f32.mrf.mxu0
        %v3010 = vadd.f32 %v2878, %v3009
        %3011 = vmatmul.bf16.gmra.mxu0 %v2983
        %v3012 = vpop.f32.mrf.mxu0
        %v3013 = vadd.f32 %v2883, %v3012
        %v3014 = vpop.f32.mrf.mxu0
        %v3015 = vadd.f32 %v2888, %v3014
        %3016 = vmatmul.bf16.gmra.mxu0 %v2984
        %v3017 = vpop.f32.mrf.mxu0
        %v3018 = vadd.f32 %v2893, %v3017
        %v3019 = vpop.f32.mrf.mxu0
        %v3020 = vadd.f32 %v2898, %v3019
        %3021 = vmatmul.bf16.gmra.mxu0 %v2985
        %v3022 = vpop.f32.mrf.mxu0
        %v3023 = vadd.f32 %v2903, %v3022
        %v3024 = vpop.f32.mrf.mxu0
        %v3025 = vadd.f32 %v2908, %v3024
        %3026 = vmatmul.bf16.gmra.mxu0 %v2986
        %v3027 = vpop.f32.mrf.mxu0
        %v3028 = vadd.f32 %v2913, %v3027
        %v3029 = vpop.f32.mrf.mxu0
        %v3030 = vadd.f32 %v2918, %v3029
        %3031 = vmatmul.bf16.gmra.mxu0 %v2987
        %v3032 = vpop.f32.mrf.mxu0
        %v3033 = vadd.f32 %v2923, %v3032
        %v3034 = vpop.f32.mrf.mxu0
        %v3035 = vadd.f32 %v2928, %v3034
        %3036 = vmatmul.bf16.gmra.mxu0 %v2988
        %v3037 = vpop.f32.mrf.mxu0
        %v3038 = vadd.f32 %v2933, %v3037
        %v3039 = vpop.f32.mrf.mxu0
        %v3040 = vadd.f32 %v2938, %v3039
        %3041 = vmatmul.bf16.gmra.mxu0 %v2989
        %v3042 = vpop.f32.mrf.mxu0
        %v3043 = vadd.f32 %v2943, %v3042
        %v3044 = vpop.f32.mrf.mxu0
        %v3045 = vadd.f32 %v2948, %v3044
        %3046 = vdwg.mxu0
        %v3047 = vmax.f32 %v3008, 0.0
        %v3048 = vmax.f32 %v3010, 0.0
        %v3049 = vmax.f32 %v3013, 0.0
        %v3050 = vmax.f32 %v3015, 0.0
        %v3051 = vmax.f32 %v3018, 0.0
        %v3052 = vmax.f32 %v3020, 0.0
        %v3053 = vmax.f32 %v3023, 0.0
        %v3054 = vmax.f32 %v3025, 0.0
        %v3055 = vmax.f32 %v3028, 0.0
        %v3056 = vmax.f32 %v3030, 0.0
        %v3057 = vmax.f32 %v3033, 0.0
        %v3058 = vmax.f32 %v3035, 0.0
        %v3059 = vmax.f32 %v3038, 0.0
        %v3060 = vmax.f32 %v3040, 0.0
        %v3061 = vmax.f32 %v3043, 0.0
        %v3062 = vmax.f32 %v3045, 0.0
        %v3063 = vadd.f32 %v3047, %v2151
        %v3064 = vadd.f32 %v3048, %v2153
        %v3065 = vadd.f32 %v3049, %v2156
        %v3066 = vadd.f32 %v3050, %v2158
        %v3067 = vadd.f32 %v3051, %v2161
        %v3068 = vadd.f32 %v3052, %v2163
        %v3069 = vadd.f32 %v3053, %v2166
        %v3070 = vadd.f32 %v3054, %v2168
        %v3071 = vadd.f32 %v3055, %v2171
        %v3072 = vadd.f32 %v3056, %v2173
        %v3073 = vadd.f32 %v3057, %v2176
        %v3074 = vadd.f32 %v3058, %v2178
        %v3075 = vadd.f32 %v3059, %v2181
        %v3076 = vadd.f32 %v3060, %v2183
        %v3077 = vadd.f32 %v3061, %v2186
        %v3078 = vadd.f32 %v3062, %v2188
        %v3079 = vmax.f32 %v3063, 0.0
        %v3080 = vmax.f32 %v3064, 0.0
        %v3081 = vmax.f32 %v3065, 0.0
        %v3082 = vmax.f32 %v3066, 0.0
        %v3083 = vmax.f32 %v3067, 0.0
        %v3084 = vmax.f32 %v3068, 0.0
        %v3085 = vmax.f32 %v3069, 0.0
        %v3086 = vmax.f32 %v3070, 0.0
        %v3087 = vmax.f32 %v3071, 0.0
        %v3088 = vmax.f32 %v3072, 0.0
        %v3089 = vmax.f32 %v3073, 0.0
        %v3090 = vmax.f32 %v3074, 0.0
        %v3091 = vmax.f32 %v3075, 0.0
        %v3092 = vmax.f32 %v3076, 0.0
        %v3093 = vmax.f32 %v3077, 0.0
        %v3094 = vmax.f32 %v3078, 0.0
        %3095 = vst [vmem:[%s399] sm:$0xff] %v3079
        %3096 = vst [vmem:[%s399 + $0x8] sm:$0xff] %v3080
        %3097 = vst [vmem:[%s399 + $0x10] sm:$0xff] %v3081
        %3098 = vst [vmem:[%s399 + $0x18] sm:$0xff] %v3082
        %3099 = vst [vmem:[%s399 + $0x20] sm:$0xff] %v3083
        %3100 = vst [vmem:[%s399 + $0x28] sm:$0xff] %v3084
        %3101 = vst [vmem:[%s399 + $0x30] sm:$0xff] %v3085
        %3102 = vst [vmem:[%s399 + $0x38] sm:$0xff] %v3086
        %3103 = vst [vmem:[%s399 + $0x40] sm:$0xff] %v3087
        %3104 = vst [vmem:[%s399 + $0x48] sm:$0xff] %v3088
        %3105 = vst [vmem:[%s399 + $0x50] sm:$0xff] %v3089
        %3106 = vst [vmem:[%s399 + $0x58] sm:$0xff] %v3090
        %3107 = vst [vmem:[%s399 + $0x60] sm:$0xff] %v3091
        %3108 = vst [vmem:[%s399 + $0x68] sm:$0xff] %v3092
        %3109 = vst [vmem:[%s399 + $0x70] sm:$0xff] %v3093
        %3110 = vst [vmem:[%s399 + $0x78] sm:$0xff] %v3094
        %s3111 = sand.u32 %s270, 1
        %s3112 = scalar_lea.sflag [#allocation5], %s3111
        %s3113 = sand.u32 %s270, 1
        %s3114 = smul.addr %s3113, 128
        %s3115 = scalar_lea.vmem [#allocation4], %s3114
        // Predicated region
        $region65: #{tpu_custom_call.1} parent=59 // pred_check
          %p3116 = pneg %p280
        $region66: #{tpu_custom_call.1} parent=59 // pred_check_branch
          %3118 = sbr.rel (%p3116) target = $region68
        $region67: #{tpu_custom_call.1} parent=59 // pred_region
          %3120 = vsyncadd %s3112, 0
          %s3121 = smul.addr %s28, 16
          %s3122 = sadd.s32 %s29, %s3121
          %s3123 = smul.addr %s3122, 8
          %s3124 = scalar_lea.hbm %s10, %s3123
          %s3125 = sshll.u32 %s3115, 4
          %s3126 = int_to_ptr.vmem [resolvable:$true] %s3125
          %s3127 = sshll.u32 %s3124, 4
          %s3128 = int_to_ptr.hbm [resolvable:$true] %s3127
          %3133 = dma.vmem_to_hbm [thread:$0]  %s3126, 2048, %s3128, %s3112, 128, 128, 8
        $region68: #{tpu_custom_call.1} parent=59 // pred_fallthru
          _
      $region60: #{tpu_custom_call.1} parent=5 // pred_fallthru
        _
      %p3134 = scmp.le.s32.totalorder 2, %s19
      // Predicated region
      $region69: #{tpu_custom_call.1} parent=5 // pred_check
        %p3135 = pneg %p3134
      $region70: #{tpu_custom_call.1} parent=5 // pred_check_branch
        %3137 = sbr.rel (%p3135) target = $region72
      $region71: #{tpu_custom_call.1} parent=5 // pred_region
        %s3138 = ssub.s32 %s19, 2
        // Predicated region
        $region73: #{tpu_custom_call.1} parent=71 // pred_check
          %p3139 = pneg %p286
        $region74: #{tpu_custom_call.1} parent=71 // pred_check_branch
          %3141 = sbr.rel (%p3139) target = $region76
        $region75: #{tpu_custom_call.1} parent=71 // pred_region
          %s3142 = sand.u32 %s271, 1
          %s3143 = scalar_lea.sflag [#allocation5], %s3142
          %s3144 = sand.u32 %s271, 1
          %s3145 = smul.addr %s3144, 128
          %s3146 = scalar_lea.vmem [#allocation4], %s3145
          %3148 = dma.done %s3143, 2048
        $region76: #{tpu_custom_call.1} parent=71 // pred_fallthru
          _
      $region72: #{tpu_custom_call.1} parent=5 // pred_fallthru
        _
    $region6: #{tpu_custom_call.1} parent=1 // loop_footer
      %s23 = sadd.s32 1, %s19
    $region7: #{tpu_custom_call.1} parent=1 // loop_footer_branch
      %18 = sbr.rel target = $region3
    $region8: #{tpu_custom_call.1} parent=1 // loop_exit
      _
    %3149 = vsyncpa [#allocation5], 1
    %s3150 = scalar_lea.sflag [#allocation5], 1
    %3151 = vsyncpa %s3150, 1

</llo_original>
